<compile_context>
chip_gen: v7x
topology: tpu7x:2x2x1
jax: 0.10.0
libtpu: 0.0.40
codegen_flags: <defaults>
</compile_context>

<pallas_src>
import functools
import math
from collections import namedtuple

import numpy as np
import jax
import jax.numpy as jnp
from jax.experimental import pallas as pl
from jax.experimental.pallas import tpu as pltpu

F32 = jnp.float32
BF16 = jnp.bfloat16
TM_CAP = 512  # rows per matmul tile (HBM-roofline sweet spot)


def _round_up(x, m):
    return ((x + m - 1) // m) * m


def _num_tensorcores():
    try:
        info = pltpu.get_tpu_info()
        for attr in ("num_cores", "cores_per_chip", "tensorcores_per_chip",
                     "num_tensorcores"):
            v = getattr(info, attr, None)
            if isinstance(v, int) and v > 0:
                return v
    except Exception:
        pass
    return 1


_NUM_TC = _num_tensorcores()


def _cparams():
    return pltpu.CompilerParams(
        dimension_semantics=("parallel",),
        vmem_limit_bytes=32 * 1024 * 1024)


def _pick_tm(M):
    tm = M if M <= TM_CAP else TM_CAP
    # v7x has 2 TensorCores/chip: make the grid >= 2 so "parallel" shards both.
    if _NUM_TC >= 2 and tm == M and M >= 16:
        tm = _round_up(pl.cdiv(M, 2), 8)
    return tm


# ----------------------------------------------------------------------------
# Pallas kernels
# ----------------------------------------------------------------------------

def _mm_kernel(*refs, relu_in, relu_out, lif, has_affine):
    """o = epilogue(( [relu?](a) @ b ) [* scale + shift]).

    a, b are bf16 (MXU), accumulation + epilogue in f32, output bf16.
    epilogue = ReLU and/or the SNNHead LIF recurrence (snn.Leaky subtract-reset,
    membrane clamp [-5,5], spikes averaged over num_steps).
    """
    if has_affine:
        a_ref, b_ref, ss_ref, o_ref = refs
    else:
        a_ref, b_ref, o_ref = refs
        ss_ref = None
    a = a_ref[...]
    if relu_in:
        a = jnp.maximum(a, 0)                              # exact in bf16
    y = jnp.dot(a, b_ref[...], preferred_element_type=jnp.float32)
    if ss_ref is not None:
        y = y * ss_ref[0:1, :] + ss_ref[1:2, :]            # fused BN (eval mode)
    if relu_out:
        y = jnp.maximum(y, 0.0)
    if lif is not None:
        beta, num_steps, threshold = lif
        mem = jnp.zeros_like(y)
        acc = jnp.zeros_like(y)
        for _ in range(num_steps):
            reset = (mem > threshold).astype(F32)          # from previous mem
            mem = beta * mem + y - reset * threshold       # subtract reset
            spk = (mem > threshold).astype(F32)            # fire on new mem
            mem = jnp.clip(mem, -5.0, 5.0)                 # head's mem clamp
            acc = acc + spk                                # clamp(spk,-1,1) no-op
        y = acc / float(num_steps)
    o_ref[...] = y.astype(o_ref.dtype)


def _maxpool_kernel(x_ref, o_ref, *, H, W):
    # x_ref: (1, H+2, W+2, C) padded with -inf; 3x3/stride-1 window max in-kernel.
    x = x_ref[...].astype(F32)
    acc = x[:, 0:H, 0:W, :]
    for ki in range(3):
        for kj in range(3):
            if ki == 0 and kj == 0:
                continue
            acc = jnp.maximum(acc, x[:, ki:ki + H, kj:kj + W, :])
    o_ref[...] = acc.astype(o_ref.dtype)


def _avgpool_kernel(x_ref, rcp_ref, o_ref, *, H, W):
    # count_include_pad=False: sum of taps * precomputed 1/valid_count map.
    x = x_ref[...].astype(F32)
    acc = x[:, 0:H, 0:W, :]
    for ki in range(3):
        for kj in range(3):
            if ki == 0 and kj == 0:
                continue
            acc = acc + x[:, ki:ki + H, kj:kj + W, :]
    o_ref[...] = (acc * rcp_ref[...]).astype(o_ref.dtype)


# ----------------------------------------------------------------------------
# Matmul wrapper (fused conv + BN + ReLU [+ LIF])
# ----------------------------------------------------------------------------

def pallas_matmul(a, b, ss=None, relu_in=False, relu_out=False, lif=None):
    """(M,K)@(K,N) with fused per-output-channel scale/shift, ReLUs and LIF.

    bf16 operands / bf16 output, f32 accumulate + epilogue.  No pad-to-128 of the
    output channels; natural-width (masked) stores keep write bytes at 1x.
    """
    M, K = a.shape
    Kb, N = b.shape
    assert K == Kb, (K, Kb)
    a = a.astype(BF16)
    b = b.astype(BF16)
    has_affine = ss is not None

    TM = _pick_tm(M)
    in_specs = [pl.BlockSpec((TM, K), lambda i: (i, 0)),
                pl.BlockSpec((K, N), lambda i: (0, 0))]
    args = [a, b]
    if has_affine:
        in_specs.append(pl.BlockSpec((2, N), lambda i: (0, 0)))
        args.append(ss.astype(F32))

    return pl.pallas_call(
        functools.partial(_mm_kernel, relu_in=relu_in, relu_out=relu_out,
                          lif=lif, has_affine=has_affine),
        out_shape=jax.ShapeDtypeStruct((M, N), BF16),
        grid=(pl.cdiv(M, TM),),
        in_specs=in_specs,
        out_specs=pl.BlockSpec((TM, N), lambda i: (i, 0)),
        compiler_params=_cparams(),
    )(*args)


# ----------------------------------------------------------------------------
# Conv / pool / upsample wrappers
# ----------------------------------------------------------------------------

def conv1x1(x, w_mat, ss=None, relu_in=False, relu_out=False, stride=1, lif=None):
    if stride > 1:
        x = x[:, ::stride, ::stride, :]
    N, H, W, C = x.shape
    y = pallas_matmul(x.reshape(N * H * W, C), w_mat, ss, relu_in, relu_out,
                      lif=lif)
    return y.reshape(N, H, W, -1)


def conv3x3_s2_p1(x, w_mat, ss=None, relu_in=False, relu_out=False):
    # im2col in bf16 (tap order: ki-major, kj, then Cin) + one fused matmul.
    N, H, W, C = x.shape
    Ho = (H + 2 - 3) // 2 + 1
    Wo = (W + 2 - 3) // 2 + 1
    xp = jnp.pad(x.astype(BF16), ((0, 0), (1, 1), (1, 1), (0, 0)))
    cols = []
    for ki in range(3):
        for kj in range(3):
            cols.append(xp[:, ki::2, kj::2, :][:, :Ho, :Wo, :])
    a = jnp.concatenate(cols, axis=-1).reshape(N * Ho * Wo, 9 * C)
    y = pallas_matmul(a, w_mat, ss, relu_in, relu_out)
    return y.reshape(N, Ho, Wo, -1)


@functools.lru_cache(maxsize=None)
def _avg_rcp_map(H, W):
    # 1 / (valid taps) for a 3x3/pad-1 window, center (i, j).  Spatial-only map.
    r = np.arange(H)
    c = np.arange(W)
    rows = np.minimum(r + 1, H - 1) - np.maximum(r - 1, 0) + 1
    cols = np.minimum(c + 1, W - 1) - np.maximum(c - 1, 0) + 1
    cnt = rows[:, None] * cols[None, :]
    return (1.0 / cnt).astype(np.float32).reshape(1, H, W, 1)


def _pool_call(kernel, xp, shp, extra=None):
    N, H, W, C = shp
    Hp, Wp = H + 2, W + 2
    in_specs = [pl.BlockSpec((1, Hp, Wp, C), lambda n: (n, 0, 0, 0))]
    args = [xp]
    if extra is not None:
        in_specs.append(pl.BlockSpec((1, H, W, 1), lambda n: (0, 0, 0, 0)))
        args.append(extra)
    return pl.pallas_call(
        kernel,
        out_shape=jax.ShapeDtypeStruct((N, H, W, C), BF16),
        grid=(N,),
        in_specs=in_specs,
        out_specs=pl.BlockSpec((1, H, W, C), lambda n: (n, 0, 0, 0)),
        compiler_params=_cparams(),
    )(*args)


def max_pool_3x3(x, stride):
    N, H, W, C = x.shape
    xp = jnp.pad(x.astype(BF16), ((0, 0), (1, 1), (1, 1), (0, 0)),
                 constant_values=-jnp.inf)
    y = _pool_call(functools.partial(_maxpool_kernel, H=H, W=W), xp, (N, H, W, C))
    if stride > 1:
        # 3x3/s2/p1 output at (ho, wo) == 3x3/s1/p1 output at (2*ho, 2*wo).
        y = y[:, ::stride, ::stride, :]
    return y


def avg_pool_3x3(x, stride):
    N, H, W, C = x.shape
    xp = jnp.pad(x.astype(BF16), ((0, 0), (1, 1), (1, 1), (0, 0)))
    rcp = jnp.asarray(_avg_rcp_map(H, W))
    y = _pool_call(functools.partial(_avgpool_kernel, H=H, W=W), xp,
                   (N, H, W, C), rcp)
    if stride > 1:
        y = y[:, ::stride, ::stride, :]
    return y


@functools.lru_cache(maxsize=None)
def _bilinear_matrix_np(in_size, out_size):
    # PyTorch align_corners=False convention.
    scale = in_size / out_size
    d = np.arange(out_size, dtype=np.float64)
    src = np.maximum(scale * (d + 0.5) - 0.5, 0.0)
    i0 = np.minimum(np.floor(src).astype(np.int64), in_size - 1)
    i1 = np.minimum(i0 + 1, in_size - 1)
    l1 = src - i0
    l0 = 1.0 - l1
    Wm = np.zeros((out_size, in_size), np.float32)
    rows = np.arange(out_size)
    np.add.at(Wm, (rows, i0), l0.astype(np.float32))
    np.add.at(Wm, (rows, i1), l1.astype(np.float32))
    return Wm


@functools.lru_cache(maxsize=None)
def _bilinear_kron_np(H, W, Ho, Wo):
    return np.kron(_bilinear_matrix_np(H, Ho),
                   _bilinear_matrix_np(W, Wo)).astype(np.float32)


def bilinear_upsample(x, scale_factor):
    """x4 bilinear as ONE small matmul: kron(Wh, Ww) @ x[(H*W), N*C]."""
    N, H, W, C = x.shape
    Ho, Wo = H * scale_factor, W * scale_factor
    M_up = jnp.asarray(_bilinear_kron_np(H, W, Ho, Wo))    # (Ho*Wo, H*W)
    x2 = jnp.transpose(x, (1, 2, 0, 3)).reshape(H * W, N * C)
    y = pallas_matmul(M_up, x2).reshape(Ho, Wo, N, C)
    return jnp.transpose(y, (2, 0, 1, 3))


# ----------------------------------------------------------------------------
# Parameters / network definition
# ----------------------------------------------------------------------------

Genotype = namedtuple('Genotype', 'normal normal_concat reduce reduce_concat')
GENOTYPE = Genotype(
    normal=[('skip_connect', 0), ('avg_pool_3x3', 1),
            ('max_pool_3x3', 0), ('skip_connect', 1)],
    normal_concat=[2, 3],
    reduce=[('max_pool_3x3', 0), ('avg_pool_3x3', 1),
            ('skip_connect', 2), ('max_pool_3x3', 1)],
    reduce_concat=[2, 3])


def conv_w(key, K, Cout):
    w = jax.random.normal(key, (K, Cout), dtype=F32) * (1.0 / math.sqrt(K))
    return w.astype(BF16)


def bn_identity(C, eps=1e-5):
    # PyTorch BatchNorm defaults (eval mode): gamma=1, beta=0, mean=0, var=1.
    scale = np.full((1, C), 1.0 / math.sqrt(1.0 + eps), np.float32)
    shift = np.zeros((1, C), np.float32)
    return jnp.asarray(np.concatenate([scale, shift], axis=0))   # (2, C)


def make_relu_conv_bn(key, C_in, C_out):
    return {'type': 'rcb', 'w': conv_w(key, C_in, C_out), 'ss': bn_identity(C_out)}


def make_fact_reduce(key, C_in, C_out):
    k1, k2 = jax.random.split(key)
    half = C_out // 2
    ss = bn_identity(C_out)
    return {'type': 'fr',
            'w1': conv_w(k1, C_in, half), 'w2': conv_w(k2, C_in, half),
            'ss1': ss[:, :half], 'ss2': ss[:, half:]}


def factorized_reduce(x, p):
    # TODO(synk): two convs + concat could be one pallas_call writing channel
    #   halves of the output slab, but half-C out blocks break the (8,128) rule.
    y1 = conv1x1(x, p['w1'], p['ss1'], relu_in=True, stride=2)
    y2 = conv1x1(x[:, 1:, 1:, :], p['w2'], p['ss2'], relu_in=True, stride=2)
    return jnp.concatenate([y1, y2], axis=-1)


def apply_preprocess(p, x):
    if p['type'] == 'rcb':
        return conv1x1(x, p['w'], p['ss'], relu_in=True)
    return factorized_reduce(x, p)


def apply_op(name, stride, p, x):
    if name == 'skip_connect':
        return x if stride == 1 else factorized_reduce(x, p)
    if name == 'max_pool_3x3':
        return max_pool_3x3(x, stride)
    if name == 'avg_pool_3x3':
        return avg_pool_3x3(x, stride)
    raise ValueError(name)


def apply_cell(cell, s0, s1):
    s0 = apply_preprocess(cell['pre0'], s0)
    s1 = apply_preprocess(cell['pre1'], s1)
    states = [s0, s1]
    for i in range(cell['steps']):
        n1, i1, st1, p1 = cell['ops'][2 * i]
        n2, i2, st2, p2 = cell['ops'][2 * i + 1]
        h1 = apply_op(n1, st1, p1, states[i1])
        h2 = apply_op(n2, st2, p2, states[i2])
        states.append(h1 + h2)
    return jnp.concatenate([states[i] for i in cell['concat']], axis=-1)


def init_network(key, C, num_classes, layers, genotype):
    keys = iter(jax.random.split(key, 64))
    params = {
        'stem0_w1': conv_w(next(keys), 3 * 9, C // 2),
        'stem0_bn1': bn_identity(C // 2),
        'stem0_w2': conv_w(next(keys), (C // 2) * 9, C),
        'stem0_bn2': bn_identity(C),
        'stem1_w': conv_w(next(keys), C * 9, C),
        'stem1_bn': bn_identity(C),
    }
    C_pp, C_p, C_curr = C, C, C
    reduction_prev = True
    cells = []
    for i in range(layers):
        if i in [layers // 3, 2 * layers // 3]:
            C_curr *= 2
            reduction = True
        else:
            reduction = False
        if reduction:
            op_names, indices = zip(*genotype.reduce)
            concat = genotype.reduce_concat
        else:
            op_names, indices = zip(*genotype.normal)
            concat = genotype.normal_concat
        pre0 = (make_fact_reduce(next(keys), C_pp, C_curr) if reduction_prev
                else make_relu_conv_bn(next(keys), C_pp, C_curr))
        pre1 = make_relu_conv_bn(next(keys), C_p, C_curr)
        ops = []
        for name, index in zip(op_names, indices):
            stride = 2 if reduction and index < 2 else 1
            op_p = (make_fact_reduce(next(keys), C_curr, C_curr)
                    if (name == 'skip_connect' and stride == 2) else None)
            ops.append((name, index, stride, op_p))
        cells.append({'pre0': pre0, 'pre1': pre1, 'ops': ops,
                      'concat': list(concat), 'steps': len(op_names) // 2})
        reduction_prev = reduction
        C_pp, C_p = C_p, len(concat) * C_curr
    params['cells'] = cells
    params['head_w'] = conv_w(next(keys), C_p, num_classes)  # SNNHead 1x1 conv
    return params


def network_forward(params, x_nchw, num_steps=1, beta=0.95, scale_factor=4):
    x = jnp.transpose(x_nchw, (0, 2, 3, 1)).astype(BF16)  # NCHW -> NHWC, bf16
    # stem0: Conv3x3/s2 -> BN -> ReLU -> Conv3x3/s2 -> BN
    s = conv3x3_s2_p1(x, params['stem0_w1'], params['stem0_bn1'], relu_out=True)
    s0 = conv3x3_s2_p1(s, params['stem0_w2'], params['stem0_bn2'])
    # stem1: ReLU -> Conv3x3/s2 -> BN
    s1 = conv3x3_s2_p1(s0, params['stem1_w'], params['stem1_bn'], relu_in=True)
    # cells
    for cell in params['cells']:
        s0, s1 = s1, apply_cell(cell, s0, s1)
    # SNNHead: 1x1 conv (no BN) with the LIF recurrence fused into the epilogue,
    # then bilinear x4 upsample (one small matmul).
    spk = conv1x1(s1, params['head_w'], lif=(beta, num_steps, 1.0))
    out = bilinear_upsample(spk, scale_factor)
    return jnp.transpose(out, (0, 3, 1, 2)).astype(F32)   # NHWC -> NCHW


# ----------------------------------------------------------------------------

if __name__ == "__main__":
    key = jax.random.PRNGKey(0)
    kp, kx = jax.random.split(key)
    C, num_classes, layers = 8, 10, 3
    params = init_network(kp, C, num_classes, layers, GENOTYPE)
    x = jax.random.normal(kx, (2, 3, 32, 32), dtype=F32)  # NCHW like PyTorch

    fwd = jax.jit(lambda inp: network_forward(params, inp, num_steps=1,
                                              beta=0.95, scale_factor=4))
    out = jax.block_until_ready(fwd(x))
    assert out.shape == (2, num_classes, 4, 4), out.shape
    assert bool(jnp.isfinite(out).all())
    print("KERNEL_OK")
</pallas_src>

<mosaic_0001>
module attributes {stable_mosaic.version = 11 : i64} {
  func.func @_mm_kernel(%arg0: i32, %arg1: memref<512x27xbf16, #tpu.memory_space<vmem>>, %arg2: memref<27x4xbf16, #tpu.memory_space<vmem>>, %arg3: memref<2x4xf32, #tpu.memory_space<vmem>>, %arg4: memref<512x4xbf16, #tpu.memory_space<vmem>>) attributes {dimension_semantics = [#tpu.dimension_semantics<parallel>], iteration_bounds = array<i64: 1>, scalar_prefetch = 0 : i64, scratch_operands = 0 : i64, tpu.core_type = #tpu.core_type<tc>, window_params = [{transform_indices = @transform_0, window_bounds = array<i64: 512, 27>}, {pipeline_mode = #tpu.pipeline_mode<synchronous>, transform_indices = @transform_1, window_bounds = array<i64: 27, 4>}, {pipeline_mode = #tpu.pipeline_mode<synchronous>, transform_indices = @transform_2, window_bounds = array<i64: 2, 4>}, {transform_indices = @transform_3, window_bounds = array<i64: 512, 4>}]} {
    %c0 = arith.constant 0 : index
    %c0_0 = arith.constant 0 : index
    %0 = vector.load %arg1[%c0, %c0_0] : memref<512x27xbf16, #tpu.memory_space<vmem>>, vector<512x27xbf16>
    %c0_1 = arith.constant 0 : index
    %c0_2 = arith.constant 0 : index
    %1 = vector.load %arg2[%c0_1, %c0_2] : memref<27x4xbf16, #tpu.memory_space<vmem>>, vector<27x4xbf16>
    %cst = arith.constant dense<0.000000e+00> : vector<512x4xf32>
    %2 = tpu.matmul %0, %1, %cst {dimension_numbers = #tpu.dot_dimension_numbers<[1], [0], [0], [1], [0, 0, 1, 1], [], []>} : vector<512x27xbf16>, vector<27x4xbf16>, vector<512x4xf32> -> vector<512x4xf32>
    %c0_3 = arith.constant 0 : index
    %c0_4 = arith.constant 0 : index
    %3 = vector.load %arg3[%c0_3, %c0_4] : memref<2x4xf32, #tpu.memory_space<vmem>>, vector<1x4xf32>
    %4 = vector.broadcast %3 : vector<1x4xf32> to vector<512x4xf32>
    %5 = arith.mulf %2, %4 : vector<512x4xf32>
    %c1 = arith.constant 1 : index
    %c0_5 = arith.constant 0 : index
    %6 = vector.load %arg3[%c1, %c0_5] : memref<2x4xf32, #tpu.memory_space<vmem>>, vector<1x4xf32>
    %7 = vector.broadcast %6 : vector<1x4xf32> to vector<512x4xf32>
    %8 = arith.addf %5, %7 : vector<512x4xf32>
    %cst_6 = arith.constant 0.000000e+00 : f32
    %9 = vector.broadcast %cst_6 : f32 to vector<512x4xf32>
    %10 = arith.maximumf %8, %9 : vector<512x4xf32>
    %11 = arith.truncf %10 : vector<512x4xf32> to vector<512x4xbf16>
    %c0_7 = arith.constant 0 : index
    %c0_8 = arith.constant 0 : index
    %12 = vector.load %arg4[%c0_7, %c0_8] : memref<512x4xbf16, #tpu.memory_space<vmem>>, vector<512x4xbf16>
    tpu.vector_store %arg4[%c0_7, %c0_8], %11 {strides = array<i32>} : memref<512x4xbf16, #tpu.memory_space<vmem>>, vector<512x4xbf16>,
    return
  }
  func.func @transform_0(%arg0: i32) -> (i32, i32) {
    %c0_i32 = arith.constant 0 : i32
    %c0_i32_0 = arith.constant 0 : i32
    return %arg0, %c0_i32 : i32, i32
  }
  func.func @transform_1(%arg0: i32) -> (i32, i32) {
    %c0_i32 = arith.constant 0 : i32
    %c0_i32_0 = arith.constant 0 : i32
    %c0_i32_1 = arith.constant 0 : i32
    return %c0_i32, %c0_i32_0 : i32, i32
  }
  func.func @transform_2(%arg0: i32) -> (i32, i32) {
    %c0_i32 = arith.constant 0 : i32
    %c0_i32_0 = arith.constant 0 : i32
    %c0_i32_1 = arith.constant 0 : i32
    return %c0_i32, %c0_i32_0 : i32, i32
  }
  func.func @transform_3(%arg0: i32) -> (i32, i32) {
    %c0_i32 = arith.constant 0 : i32
    %c0_i32_0 = arith.constant 0 : i32
    return %arg0, %c0_i32 : i32, i32
  }
}

module attributes {stable_mosaic.version = 11 : i64} {
  func.func @_mm_kernel(%arg0: i32, %arg1: memref<128x36xbf16, #tpu.memory_space<vmem>>, %arg2: memref<36x8xbf16, #tpu.memory_space<vmem>>, %arg3: memref<2x8xf32, #tpu.memory_space<vmem>>, %arg4: memref<128x8xbf16, #tpu.memory_space<vmem>>) attributes {dimension_semantics = [#tpu.dimension_semantics<parallel>], iteration_bounds = array<i64: 1>, scalar_prefetch = 0 : i64, scratch_operands = 0 : i64, tpu.core_type = #tpu.core_type<tc>, window_params = [{transform_indices = @transform_0, window_bounds = array<i64: 128, 36>}, {pipeline_mode = #tpu.pipeline_mode<synchronous>, transform_indices = @transform_1, window_bounds = array<i64: 36, 8>}, {pipeline_mode = #tpu.pipeline_mode<synchronous>, transform_indices = @transform_2, window_bounds = array<i64: 2, 8>}, {transform_indices = @transform_3, window_bounds = array<i64: 128, 8>}]} {
    %c0 = arith.constant 0 : index
    %c0_0 = arith.constant 0 : index
    %0 = vector.load %arg1[%c0, %c0_0] : memref<128x36xbf16, #tpu.memory_space<vmem>>, vector<128x36xbf16>
    %c0_1 = arith.constant 0 : index
    %c0_2 = arith.constant 0 : index
    %1 = vector.load %arg2[%c0_1, %c0_2] : memref<36x8xbf16, #tpu.memory_space<vmem>>, vector<36x8xbf16>
    %cst = arith.constant dense<0.000000e+00> : vector<128x8xf32>
    %2 = tpu.matmul %0, %1, %cst {dimension_numbers = #tpu.dot_dimension_numbers<[1], [0], [0], [1], [0, 0, 1, 1], [], []>} : vector<128x36xbf16>, vector<36x8xbf16>, vector<128x8xf32> -> vector<128x8xf32>
    %c0_3 = arith.constant 0 : index
    %c0_4 = arith.constant 0 : index
    %3 = vector.load %arg3[%c0_3, %c0_4] : memref<2x8xf32, #tpu.memory_space<vmem>>, vector<1x8xf32>
    %4 = vector.broadcast %3 : vector<1x8xf32> to vector<128x8xf32>
    %5 = arith.mulf %2, %4 : vector<128x8xf32>
    %c1 = arith.constant 1 : index
    %c0_5 = arith.constant 0 : index
    %6 = vector.load %arg3[%c1, %c0_5] : memref<2x8xf32, #tpu.memory_space<vmem>>, vector<1x8xf32>
    %7 = vector.broadcast %6 : vector<1x8xf32> to vector<128x8xf32>
    %8 = arith.addf %5, %7 : vector<128x8xf32>
    %9 = arith.truncf %8 : vector<128x8xf32> to vector<128x8xbf16>
    %c0_6 = arith.constant 0 : index
    %c0_7 = arith.constant 0 : index
    %10 = vector.load %arg4[%c0_6, %c0_7] : memref<128x8xbf16, #tpu.memory_space<vmem>>, vector<128x8xbf16>
    tpu.vector_store %arg4[%c0_6, %c0_7], %9 {strides = array<i32>} : memref<128x8xbf16, #tpu.memory_space<vmem>>, vector<128x8xbf16>,
    return
  }
  func.func @transform_0(%arg0: i32) -> (i32, i32) {
    %c0_i32 = arith.constant 0 : i32
    %c0_i32_0 = arith.constant 0 : i32
    return %arg0, %c0_i32 : i32, i32
  }
  func.func @transform_1(%arg0: i32) -> (i32, i32) {
    %c0_i32 = arith.constant 0 : i32
    %c0_i32_0 = arith.constant 0 : i32
    %c0_i32_1 = arith.constant 0 : i32
    return %c0_i32, %c0_i32_0 : i32, i32
  }
  func.func @transform_2(%arg0: i32) -> (i32, i32) {
    %c0_i32 = arith.constant 0 : i32
    %c0_i32_0 = arith.constant 0 : i32
    %c0_i32_1 = arith.constant 0 : i32
    return %c0_i32, %c0_i32_0 : i32, i32
  }
  func.func @transform_3(%arg0: i32) -> (i32, i32) {
    %c0_i32 = arith.constant 0 : i32
    %c0_i32_0 = arith.constant 0 : i32
    return %arg0, %c0_i32 : i32, i32
  }
}

module attributes {stable_mosaic.version = 11 : i64} {
  func.func @_mm_kernel(%arg0: i32, %arg1: memref<32x72xbf16, #tpu.memory_space<vmem>>, %arg2: memref<72x8xbf16, #tpu.memory_space<vmem>>, %arg3: memref<2x8xf32, #tpu.memory_space<vmem>>, %arg4: memref<32x8xbf16, #tpu.memory_space<vmem>>) attributes {dimension_semantics = [#tpu.dimension_semantics<parallel>], iteration_bounds = array<i64: 1>, scalar_prefetch = 0 : i64, scratch_operands = 0 : i64, tpu.core_type = #tpu.core_type<tc>, window_params = [{transform_indices = @transform_0, window_bounds = array<i64: 32, 72>}, {pipeline_mode = #tpu.pipeline_mode<synchronous>, transform_indices = @transform_1, window_bounds = array<i64: 72, 8>}, {pipeline_mode = #tpu.pipeline_mode<synchronous>, transform_indices = @transform_2, window_bounds = array<i64: 2, 8>}, {transform_indices = @transform_3, window_bounds = array<i64: 32, 8>}]} {
    %c0 = arith.constant 0 : index
    %c0_0 = arith.constant 0 : index
    %0 = vector.load %arg1[%c0, %c0_0] : memref<32x72xbf16, #tpu.memory_space<vmem>>, vector<32x72xbf16>
    %cst = arith.constant 0.000000e+00 : bf16
    %1 = vector.broadcast %cst : bf16 to vector<32x72xbf16>
    %2 = arith.maximumf %0, %1 : vector<32x72xbf16>
    %c0_1 = arith.constant 0 : index
    %c0_2 = arith.constant 0 : index
    %3 = vector.load %arg2[%c0_1, %c0_2] : memref<72x8xbf16, #tpu.memory_space<vmem>>, vector<72x8xbf16>
    %cst_3 = arith.constant dense<0.000000e+00> : vector<32x8xf32>
    %4 = tpu.matmul %2, %3, %cst_3 {dimension_numbers = #tpu.dot_dimension_numbers<[1], [0], [0], [1], [0, 0, 1, 1], [], []>} : vector<32x72xbf16>, vector<72x8xbf16>, vector<32x8xf32> -> vector<32x8xf32>
    %c0_4 = arith.constant 0 : index
    %c0_5 = arith.constant 0 : index
    %5 = vector.load %arg3[%c0_4, %c0_5] : memref<2x8xf32, #tpu.memory_space<vmem>>, vector<1x8xf32>
    %6 = vector.broadcast %5 : vector<1x8xf32> to vector<32x8xf32>
    %7 = arith.mulf %4, %6 : vector<32x8xf32>
    %c1 = arith.constant 1 : index
    %c0_6 = arith.constant 0 : index
    %8 = vector.load %arg3[%c1, %c0_6] : memref<2x8xf32, #tpu.memory_space<vmem>>, vector<1x8xf32>
    %9 = vector.broadcast %8 : vector<1x8xf32> to vector<32x8xf32>
    %10 = arith.addf %7, %9 : vector<32x8xf32>
    %11 = arith.truncf %10 : vector<32x8xf32> to vector<32x8xbf16>
    %c0_7 = arith.constant 0 : index
    %c0_8 = arith.constant 0 : index
    %12 = vector.load %arg4[%c0_7, %c0_8] : memref<32x8xbf16, #tpu.memory_space<vmem>>, vector<32x8xbf16>
    tpu.vector_store %arg4[%c0_7, %c0_8], %11 {strides = array<i32>} : memref<32x8xbf16, #tpu.memory_space<vmem>>, vector<32x8xbf16>,
    return
  }
  func.func @transform_0(%arg0: i32) -> (i32, i32) {
    %c0_i32 = arith.constant 0 : i32
    %c0_i32_0 = arith.constant 0 : i32
    return %arg0, %c0_i32 : i32, i32
  }
  func.func @transform_1(%arg0: i32) -> (i32, i32) {
    %c0_i32 = arith.constant 0 : i32
    %c0_i32_0 = arith.constant 0 : i32
    %c0_i32_1 = arith.constant 0 : i32
    return %c0_i32, %c0_i32_0 : i32, i32
  }
  func.func @transform_2(%arg0: i32) -> (i32, i32) {
    %c0_i32 = arith.constant 0 : i32
    %c0_i32_0 = arith.constant 0 : i32
    %c0_i32_1 = arith.constant 0 : i32
    return %c0_i32, %c0_i32_0 : i32, i32
  }
  func.func @transform_3(%arg0: i32) -> (i32, i32) {
    %c0_i32 = arith.constant 0 : i32
    %c0_i32_0 = arith.constant 0 : i32
    return %arg0, %c0_i32 : i32, i32
  }
}

module attributes {stable_mosaic.version = 11 : i64} {
  func.func @_mm_kernel(%arg0: i32, %arg1: memref<32x8xbf16, #tpu.memory_space<vmem>>, %arg2: memref<8x8xbf16, #tpu.memory_space<vmem>>, %arg3: memref<2x8xf32, #tpu.memory_space<vmem>>, %arg4: memref<32x8xbf16, #tpu.memory_space<vmem>>) attributes {dimension_semantics = [#tpu.dimension_semantics<parallel>], iteration_bounds = array<i64: 1>, scalar_prefetch = 0 : i64, scratch_operands = 0 : i64, tpu.core_type = #tpu.core_type<tc>, window_params = [{transform_indices = @transform_0, window_bounds = array<i64: 32, 8>}, {pipeline_mode = #tpu.pipeline_mode<synchronous>, transform_indices = @transform_1, window_bounds = array<i64: 8, 8>}, {pipeline_mode = #tpu.pipeline_mode<synchronous>, transform_indices = @transform_2, window_bounds = array<i64: 2, 8>}, {transform_indices = @transform_3, window_bounds = array<i64: 32, 8>}]} {
    %c0 = arith.constant 0 : index
    %c0_0 = arith.constant 0 : index
    %0 = vector.load %arg1[%c0, %c0_0] : memref<32x8xbf16, #tpu.memory_space<vmem>>, vector<32x8xbf16>
    %cst = arith.constant 0.000000e+00 : bf16
    %1 = vector.broadcast %cst : bf16 to vector<32x8xbf16>
    %2 = arith.maximumf %0, %1 : vector<32x8xbf16>
    %c0_1 = arith.constant 0 : index
    %c0_2 = arith.constant 0 : index
    %3 = vector.load %arg2[%c0_1, %c0_2] : memref<8x8xbf16, #tpu.memory_space<vmem>>, vector<8x8xbf16>
    %cst_3 = arith.constant dense<0.000000e+00> : vector<32x8xf32>
    %4 = tpu.matmul %2, %3, %cst_3 {dimension_numbers = #tpu.dot_dimension_numbers<[1], [0], [0], [1], [0, 0, 1, 1], [], []>} : vector<32x8xbf16>, vector<8x8xbf16>, vector<32x8xf32> -> vector<32x8xf32>
    %c0_4 = arith.constant 0 : index
    %c0_5 = arith.constant 0 : index
    %5 = vector.load %arg3[%c0_4, %c0_5] : memref<2x8xf32, #tpu.memory_space<vmem>>, vector<1x8xf32>
    %6 = vector.broadcast %5 : vector<1x8xf32> to vector<32x8xf32>
    %7 = arith.mulf %4, %6 : vector<32x8xf32>
    %c1 = arith.constant 1 : index
    %c0_6 = arith.constant 0 : index
    %8 = vector.load %arg3[%c1, %c0_6] : memref<2x8xf32, #tpu.memory_space<vmem>>, vector<1x8xf32>
    %9 = vector.broadcast %8 : vector<1x8xf32> to vector<32x8xf32>
    %10 = arith.addf %7, %9 : vector<32x8xf32>
    %11 = arith.truncf %10 : vector<32x8xf32> to vector<32x8xbf16>
    %c0_7 = arith.constant 0 : index
    %c0_8 = arith.constant 0 : index
    %12 = vector.load %arg4[%c0_7, %c0_8] : memref<32x8xbf16, #tpu.memory_space<vmem>>, vector<32x8xbf16>
    tpu.vector_store %arg4[%c0_7, %c0_8], %11 {strides = array<i32>} : memref<32x8xbf16, #tpu.memory_space<vmem>>, vector<32x8xbf16>,
    return
  }
  func.func @transform_0(%arg0: i32) -> (i32, i32) {
    %c0_i32 = arith.constant 0 : i32
    %c0_i32_0 = arith.constant 0 : i32
    return %arg0, %c0_i32 : i32, i32
  }
  func.func @transform_1(%arg0: i32) -> (i32, i32) {
    %c0_i32 = arith.constant 0 : i32
    %c0_i32_0 = arith.constant 0 : i32
    %c0_i32_1 = arith.constant 0 : i32
    return %c0_i32, %c0_i32_0 : i32, i32
  }
  func.func @transform_2(%arg0: i32) -> (i32, i32) {
    %c0_i32 = arith.constant 0 : i32
    %c0_i32_0 = arith.constant 0 : i32
    %c0_i32_1 = arith.constant 0 : i32
    return %c0_i32, %c0_i32_0 : i32, i32
  }
  func.func @transform_3(%arg0: i32) -> (i32, i32) {
    %c0_i32 = arith.constant 0 : i32
    %c0_i32_0 = arith.constant 0 : i32
    return %arg0, %c0_i32 : i32, i32
  }
}

module attributes {stable_mosaic.version = 11 : i64} {
  func.func @_avgpool_kernel(%arg0: i32, %arg1: memref<1x6x6x8xbf16, #tpu.memory_space<vmem>>, %arg2: memref<1x4x4x1xf32, #tpu.memory_space<vmem>>, %arg3: memref<1x4x4x8xbf16, #tpu.memory_space<vmem>>) attributes {dimension_semantics = [#tpu.dimension_semantics<parallel>], iteration_bounds = array<i64: 2>, scalar_prefetch = 0 : i64, scratch_operands = 0 : i64, tpu.core_type = #tpu.core_type<tc>, window_params = [{transform_indices = @transform_0, window_bounds = array<i64: 1, 6, 6, 8>}, {pipeline_mode = #tpu.pipeline_mode<synchronous>, transform_indices = @transform_1, window_bounds = array<i64: 1, 4, 4, 1>}, {transform_indices = @transform_2, window_bounds = array<i64: 1, 4, 4, 8>}]} {
    %c0 = arith.constant 0 : index
    %c0_0 = arith.constant 0 : index
    %c0_1 = arith.constant 0 : index
    %c0_2 = arith.constant 0 : index
    %0 = vector.load %arg1[%c0, %c0_0, %c0_1, %c0_2] : memref<1x6x6x8xbf16, #tpu.memory_space<vmem>>, vector<1x6x6x8xbf16>
    %1 = arith.extf %0 : vector<1x6x6x8xbf16> to vector<1x6x6x8xf32>
    %2 = vector.extract_strided_slice %1 {offsets = [0, 0, 0, 0], sizes = [1, 4, 4, 8], strides = [1, 1, 1, 1]} : vector<1x6x6x8xf32> to vector<1x4x4x8xf32>
    %3 = vector.extract_strided_slice %1 {offsets = [0, 0, 1, 0], sizes = [1, 4, 4, 8], strides = [1, 1, 1, 1]} : vector<1x6x6x8xf32> to vector<1x4x4x8xf32>
    %4 = arith.addf %2, %3 : vector<1x4x4x8xf32>
    %5 = vector.extract_strided_slice %1 {offsets = [0, 0, 2, 0], sizes = [1, 4, 4, 8], strides = [1, 1, 1, 1]} : vector<1x6x6x8xf32> to vector<1x4x4x8xf32>
    %6 = arith.addf %4, %5 : vector<1x4x4x8xf32>
    %7 = vector.extract_strided_slice %1 {offsets = [0, 1, 0, 0], sizes = [1, 4, 4, 8], strides = [1, 1, 1, 1]} : vector<1x6x6x8xf32> to vector<1x4x4x8xf32>
    %8 = arith.addf %6, %7 : vector<1x4x4x8xf32>
    %9 = vector.extract_strided_slice %1 {offsets = [0, 1, 1, 0], sizes = [1, 4, 4, 8], strides = [1, 1, 1, 1]} : vector<1x6x6x8xf32> to vector<1x4x4x8xf32>
    %10 = arith.addf %8, %9 : vector<1x4x4x8xf32>
    %11 = vector.extract_strided_slice %1 {offsets = [0, 1, 2, 0], sizes = [1, 4, 4, 8], strides = [1, 1, 1, 1]} : vector<1x6x6x8xf32> to vector<1x4x4x8xf32>
    %12 = arith.addf %10, %11 : vector<1x4x4x8xf32>
    %13 = vector.extract_strided_slice %1 {offsets = [0, 2, 0, 0], sizes = [1, 4, 4, 8], strides = [1, 1, 1, 1]} : vector<1x6x6x8xf32> to vector<1x4x4x8xf32>
    %14 = arith.addf %12, %13 : vector<1x4x4x8xf32>
    %15 = vector.extract_strided_slice %1 {offsets = [0, 2, 1, 0], sizes = [1, 4, 4, 8], strides = [1, 1, 1, 1]} : vector<1x6x6x8xf32> to vector<1x4x4x8xf32>
    %16 = arith.addf %14, %15 : vector<1x4x4x8xf32>
    %17 = vector.extract_strided_slice %1 {offsets = [0, 2, 2, 0], sizes = [1, 4, 4, 8], strides = [1, 1, 1, 1]} : vector<1x6x6x8xf32> to vector<1x4x4x8xf32>
    %18 = arith.addf %16, %17 : vector<1x4x4x8xf32>
    %c0_3 = arith.constant 0 : index
    %c0_4 = arith.constant 0 : index
    %c0_5 = arith.constant 0 : index
    %c0_6 = arith.constant 0 : index
    %19 = vector.load %arg2[%c0_3, %c0_4, %c0_5, %c0_6] : memref<1x4x4x1xf32, #tpu.memory_space<vmem>>, vector<1x4x4x1xf32>
    %20 = vector.broadcast %19 : vector<1x4x4x1xf32> to vector<1x4x4x8xf32>
    %21 = arith.mulf %18, %20 : vector<1x4x4x8xf32>
    %22 = arith.truncf %21 : vector<1x4x4x8xf32> to vector<1x4x4x8xbf16>
    %c0_7 = arith.constant 0 : index
    %c0_8 = arith.constant 0 : index
    %c0_9 = arith.constant 0 : index
    %c0_10 = arith.constant 0 : index
    %23 = vector.load %arg3[%c0_7, %c0_8, %c0_9, %c0_10] : memref<1x4x4x8xbf16, #tpu.memory_space<vmem>>, vector<1x4x4x8xbf16>
    tpu.vector_store %arg3[%c0_7, %c0_8, %c0_9, %c0_10], %22 {strides = array<i32>} : memref<1x4x4x8xbf16, #tpu.memory_space<vmem>>, vector<1x4x4x8xbf16>,
    return
  }
  func.func @transform_0(%arg0: i32) -> (i32, i32, i32, i32) {
    %c0_i32 = arith.constant 0 : i32
    %c0_i32_0 = arith.constant 0 : i32
    %c0_i32_1 = arith.constant 0 : i32
    %c0_i32_2 = arith.constant 0 : i32
    return %arg0, %c0_i32, %c0_i32_0, %c0_i32_1 : i32, i32, i32, i32
  }
  func.func @transform_1(%arg0: i32) -> (i32, i32, i32, i32) {
    %c0_i32 = arith.constant 0 : i32
    %c0_i32_0 = arith.constant 0 : i32
    %c0_i32_1 = arith.constant 0 : i32
    %c0_i32_2 = arith.constant 0 : i32
    %c0_i32_3 = arith.constant 0 : i32
    return %c0_i32, %c0_i32_0, %c0_i32_1, %c0_i32_2 : i32, i32, i32, i32
  }
  func.func @transform_2(%arg0: i32) -> (i32, i32, i32, i32) {
    %c0_i32 = arith.constant 0 : i32
    %c0_i32_0 = arith.constant 0 : i32
    %c0_i32_1 = arith.constant 0 : i32
    %c0_i32_2 = arith.constant 0 : i32
    return %arg0, %c0_i32, %c0_i32_0, %c0_i32_1 : i32, i32, i32, i32
  }
}

module attributes {stable_mosaic.version = 11 : i64} {
  func.func @_mm_kernel(%arg0: i32, %arg1: memref<32x8xbf16, #tpu.memory_space<vmem>>, %arg2: memref<8x4xbf16, #tpu.memory_space<vmem>>, %arg3: memref<2x4xf32, #tpu.memory_space<vmem>>, %arg4: memref<32x4xbf16, #tpu.memory_space<vmem>>) attributes {dimension_semantics = [#tpu.dimension_semantics<parallel>], iteration_bounds = array<i64: 1>, scalar_prefetch = 0 : i64, scratch_operands = 0 : i64, tpu.core_type = #tpu.core_type<tc>, window_params = [{transform_indices = @transform_0, window_bounds = array<i64: 32, 8>}, {pipeline_mode = #tpu.pipeline_mode<synchronous>, transform_indices = @transform_1, window_bounds = array<i64: 8, 4>}, {pipeline_mode = #tpu.pipeline_mode<synchronous>, transform_indices = @transform_2, window_bounds = array<i64: 2, 4>}, {transform_indices = @transform_3, window_bounds = array<i64: 32, 4>}]} {
    %c0 = arith.constant 0 : index
    %c0_0 = arith.constant 0 : index
    %0 = vector.load %arg1[%c0, %c0_0] : memref<32x8xbf16, #tpu.memory_space<vmem>>, vector<32x8xbf16>
    %cst = arith.constant 0.000000e+00 : bf16
    %1 = vector.broadcast %cst : bf16 to vector<32x8xbf16>
    %2 = arith.maximumf %0, %1 : vector<32x8xbf16>
    %c0_1 = arith.constant 0 : index
    %c0_2 = arith.constant 0 : index
    %3 = vector.load %arg2[%c0_1, %c0_2] : memref<8x4xbf16, #tpu.memory_space<vmem>>, vector<8x4xbf16>
    %cst_3 = arith.constant dense<0.000000e+00> : vector<32x4xf32>
    %4 = tpu.matmul %2, %3, %cst_3 {dimension_numbers = #tpu.dot_dimension_numbers<[1], [0], [0], [1], [0, 0, 1, 1], [], []>} : vector<32x8xbf16>, vector<8x4xbf16>, vector<32x4xf32> -> vector<32x4xf32>
    %c0_4 = arith.constant 0 : index
    %c0_5 = arith.constant 0 : index
    %5 = vector.load %arg3[%c0_4, %c0_5] : memref<2x4xf32, #tpu.memory_space<vmem>>, vector<1x4xf32>
    %6 = vector.broadcast %5 : vector<1x4xf32> to vector<32x4xf32>
    %7 = arith.mulf %4, %6 : vector<32x4xf32>
    %c1 = arith.constant 1 : index
    %c0_6 = arith.constant 0 : index
    %8 = vector.load %arg3[%c1, %c0_6] : memref<2x4xf32, #tpu.memory_space<vmem>>, vector<1x4xf32>
    %9 = vector.broadcast %8 : vector<1x4xf32> to vector<32x4xf32>
    %10 = arith.addf %7, %9 : vector<32x4xf32>
    %11 = arith.truncf %10 : vector<32x4xf32> to vector<32x4xbf16>
    %c0_7 = arith.constant 0 : index
    %c0_8 = arith.constant 0 : index
    %12 = vector.load %arg4[%c0_7, %c0_8] : memref<32x4xbf16, #tpu.memory_space<vmem>>, vector<32x4xbf16>
    tpu.vector_store %arg4[%c0_7, %c0_8], %11 {strides = array<i32>} : memref<32x4xbf16, #tpu.memory_space<vmem>>, vector<32x4xbf16>,
    return
  }
  func.func @transform_0(%arg0: i32) -> (i32, i32) {
    %c0_i32 = arith.constant 0 : i32
    %c0_i32_0 = arith.constant 0 : i32
    return %arg0, %c0_i32 : i32, i32
  }
  func.func @transform_1(%arg0: i32) -> (i32, i32) {
    %c0_i32 = arith.constant 0 : i32
    %c0_i32_0 = arith.constant 0 : i32
    %c0_i32_1 = arith.constant 0 : i32
    return %c0_i32, %c0_i32_0 : i32, i32
  }
  func.func @transform_2(%arg0: i32) -> (i32, i32) {
    %c0_i32 = arith.constant 0 : i32
    %c0_i32_0 = arith.constant 0 : i32
    %c0_i32_1 = arith.constant 0 : i32
    return %c0_i32, %c0_i32_0 : i32, i32
  }
  func.func @transform_3(%arg0: i32) -> (i32, i32) {
    %c0_i32 = arith.constant 0 : i32
    %c0_i32_0 = arith.constant 0 : i32
    return %arg0, %c0_i32 : i32, i32
  }
}

module attributes {stable_mosaic.version = 11 : i64} {
  func.func @_maxpool_kernel(%arg0: i32, %arg1: memref<1x6x6x8xbf16, #tpu.memory_space<vmem>>, %arg2: memref<1x4x4x8xbf16, #tpu.memory_space<vmem>>) attributes {dimension_semantics = [#tpu.dimension_semantics<parallel>], iteration_bounds = array<i64: 2>, scalar_prefetch = 0 : i64, scratch_operands = 0 : i64, tpu.core_type = #tpu.core_type<tc>, window_params = [{transform_indices = @transform_0, window_bounds = array<i64: 1, 6, 6, 8>}, {transform_indices = @transform_1, window_bounds = array<i64: 1, 4, 4, 8>}]} {
    %c0 = arith.constant 0 : index
    %c0_0 = arith.constant 0 : index
    %c0_1 = arith.constant 0 : index
    %c0_2 = arith.constant 0 : index
    %0 = vector.load %arg1[%c0, %c0_0, %c0_1, %c0_2] : memref<1x6x6x8xbf16, #tpu.memory_space<vmem>>, vector<1x6x6x8xbf16>
    %1 = arith.extf %0 : vector<1x6x6x8xbf16> to vector<1x6x6x8xf32>
    %2 = vector.extract_strided_slice %1 {offsets = [0, 0, 0, 0], sizes = [1, 4, 4, 8], strides = [1, 1, 1, 1]} : vector<1x6x6x8xf32> to vector<1x4x4x8xf32>
    %3 = vector.extract_strided_slice %1 {offsets = [0, 0, 1, 0], sizes = [1, 4, 4, 8], strides = [1, 1, 1, 1]} : vector<1x6x6x8xf32> to vector<1x4x4x8xf32>
    %4 = arith.maximumf %2, %3 : vector<1x4x4x8xf32>
    %5 = vector.extract_strided_slice %1 {offsets = [0, 0, 2, 0], sizes = [1, 4, 4, 8], strides = [1, 1, 1, 1]} : vector<1x6x6x8xf32> to vector<1x4x4x8xf32>
    %6 = arith.maximumf %4, %5 : vector<1x4x4x8xf32>
    %7 = vector.extract_strided_slice %1 {offsets = [0, 1, 0, 0], sizes = [1, 4, 4, 8], strides = [1, 1, 1, 1]} : vector<1x6x6x8xf32> to vector<1x4x4x8xf32>
    %8 = arith.maximumf %6, %7 : vector<1x4x4x8xf32>
    %9 = vector.extract_strided_slice %1 {offsets = [0, 1, 1, 0], sizes = [1, 4, 4, 8], strides = [1, 1, 1, 1]} : vector<1x6x6x8xf32> to vector<1x4x4x8xf32>
    %10 = arith.maximumf %8, %9 : vector<1x4x4x8xf32>
    %11 = vector.extract_strided_slice %1 {offsets = [0, 1, 2, 0], sizes = [1, 4, 4, 8], strides = [1, 1, 1, 1]} : vector<1x6x6x8xf32> to vector<1x4x4x8xf32>
    %12 = arith.maximumf %10, %11 : vector<1x4x4x8xf32>
    %13 = vector.extract_strided_slice %1 {offsets = [0, 2, 0, 0], sizes = [1, 4, 4, 8], strides = [1, 1, 1, 1]} : vector<1x6x6x8xf32> to vector<1x4x4x8xf32>
    %14 = arith.maximumf %12, %13 : vector<1x4x4x8xf32>
    %15 = vector.extract_strided_slice %1 {offsets = [0, 2, 1, 0], sizes = [1, 4, 4, 8], strides = [1, 1, 1, 1]} : vector<1x6x6x8xf32> to vector<1x4x4x8xf32>
    %16 = arith.maximumf %14, %15 : vector<1x4x4x8xf32>
    %17 = vector.extract_strided_slice %1 {offsets = [0, 2, 2, 0], sizes = [1, 4, 4, 8], strides = [1, 1, 1, 1]} : vector<1x6x6x8xf32> to vector<1x4x4x8xf32>
    %18 = arith.maximumf %16, %17 : vector<1x4x4x8xf32>
    %19 = arith.truncf %18 : vector<1x4x4x8xf32> to vector<1x4x4x8xbf16>
    %c0_3 = arith.constant 0 : index
    %c0_4 = arith.constant 0 : index
    %c0_5 = arith.constant 0 : index
    %c0_6 = arith.constant 0 : index
    %20 = vector.load %arg2[%c0_3, %c0_4, %c0_5, %c0_6] : memref<1x4x4x8xbf16, #tpu.memory_space<vmem>>, vector<1x4x4x8xbf16>
    tpu.vector_store %arg2[%c0_3, %c0_4, %c0_5, %c0_6], %19 {strides = array<i32>} : memref<1x4x4x8xbf16, #tpu.memory_space<vmem>>, vector<1x4x4x8xbf16>,
    return
  }
  func.func @transform_0(%arg0: i32) -> (i32, i32, i32, i32) {
    %c0_i32 = arith.constant 0 : i32
    %c0_i32_0 = arith.constant 0 : i32
    %c0_i32_1 = arith.constant 0 : i32
    %c0_i32_2 = arith.constant 0 : i32
    return %arg0, %c0_i32, %c0_i32_0, %c0_i32_1 : i32, i32, i32, i32
  }
  func.func @transform_1(%arg0: i32) -> (i32, i32, i32, i32) {
    %c0_i32 = arith.constant 0 : i32
    %c0_i32_0 = arith.constant 0 : i32
    %c0_i32_1 = arith.constant 0 : i32
    %c0_i32_2 = arith.constant 0 : i32
    return %arg0, %c0_i32, %c0_i32_0, %c0_i32_1 : i32, i32, i32, i32
  }
}

module attributes {stable_mosaic.version = 11 : i64} {
  func.func @_mm_kernel(%arg0: i32, %arg1: memref<8x16xbf16, #tpu.memory_space<vmem>>, %arg2: memref<16x16xbf16, #tpu.memory_space<vmem>>, %arg3: memref<2x16xf32, #tpu.memory_space<vmem>>, %arg4: memref<8x16xbf16, #tpu.memory_space<vmem>>) attributes {dimension_semantics = [#tpu.dimension_semantics<parallel>], iteration_bounds = array<i64: 1>, scalar_prefetch = 0 : i64, scratch_operands = 0 : i64, tpu.core_type = #tpu.core_type<tc>, window_params = [{transform_indices = @transform_0, window_bounds = array<i64: 8, 16>}, {pipeline_mode = #tpu.pipeline_mode<synchronous>, transform_indices = @transform_1, window_bounds = array<i64: 16, 16>}, {pipeline_mode = #tpu.pipeline_mode<synchronous>, transform_indices = @transform_2, window_bounds = array<i64: 2, 16>}, {transform_indices = @transform_3, window_bounds = array<i64: 8, 16>}]} {
    %c0 = arith.constant 0 : index
    %c0_0 = arith.constant 0 : index
    %0 = vector.load %arg1[%c0, %c0_0] : memref<8x16xbf16, #tpu.memory_space<vmem>>, vector<8x16xbf16>
    %cst = arith.constant 0.000000e+00 : bf16
    %1 = vector.broadcast %cst : bf16 to vector<8x16xbf16>
    %2 = arith.maximumf %0, %1 : vector<8x16xbf16>
    %c0_1 = arith.constant 0 : index
    %c0_2 = arith.constant 0 : index
    %3 = vector.load %arg2[%c0_1, %c0_2] : memref<16x16xbf16, #tpu.memory_space<vmem>>, vector<16x16xbf16>
    %cst_3 = arith.constant dense<0.000000e+00> : vector<8x16xf32>
    %4 = tpu.matmul %2, %3, %cst_3 {dimension_numbers = #tpu.dot_dimension_numbers<[1], [0], [0], [1], [0, 0, 1, 1], [], []>} : vector<8x16xbf16>, vector<16x16xbf16>, vector<8x16xf32> -> vector<8x16xf32>
    %c0_4 = arith.constant 0 : index
    %c0_5 = arith.constant 0 : index
    %5 = vector.load %arg3[%c0_4, %c0_5] : memref<2x16xf32, #tpu.memory_space<vmem>>, vector<1x16xf32>
    %6 = vector.broadcast %5 : vector<1x16xf32> to vector<8x16xf32>
    %7 = arith.mulf %4, %6 : vector<8x16xf32>
    %c1 = arith.constant 1 : index
    %c0_6 = arith.constant 0 : index
    %8 = vector.load %arg3[%c1, %c0_6] : memref<2x16xf32, #tpu.memory_space<vmem>>, vector<1x16xf32>
    %9 = vector.broadcast %8 : vector<1x16xf32> to vector<8x16xf32>
    %10 = arith.addf %7, %9 : vector<8x16xf32>
    %11 = arith.truncf %10 : vector<8x16xf32> to vector<8x16xbf16>
    %c0_7 = arith.constant 0 : index
    %c0_8 = arith.constant 0 : index
    %12 = vector.load %arg4[%c0_7, %c0_8] : memref<8x16xbf16, #tpu.memory_space<vmem>>, vector<8x16xbf16>
    tpu.vector_store %arg4[%c0_7, %c0_8], %11 {strides = array<i32>} : memref<8x16xbf16, #tpu.memory_space<vmem>>, vector<8x16xbf16>,
    return
  }
  func.func @transform_0(%arg0: i32) -> (i32, i32) {
    %c0_i32 = arith.constant 0 : i32
    %c0_i32_0 = arith.constant 0 : i32
    return %arg0, %c0_i32 : i32, i32
  }
  func.func @transform_1(%arg0: i32) -> (i32, i32) {
    %c0_i32 = arith.constant 0 : i32
    %c0_i32_0 = arith.constant 0 : i32
    %c0_i32_1 = arith.constant 0 : i32
    return %c0_i32, %c0_i32_0 : i32, i32
  }
  func.func @transform_2(%arg0: i32) -> (i32, i32) {
    %c0_i32 = arith.constant 0 : i32
    %c0_i32_0 = arith.constant 0 : i32
    %c0_i32_1 = arith.constant 0 : i32
    return %c0_i32, %c0_i32_0 : i32, i32
  }
  func.func @transform_3(%arg0: i32) -> (i32, i32) {
    %c0_i32 = arith.constant 0 : i32
    %c0_i32_0 = arith.constant 0 : i32
    return %arg0, %c0_i32 : i32, i32
  }
}

module attributes {stable_mosaic.version = 11 : i64} {
  func.func @_maxpool_kernel(%arg0: i32, %arg1: memref<1x4x4x32xbf16, #tpu.memory_space<vmem>>, %arg2: memref<1x2x2x32xbf16, #tpu.memory_space<vmem>>) attributes {dimension_semantics = [#tpu.dimension_semantics<parallel>], iteration_bounds = array<i64: 2>, scalar_prefetch = 0 : i64, scratch_operands = 0 : i64, tpu.core_type = #tpu.core_type<tc>, window_params = [{transform_indices = @transform_0, window_bounds = array<i64: 1, 4, 4, 32>}, {transform_indices = @transform_1, window_bounds = array<i64: 1, 2, 2, 32>}]} {
    %c0 = arith.constant 0 : index
    %c0_0 = arith.constant 0 : index
    %c0_1 = arith.constant 0 : index
    %c0_2 = arith.constant 0 : index
    %0 = vector.load %arg1[%c0, %c0_0, %c0_1, %c0_2] : memref<1x4x4x32xbf16, #tpu.memory_space<vmem>>, vector<1x4x4x32xbf16>
    %1 = arith.extf %0 : vector<1x4x4x32xbf16> to vector<1x4x4x32xf32>
    %2 = vector.extract_strided_slice %1 {offsets = [0, 0, 0, 0], sizes = [1, 2, 2, 32], strides = [1, 1, 1, 1]} : vector<1x4x4x32xf32> to vector<1x2x2x32xf32>
    %3 = vector.extract_strided_slice %1 {offsets = [0, 0, 1, 0], sizes = [1, 2, 2, 32], strides = [1, 1, 1, 1]} : vector<1x4x4x32xf32> to vector<1x2x2x32xf32>
    %4 = arith.maximumf %2, %3 : vector<1x2x2x32xf32>
    %5 = vector.extract_strided_slice %1 {offsets = [0, 0, 2, 0], sizes = [1, 2, 2, 32], strides = [1, 1, 1, 1]} : vector<1x4x4x32xf32> to vector<1x2x2x32xf32>
    %6 = arith.maximumf %4, %5 : vector<1x2x2x32xf32>
    %7 = vector.extract_strided_slice %1 {offsets = [0, 1, 0, 0], sizes = [1, 2, 2, 32], strides = [1, 1, 1, 1]} : vector<1x4x4x32xf32> to vector<1x2x2x32xf32>
    %8 = arith.maximumf %6, %7 : vector<1x2x2x32xf32>
    %9 = vector.extract_strided_slice %1 {offsets = [0, 1, 1, 0], sizes = [1, 2, 2, 32], strides = [1, 1, 1, 1]} : vector<1x4x4x32xf32> to vector<1x2x2x32xf32>
    %10 = arith.maximumf %8, %9 : vector<1x2x2x32xf32>
    %11 = vector.extract_strided_slice %1 {offsets = [0, 1, 2, 0], sizes = [1, 2, 2, 32], strides = [1, 1, 1, 1]} : vector<1x4x4x32xf32> to vector<1x2x2x32xf32>
    %12 = arith.maximumf %10, %11 : vector<1x2x2x32xf32>
    %13 = vector.extract_strided_slice %1 {offsets = [0, 2, 0, 0], sizes = [1, 2, 2, 32], strides = [1, 1, 1, 1]} : vector<1x4x4x32xf32> to vector<1x2x2x32xf32>
    %14 = arith.maximumf %12, %13 : vector<1x2x2x32xf32>
    %15 = vector.extract_strided_slice %1 {offsets = [0, 2, 1, 0], sizes = [1, 2, 2, 32], strides = [1, 1, 1, 1]} : vector<1x4x4x32xf32> to vector<1x2x2x32xf32>
    %16 = arith.maximumf %14, %15 : vector<1x2x2x32xf32>
    %17 = vector.extract_strided_slice %1 {offsets = [0, 2, 2, 0], sizes = [1, 2, 2, 32], strides = [1, 1, 1, 1]} : vector<1x4x4x32xf32> to vector<1x2x2x32xf32>
    %18 = arith.maximumf %16, %17 : vector<1x2x2x32xf32>
    %19 = arith.truncf %18 : vector<1x2x2x32xf32> to vector<1x2x2x32xbf16>
    %c0_3 = arith.constant 0 : index
    %c0_4 = arith.constant 0 : index
    %c0_5 = arith.constant 0 : index
    %c0_6 = arith.constant 0 : index
    %20 = vector.load %arg2[%c0_3, %c0_4, %c0_5, %c0_6] : memref<1x2x2x32xbf16, #tpu.memory_space<vmem>>, vector<1x2x2x32xbf16>
    tpu.vector_store %arg2[%c0_3, %c0_4, %c0_5, %c0_6], %19 {strides = array<i32>} : memref<1x2x2x32xbf16, #tpu.memory_space<vmem>>, vector<1x2x2x32xbf16>,
    return
  }
  func.func @transform_0(%arg0: i32) -> (i32, i32, i32, i32) {
    %c0_i32 = arith.constant 0 : i32
    %c0_i32_0 = arith.constant 0 : i32
    %c0_i32_1 = arith.constant 0 : i32
    %c0_i32_2 = arith.constant 0 : i32
    return %arg0, %c0_i32, %c0_i32_0, %c0_i32_1 : i32, i32, i32, i32
  }
  func.func @transform_1(%arg0: i32) -> (i32, i32, i32, i32) {
    %c0_i32 = arith.constant 0 : i32
    %c0_i32_0 = arith.constant 0 : i32
    %c0_i32_1 = arith.constant 0 : i32
    %c0_i32_2 = arith.constant 0 : i32
    return %arg0, %c0_i32, %c0_i32_0, %c0_i32_1 : i32, i32, i32, i32
  }
}

module attributes {stable_mosaic.version = 11 : i64} {
  func.func @_mm_kernel(%arg0: i32, %arg1: memref<32x16xbf16, #tpu.memory_space<vmem>>, %arg2: memref<16x16xbf16, #tpu.memory_space<vmem>>, %arg3: memref<2x16xf32, #tpu.memory_space<vmem>>, %arg4: memref<32x16xbf16, #tpu.memory_space<vmem>>) attributes {dimension_semantics = [#tpu.dimension_semantics<parallel>], iteration_bounds = array<i64: 1>, scalar_prefetch = 0 : i64, scratch_operands = 0 : i64, tpu.core_type = #tpu.core_type<tc>, window_params = [{transform_indices = @transform_0, window_bounds = array<i64: 32, 16>}, {pipeline_mode = #tpu.pipeline_mode<synchronous>, transform_indices = @transform_1, window_bounds = array<i64: 16, 16>}, {pipeline_mode = #tpu.pipeline_mode<synchronous>, transform_indices = @transform_2, window_bounds = array<i64: 2, 16>}, {transform_indices = @transform_3, window_bounds = array<i64: 32, 16>}]} {
    %c0 = arith.constant 0 : index
    %c0_0 = arith.constant 0 : index
    %0 = vector.load %arg1[%c0, %c0_0] : memref<32x16xbf16, #tpu.memory_space<vmem>>, vector<32x16xbf16>
    %cst = arith.constant 0.000000e+00 : bf16
    %1 = vector.broadcast %cst : bf16 to vector<32x16xbf16>
    %2 = arith.maximumf %0, %1 : vector<32x16xbf16>
    %c0_1 = arith.constant 0 : index
    %c0_2 = arith.constant 0 : index
    %3 = vector.load %arg2[%c0_1, %c0_2] : memref<16x16xbf16, #tpu.memory_space<vmem>>, vector<16x16xbf16>
    %cst_3 = arith.constant dense<0.000000e+00> : vector<32x16xf32>
    %4 = tpu.matmul %2, %3, %cst_3 {dimension_numbers = #tpu.dot_dimension_numbers<[1], [0], [0], [1], [0, 0, 1, 1], [], []>} : vector<32x16xbf16>, vector<16x16xbf16>, vector<32x16xf32> -> vector<32x16xf32>
    %c0_4 = arith.constant 0 : index
    %c0_5 = arith.constant 0 : index
    %5 = vector.load %arg3[%c0_4, %c0_5] : memref<2x16xf32, #tpu.memory_space<vmem>>, vector<1x16xf32>
    %6 = vector.broadcast %5 : vector<1x16xf32> to vector<32x16xf32>
    %7 = arith.mulf %4, %6 : vector<32x16xf32>
    %c1 = arith.constant 1 : index
    %c0_6 = arith.constant 0 : index
    %8 = vector.load %arg3[%c1, %c0_6] : memref<2x16xf32, #tpu.memory_space<vmem>>, vector<1x16xf32>
    %9 = vector.broadcast %8 : vector<1x16xf32> to vector<32x16xf32>
    %10 = arith.addf %7, %9 : vector<32x16xf32>
    %11 = arith.truncf %10 : vector<32x16xf32> to vector<32x16xbf16>
    %c0_7 = arith.constant 0 : index
    %c0_8 = arith.constant 0 : index
    %12 = vector.load %arg4[%c0_7, %c0_8] : memref<32x16xbf16, #tpu.memory_space<vmem>>, vector<32x16xbf16>
    tpu.vector_store %arg4[%c0_7, %c0_8], %11 {strides = array<i32>} : memref<32x16xbf16, #tpu.memory_space<vmem>>, vector<32x16xbf16>,
    return
  }
  func.func @transform_0(%arg0: i32) -> (i32, i32) {
    %c0_i32 = arith.constant 0 : i32
    %c0_i32_0 = arith.constant 0 : i32
    return %arg0, %c0_i32 : i32, i32
  }
  func.func @transform_1(%arg0: i32) -> (i32, i32) {
    %c0_i32 = arith.constant 0 : i32
    %c0_i32_0 = arith.constant 0 : i32
    %c0_i32_1 = arith.constant 0 : i32
    return %c0_i32, %c0_i32_0 : i32, i32
  }
  func.func @transform_2(%arg0: i32) -> (i32, i32) {
    %c0_i32 = arith.constant 0 : i32
    %c0_i32_0 = arith.constant 0 : i32
    %c0_i32_1 = arith.constant 0 : i32
    return %c0_i32, %c0_i32_0 : i32, i32
  }
  func.func @transform_3(%arg0: i32) -> (i32, i32) {
    %c0_i32 = arith.constant 0 : i32
    %c0_i32_0 = arith.constant 0 : i32
    return %arg0, %c0_i32 : i32, i32
  }
}

module attributes {stable_mosaic.version = 11 : i64} {
  func.func @_avgpool_kernel(%arg0: i32, %arg1: memref<1x6x6x16xbf16, #tpu.memory_space<vmem>>, %arg2: memref<1x4x4x1xf32, #tpu.memory_space<vmem>>, %arg3: memref<1x4x4x16xbf16, #tpu.memory_space<vmem>>) attributes {dimension_semantics = [#tpu.dimension_semantics<parallel>], iteration_bounds = array<i64: 2>, scalar_prefetch = 0 : i64, scratch_operands = 0 : i64, tpu.core_type = #tpu.core_type<tc>, window_params = [{transform_indices = @transform_0, window_bounds = array<i64: 1, 6, 6, 16>}, {pipeline_mode = #tpu.pipeline_mode<synchronous>, transform_indices = @transform_1, window_bounds = array<i64: 1, 4, 4, 1>}, {transform_indices = @transform_2, window_bounds = array<i64: 1, 4, 4, 16>}]} {
    %c0 = arith.constant 0 : index
    %c0_0 = arith.constant 0 : index
    %c0_1 = arith.constant 0 : index
    %c0_2 = arith.constant 0 : index
    %0 = vector.load %arg1[%c0, %c0_0, %c0_1, %c0_2] : memref<1x6x6x16xbf16, #tpu.memory_space<vmem>>, vector<1x6x6x16xbf16>
    %1 = arith.extf %0 : vector<1x6x6x16xbf16> to vector<1x6x6x16xf32>
    %2 = vector.extract_strided_slice %1 {offsets = [0, 0, 0, 0], sizes = [1, 4, 4, 16], strides = [1, 1, 1, 1]} : vector<1x6x6x16xf32> to vector<1x4x4x16xf32>
    %3 = vector.extract_strided_slice %1 {offsets = [0, 0, 1, 0], sizes = [1, 4, 4, 16], strides = [1, 1, 1, 1]} : vector<1x6x6x16xf32> to vector<1x4x4x16xf32>
    %4 = arith.addf %2, %3 : vector<1x4x4x16xf32>
    %5 = vector.extract_strided_slice %1 {offsets = [0, 0, 2, 0], sizes = [1, 4, 4, 16], strides = [1, 1, 1, 1]} : vector<1x6x6x16xf32> to vector<1x4x4x16xf32>
    %6 = arith.addf %4, %5 : vector<1x4x4x16xf32>
    %7 = vector.extract_strided_slice %1 {offsets = [0, 1, 0, 0], sizes = [1, 4, 4, 16], strides = [1, 1, 1, 1]} : vector<1x6x6x16xf32> to vector<1x4x4x16xf32>
    %8 = arith.addf %6, %7 : vector<1x4x4x16xf32>
    %9 = vector.extract_strided_slice %1 {offsets = [0, 1, 1, 0], sizes = [1, 4, 4, 16], strides = [1, 1, 1, 1]} : vector<1x6x6x16xf32> to vector<1x4x4x16xf32>
    %10 = arith.addf %8, %9 : vector<1x4x4x16xf32>
    %11 = vector.extract_strided_slice %1 {offsets = [0, 1, 2, 0], sizes = [1, 4, 4, 16], strides = [1, 1, 1, 1]} : vector<1x6x6x16xf32> to vector<1x4x4x16xf32>
    %12 = arith.addf %10, %11 : vector<1x4x4x16xf32>
    %13 = vector.extract_strided_slice %1 {offsets = [0, 2, 0, 0], sizes = [1, 4, 4, 16], strides = [1, 1, 1, 1]} : vector<1x6x6x16xf32> to vector<1x4x4x16xf32>
    %14 = arith.addf %12, %13 : vector<1x4x4x16xf32>
    %15 = vector.extract_strided_slice %1 {offsets = [0, 2, 1, 0], sizes = [1, 4, 4, 16], strides = [1, 1, 1, 1]} : vector<1x6x6x16xf32> to vector<1x4x4x16xf32>
    %16 = arith.addf %14, %15 : vector<1x4x4x16xf32>
    %17 = vector.extract_strided_slice %1 {offsets = [0, 2, 2, 0], sizes = [1, 4, 4, 16], strides = [1, 1, 1, 1]} : vector<1x6x6x16xf32> to vector<1x4x4x16xf32>
    %18 = arith.addf %16, %17 : vector<1x4x4x16xf32>
    %c0_3 = arith.constant 0 : index
    %c0_4 = arith.constant 0 : index
    %c0_5 = arith.constant 0 : index
    %c0_6 = arith.constant 0 : index
    %19 = vector.load %arg2[%c0_3, %c0_4, %c0_5, %c0_6] : memref<1x4x4x1xf32, #tpu.memory_space<vmem>>, vector<1x4x4x1xf32>
    %20 = vector.broadcast %19 : vector<1x4x4x1xf32> to vector<1x4x4x16xf32>
    %21 = arith.mulf %18, %20 : vector<1x4x4x16xf32>
    %22 = arith.truncf %21 : vector<1x4x4x16xf32> to vector<1x4x4x16xbf16>
    %c0_7 = arith.constant 0 : index
    %c0_8 = arith.constant 0 : index
    %c0_9 = arith.constant 0 : index
    %c0_10 = arith.constant 0 : index
    %23 = vector.load %arg3[%c0_7, %c0_8, %c0_9, %c0_10] : memref<1x4x4x16xbf16, #tpu.memory_space<vmem>>, vector<1x4x4x16xbf16>
    tpu.vector_store %arg3[%c0_7, %c0_8, %c0_9, %c0_10], %22 {strides = array<i32>} : memref<1x4x4x16xbf16, #tpu.memory_space<vmem>>, vector<1x4x4x16xbf16>,
    return
  }
  func.func @transform_0(%arg0: i32) -> (i32, i32, i32, i32) {
    %c0_i32 = arith.constant 0 : i32
    %c0_i32_0 = arith.constant 0 : i32
    %c0_i32_1 = arith.constant 0 : i32
    %c0_i32_2 = arith.constant 0 : i32
    return %arg0, %c0_i32, %c0_i32_0, %c0_i32_1 : i32, i32, i32, i32
  }
  func.func @transform_1(%arg0: i32) -> (i32, i32, i32, i32) {
    %c0_i32 = arith.constant 0 : i32
    %c0_i32_0 = arith.constant 0 : i32
    %c0_i32_1 = arith.constant 0 : i32
    %c0_i32_2 = arith.constant 0 : i32
    %c0_i32_3 = arith.constant 0 : i32
    return %c0_i32, %c0_i32_0, %c0_i32_1, %c0_i32_2 : i32, i32, i32, i32
  }
  func.func @transform_2(%arg0: i32) -> (i32, i32, i32, i32) {
    %c0_i32 = arith.constant 0 : i32
    %c0_i32_0 = arith.constant 0 : i32
    %c0_i32_1 = arith.constant 0 : i32
    %c0_i32_2 = arith.constant 0 : i32
    return %arg0, %c0_i32, %c0_i32_0, %c0_i32_1 : i32, i32, i32, i32
  }
}

module attributes {stable_mosaic.version = 11 : i64} {
  func.func @_maxpool_kernel(%arg0: i32, %arg1: memref<1x6x6x16xbf16, #tpu.memory_space<vmem>>, %arg2: memref<1x4x4x16xbf16, #tpu.memory_space<vmem>>) attributes {dimension_semantics = [#tpu.dimension_semantics<parallel>], iteration_bounds = array<i64: 2>, scalar_prefetch = 0 : i64, scratch_operands = 0 : i64, tpu.core_type = #tpu.core_type<tc>, window_params = [{transform_indices = @transform_0, window_bounds = array<i64: 1, 6, 6, 16>}, {transform_indices = @transform_1, window_bounds = array<i64: 1, 4, 4, 16>}]} {
    %c0 = arith.constant 0 : index
    %c0_0 = arith.constant 0 : index
    %c0_1 = arith.constant 0 : index
    %c0_2 = arith.constant 0 : index
    %0 = vector.load %arg1[%c0, %c0_0, %c0_1, %c0_2] : memref<1x6x6x16xbf16, #tpu.memory_space<vmem>>, vector<1x6x6x16xbf16>
    %1 = arith.extf %0 : vector<1x6x6x16xbf16> to vector<1x6x6x16xf32>
    %2 = vector.extract_strided_slice %1 {offsets = [0, 0, 0, 0], sizes = [1, 4, 4, 16], strides = [1, 1, 1, 1]} : vector<1x6x6x16xf32> to vector<1x4x4x16xf32>
    %3 = vector.extract_strided_slice %1 {offsets = [0, 0, 1, 0], sizes = [1, 4, 4, 16], strides = [1, 1, 1, 1]} : vector<1x6x6x16xf32> to vector<1x4x4x16xf32>
    %4 = arith.maximumf %2, %3 : vector<1x4x4x16xf32>
    %5 = vector.extract_strided_slice %1 {offsets = [0, 0, 2, 0], sizes = [1, 4, 4, 16], strides = [1, 1, 1, 1]} : vector<1x6x6x16xf32> to vector<1x4x4x16xf32>
    %6 = arith.maximumf %4, %5 : vector<1x4x4x16xf32>
    %7 = vector.extract_strided_slice %1 {offsets = [0, 1, 0, 0], sizes = [1, 4, 4, 16], strides = [1, 1, 1, 1]} : vector<1x6x6x16xf32> to vector<1x4x4x16xf32>
    %8 = arith.maximumf %6, %7 : vector<1x4x4x16xf32>
    %9 = vector.extract_strided_slice %1 {offsets = [0, 1, 1, 0], sizes = [1, 4, 4, 16], strides = [1, 1, 1, 1]} : vector<1x6x6x16xf32> to vector<1x4x4x16xf32>
    %10 = arith.maximumf %8, %9 : vector<1x4x4x16xf32>
    %11 = vector.extract_strided_slice %1 {offsets = [0, 1, 2, 0], sizes = [1, 4, 4, 16], strides = [1, 1, 1, 1]} : vector<1x6x6x16xf32> to vector<1x4x4x16xf32>
    %12 = arith.maximumf %10, %11 : vector<1x4x4x16xf32>
    %13 = vector.extract_strided_slice %1 {offsets = [0, 2, 0, 0], sizes = [1, 4, 4, 16], strides = [1, 1, 1, 1]} : vector<1x6x6x16xf32> to vector<1x4x4x16xf32>
    %14 = arith.maximumf %12, %13 : vector<1x4x4x16xf32>
    %15 = vector.extract_strided_slice %1 {offsets = [0, 2, 1, 0], sizes = [1, 4, 4, 16], strides = [1, 1, 1, 1]} : vector<1x6x6x16xf32> to vector<1x4x4x16xf32>
    %16 = arith.maximumf %14, %15 : vector<1x4x4x16xf32>
    %17 = vector.extract_strided_slice %1 {offsets = [0, 2, 2, 0], sizes = [1, 4, 4, 16], strides = [1, 1, 1, 1]} : vector<1x6x6x16xf32> to vector<1x4x4x16xf32>
    %18 = arith.maximumf %16, %17 : vector<1x4x4x16xf32>
    %19 = arith.truncf %18 : vector<1x4x4x16xf32> to vector<1x4x4x16xbf16>
    %c0_3 = arith.constant 0 : index
    %c0_4 = arith.constant 0 : index
    %c0_5 = arith.constant 0 : index
    %c0_6 = arith.constant 0 : index
    %20 = vector.load %arg2[%c0_3, %c0_4, %c0_5, %c0_6] : memref<1x4x4x16xbf16, #tpu.memory_space<vmem>>, vector<1x4x4x16xbf16>
    tpu.vector_store %arg2[%c0_3, %c0_4, %c0_5, %c0_6], %19 {strides = array<i32>} : memref<1x4x4x16xbf16, #tpu.memory_space<vmem>>, vector<1x4x4x16xbf16>,
    return
  }
  func.func @transform_0(%arg0: i32) -> (i32, i32, i32, i32) {
    %c0_i32 = arith.constant 0 : i32
    %c0_i32_0 = arith.constant 0 : i32
    %c0_i32_1 = arith.constant 0 : i32
    %c0_i32_2 = arith.constant 0 : i32
    return %arg0, %c0_i32, %c0_i32_0, %c0_i32_1 : i32, i32, i32, i32
  }
  func.func @transform_1(%arg0: i32) -> (i32, i32, i32, i32) {
    %c0_i32 = arith.constant 0 : i32
    %c0_i32_0 = arith.constant 0 : i32
    %c0_i32_1 = arith.constant 0 : i32
    %c0_i32_2 = arith.constant 0 : i32
    return %arg0, %c0_i32, %c0_i32_0, %c0_i32_1 : i32, i32, i32, i32
  }
}

module attributes {stable_mosaic.version = 11 : i64} {
  func.func @_mm_kernel(%arg0: i32, %arg1: memref<32x8xbf16, #tpu.memory_space<vmem>>, %arg2: memref<8x16xbf16, #tpu.memory_space<vmem>>, %arg3: memref<2x16xf32, #tpu.memory_space<vmem>>, %arg4: memref<32x16xbf16, #tpu.memory_space<vmem>>) attributes {dimension_semantics = [#tpu.dimension_semantics<parallel>], iteration_bounds = array<i64: 1>, scalar_prefetch = 0 : i64, scratch_operands = 0 : i64, tpu.core_type = #tpu.core_type<tc>, window_params = [{transform_indices = @transform_0, window_bounds = array<i64: 32, 8>}, {pipeline_mode = #tpu.pipeline_mode<synchronous>, transform_indices = @transform_1, window_bounds = array<i64: 8, 16>}, {pipeline_mode = #tpu.pipeline_mode<synchronous>, transform_indices = @transform_2, window_bounds = array<i64: 2, 16>}, {transform_indices = @transform_3, window_bounds = array<i64: 32, 16>}]} {
    %c0 = arith.constant 0 : index
    %c0_0 = arith.constant 0 : index
    %0 = vector.load %arg1[%c0, %c0_0] : memref<32x8xbf16, #tpu.memory_space<vmem>>, vector<32x8xbf16>
    %cst = arith.constant 0.000000e+00 : bf16
    %1 = vector.broadcast %cst : bf16 to vector<32x8xbf16>
    %2 = arith.maximumf %0, %1 : vector<32x8xbf16>
    %c0_1 = arith.constant 0 : index
    %c0_2 = arith.constant 0 : index
    %3 = vector.load %arg2[%c0_1, %c0_2] : memref<8x16xbf16, #tpu.memory_space<vmem>>, vector<8x16xbf16>
    %cst_3 = arith.constant dense<0.000000e+00> : vector<32x16xf32>
    %4 = tpu.matmul %2, %3, %cst_3 {dimension_numbers = #tpu.dot_dimension_numbers<[1], [0], [0], [1], [0, 0, 1, 1], [], []>} : vector<32x8xbf16>, vector<8x16xbf16>, vector<32x16xf32> -> vector<32x16xf32>
    %c0_4 = arith.constant 0 : index
    %c0_5 = arith.constant 0 : index
    %5 = vector.load %arg3[%c0_4, %c0_5] : memref<2x16xf32, #tpu.memory_space<vmem>>, vector<1x16xf32>
    %6 = vector.broadcast %5 : vector<1x16xf32> to vector<32x16xf32>
    %7 = arith.mulf %4, %6 : vector<32x16xf32>
    %c1 = arith.constant 1 : index
    %c0_6 = arith.constant 0 : index
    %8 = vector.load %arg3[%c1, %c0_6] : memref<2x16xf32, #tpu.memory_space<vmem>>, vector<1x16xf32>
    %9 = vector.broadcast %8 : vector<1x16xf32> to vector<32x16xf32>
    %10 = arith.addf %7, %9 : vector<32x16xf32>
    %11 = arith.truncf %10 : vector<32x16xf32> to vector<32x16xbf16>
    %c0_7 = arith.constant 0 : index
    %c0_8 = arith.constant 0 : index
    %12 = vector.load %arg4[%c0_7, %c0_8] : memref<32x16xbf16, #tpu.memory_space<vmem>>, vector<32x16xbf16>
    tpu.vector_store %arg4[%c0_7, %c0_8], %11 {strides = array<i32>} : memref<32x16xbf16, #tpu.memory_space<vmem>>, vector<32x16xbf16>,
    return
  }
  func.func @transform_0(%arg0: i32) -> (i32, i32) {
    %c0_i32 = arith.constant 0 : i32
    %c0_i32_0 = arith.constant 0 : i32
    return %arg0, %c0_i32 : i32, i32
  }
  func.func @transform_1(%arg0: i32) -> (i32, i32) {
    %c0_i32 = arith.constant 0 : i32
    %c0_i32_0 = arith.constant 0 : i32
    %c0_i32_1 = arith.constant 0 : i32
    return %c0_i32, %c0_i32_0 : i32, i32
  }
  func.func @transform_2(%arg0: i32) -> (i32, i32) {
    %c0_i32 = arith.constant 0 : i32
    %c0_i32_0 = arith.constant 0 : i32
    %c0_i32_1 = arith.constant 0 : i32
    return %c0_i32, %c0_i32_0 : i32, i32
  }
  func.func @transform_3(%arg0: i32) -> (i32, i32) {
    %c0_i32 = arith.constant 0 : i32
    %c0_i32_0 = arith.constant 0 : i32
    return %arg0, %c0_i32 : i32, i32
  }
}

module attributes {stable_mosaic.version = 11 : i64} {
  func.func @_mm_kernel(%arg0: i32, %arg1: memref<8x32xbf16, #tpu.memory_space<vmem>>, %arg2: memref<32x32xbf16, #tpu.memory_space<vmem>>, %arg3: memref<2x32xf32, #tpu.memory_space<vmem>>, %arg4: memref<8x32xbf16, #tpu.memory_space<vmem>>) attributes {dimension_semantics = [#tpu.dimension_semantics<parallel>], iteration_bounds = array<i64: 1>, scalar_prefetch = 0 : i64, scratch_operands = 0 : i64, tpu.core_type = #tpu.core_type<tc>, window_params = [{transform_indices = @transform_0, window_bounds = array<i64: 8, 32>}, {pipeline_mode = #tpu.pipeline_mode<synchronous>, transform_indices = @transform_1, window_bounds = array<i64: 32, 32>}, {pipeline_mode = #tpu.pipeline_mode<synchronous>, transform_indices = @transform_2, window_bounds = array<i64: 2, 32>}, {transform_indices = @transform_3, window_bounds = array<i64: 8, 32>}]} {
    %c0 = arith.constant 0 : index
    %c0_0 = arith.constant 0 : index
    %0 = vector.load %arg1[%c0, %c0_0] : memref<8x32xbf16, #tpu.memory_space<vmem>>, vector<8x32xbf16>
    %cst = arith.constant 0.000000e+00 : bf16
    %1 = vector.broadcast %cst : bf16 to vector<8x32xbf16>
    %2 = arith.maximumf %0, %1 : vector<8x32xbf16>
    %c0_1 = arith.constant 0 : index
    %c0_2 = arith.constant 0 : index
    %3 = vector.load %arg2[%c0_1, %c0_2] : memref<32x32xbf16, #tpu.memory_space<vmem>>, vector<32x32xbf16>
    %cst_3 = arith.constant dense<0.000000e+00> : vector<8x32xf32>
    %4 = tpu.matmul %2, %3, %cst_3 {dimension_numbers = #tpu.dot_dimension_numbers<[1], [0], [0], [1], [0, 0, 1, 1], [], []>} : vector<8x32xbf16>, vector<32x32xbf16>, vector<8x32xf32> -> vector<8x32xf32>
    %c0_4 = arith.constant 0 : index
    %c0_5 = arith.constant 0 : index
    %5 = vector.load %arg3[%c0_4, %c0_5] : memref<2x32xf32, #tpu.memory_space<vmem>>, vector<1x32xf32>
    %6 = vector.broadcast %5 : vector<1x32xf32> to vector<8x32xf32>
    %7 = arith.mulf %4, %6 : vector<8x32xf32>
    %c1 = arith.constant 1 : index
    %c0_6 = arith.constant 0 : index
    %8 = vector.load %arg3[%c1, %c0_6] : memref<2x32xf32, #tpu.memory_space<vmem>>, vector<1x32xf32>
    %9 = vector.broadcast %8 : vector<1x32xf32> to vector<8x32xf32>
    %10 = arith.addf %7, %9 : vector<8x32xf32>
    %11 = arith.truncf %10 : vector<8x32xf32> to vector<8x32xbf16>
    %c0_7 = arith.constant 0 : index
    %c0_8 = arith.constant 0 : index
    %12 = vector.load %arg4[%c0_7, %c0_8] : memref<8x32xbf16, #tpu.memory_space<vmem>>, vector<8x32xbf16>
    tpu.vector_store %arg4[%c0_7, %c0_8], %11 {strides = array<i32>} : memref<8x32xbf16, #tpu.memory_space<vmem>>, vector<8x32xbf16>,
    return
  }
  func.func @transform_0(%arg0: i32) -> (i32, i32) {
    %c0_i32 = arith.constant 0 : i32
    %c0_i32_0 = arith.constant 0 : i32
    return %arg0, %c0_i32 : i32, i32
  }
  func.func @transform_1(%arg0: i32) -> (i32, i32) {
    %c0_i32 = arith.constant 0 : i32
    %c0_i32_0 = arith.constant 0 : i32
    %c0_i32_1 = arith.constant 0 : i32
    return %c0_i32, %c0_i32_0 : i32, i32
  }
  func.func @transform_2(%arg0: i32) -> (i32, i32) {
    %c0_i32 = arith.constant 0 : i32
    %c0_i32_0 = arith.constant 0 : i32
    %c0_i32_1 = arith.constant 0 : i32
    return %c0_i32, %c0_i32_0 : i32, i32
  }
  func.func @transform_3(%arg0: i32) -> (i32, i32) {
    %c0_i32 = arith.constant 0 : i32
    %c0_i32_0 = arith.constant 0 : i32
    return %arg0, %c0_i32 : i32, i32
  }
}

module attributes {stable_mosaic.version = 11 : i64} {
  func.func @_avgpool_kernel(%arg0: i32, %arg1: memref<1x4x4x32xbf16, #tpu.memory_space<vmem>>, %arg2: memref<1x2x2x1xf32, #tpu.memory_space<vmem>>, %arg3: memref<1x2x2x32xbf16, #tpu.memory_space<vmem>>) attributes {dimension_semantics = [#tpu.dimension_semantics<parallel>], iteration_bounds = array<i64: 2>, scalar_prefetch = 0 : i64, scratch_operands = 0 : i64, tpu.core_type = #tpu.core_type<tc>, window_params = [{transform_indices = @transform_0, window_bounds = array<i64: 1, 4, 4, 32>}, {pipeline_mode = #tpu.pipeline_mode<synchronous>, transform_indices = @transform_1, window_bounds = array<i64: 1, 2, 2, 1>}, {transform_indices = @transform_2, window_bounds = array<i64: 1, 2, 2, 32>}]} {
    %c0 = arith.constant 0 : index
    %c0_0 = arith.constant 0 : index
    %c0_1 = arith.constant 0 : index
    %c0_2 = arith.constant 0 : index
    %0 = vector.load %arg1[%c0, %c0_0, %c0_1, %c0_2] : memref<1x4x4x32xbf16, #tpu.memory_space<vmem>>, vector<1x4x4x32xbf16>
    %1 = arith.extf %0 : vector<1x4x4x32xbf16> to vector<1x4x4x32xf32>
    %2 = vector.extract_strided_slice %1 {offsets = [0, 0, 0, 0], sizes = [1, 2, 2, 32], strides = [1, 1, 1, 1]} : vector<1x4x4x32xf32> to vector<1x2x2x32xf32>
    %3 = vector.extract_strided_slice %1 {offsets = [0, 0, 1, 0], sizes = [1, 2, 2, 32], strides = [1, 1, 1, 1]} : vector<1x4x4x32xf32> to vector<1x2x2x32xf32>
    %4 = arith.addf %2, %3 : vector<1x2x2x32xf32>
    %5 = vector.extract_strided_slice %1 {offsets = [0, 0, 2, 0], sizes = [1, 2, 2, 32], strides = [1, 1, 1, 1]} : vector<1x4x4x32xf32> to vector<1x2x2x32xf32>
    %6 = arith.addf %4, %5 : vector<1x2x2x32xf32>
    %7 = vector.extract_strided_slice %1 {offsets = [0, 1, 0, 0], sizes = [1, 2, 2, 32], strides = [1, 1, 1, 1]} : vector<1x4x4x32xf32> to vector<1x2x2x32xf32>
    %8 = arith.addf %6, %7 : vector<1x2x2x32xf32>
    %9 = vector.extract_strided_slice %1 {offsets = [0, 1, 1, 0], sizes = [1, 2, 2, 32], strides = [1, 1, 1, 1]} : vector<1x4x4x32xf32> to vector<1x2x2x32xf32>
    %10 = arith.addf %8, %9 : vector<1x2x2x32xf32>
    %11 = vector.extract_strided_slice %1 {offsets = [0, 1, 2, 0], sizes = [1, 2, 2, 32], strides = [1, 1, 1, 1]} : vector<1x4x4x32xf32> to vector<1x2x2x32xf32>
    %12 = arith.addf %10, %11 : vector<1x2x2x32xf32>
    %13 = vector.extract_strided_slice %1 {offsets = [0, 2, 0, 0], sizes = [1, 2, 2, 32], strides = [1, 1, 1, 1]} : vector<1x4x4x32xf32> to vector<1x2x2x32xf32>
    %14 = arith.addf %12, %13 : vector<1x2x2x32xf32>
    %15 = vector.extract_strided_slice %1 {offsets = [0, 2, 1, 0], sizes = [1, 2, 2, 32], strides = [1, 1, 1, 1]} : vector<1x4x4x32xf32> to vector<1x2x2x32xf32>
    %16 = arith.addf %14, %15 : vector<1x2x2x32xf32>
    %17 = vector.extract_strided_slice %1 {offsets = [0, 2, 2, 0], sizes = [1, 2, 2, 32], strides = [1, 1, 1, 1]} : vector<1x4x4x32xf32> to vector<1x2x2x32xf32>
    %18 = arith.addf %16, %17 : vector<1x2x2x32xf32>
    %c0_3 = arith.constant 0 : index
    %c0_4 = arith.constant 0 : index
    %c0_5 = arith.constant 0 : index
    %c0_6 = arith.constant 0 : index
    %19 = vector.load %arg2[%c0_3, %c0_4, %c0_5, %c0_6] : memref<1x2x2x1xf32, #tpu.memory_space<vmem>>, vector<1x2x2x1xf32>
    %20 = vector.broadcast %19 : vector<1x2x2x1xf32> to vector<1x2x2x32xf32>
    %21 = arith.mulf %18, %20 : vector<1x2x2x32xf32>
    %22 = arith.truncf %21 : vector<1x2x2x32xf32> to vector<1x2x2x32xbf16>
    %c0_7 = arith.constant 0 : index
    %c0_8 = arith.constant 0 : index
    %c0_9 = arith.constant 0 : index
    %c0_10 = arith.constant 0 : index
    %23 = vector.load %arg3[%c0_7, %c0_8, %c0_9, %c0_10] : memref<1x2x2x32xbf16, #tpu.memory_space<vmem>>, vector<1x2x2x32xbf16>
    tpu.vector_store %arg3[%c0_7, %c0_8, %c0_9, %c0_10], %22 {strides = array<i32>} : memref<1x2x2x32xbf16, #tpu.memory_space<vmem>>, vector<1x2x2x32xbf16>,
    return
  }
  func.func @transform_0(%arg0: i32) -> (i32, i32, i32, i32) {
    %c0_i32 = arith.constant 0 : i32
    %c0_i32_0 = arith.constant 0 : i32
    %c0_i32_1 = arith.constant 0 : i32
    %c0_i32_2 = arith.constant 0 : i32
    return %arg0, %c0_i32, %c0_i32_0, %c0_i32_1 : i32, i32, i32, i32
  }
  func.func @transform_1(%arg0: i32) -> (i32, i32, i32, i32) {
    %c0_i32 = arith.constant 0 : i32
    %c0_i32_0 = arith.constant 0 : i32
    %c0_i32_1 = arith.constant 0 : i32
    %c0_i32_2 = arith.constant 0 : i32
    %c0_i32_3 = arith.constant 0 : i32
    return %c0_i32, %c0_i32_0, %c0_i32_1, %c0_i32_2 : i32, i32, i32, i32
  }
  func.func @transform_2(%arg0: i32) -> (i32, i32, i32, i32) {
    %c0_i32 = arith.constant 0 : i32
    %c0_i32_0 = arith.constant 0 : i32
    %c0_i32_1 = arith.constant 0 : i32
    %c0_i32_2 = arith.constant 0 : i32
    return %arg0, %c0_i32, %c0_i32_0, %c0_i32_1 : i32, i32, i32, i32
  }
}

module attributes {stable_mosaic.version = 11 : i64} {
  func.func @_mm_kernel(%arg0: i32, %arg1: memref<2x64xbf16, #tpu.memory_space<vmem>>, %arg2: memref<64x10xbf16, #tpu.memory_space<vmem>>, %arg3: memref<2x10xbf16, #tpu.memory_space<vmem>>) attributes {dimension_semantics = [#tpu.dimension_semantics<parallel>], iteration_bounds = array<i64: 1>, scalar_prefetch = 0 : i64, scratch_operands = 0 : i64, tpu.core_type = #tpu.core_type<tc>, window_params = [{transform_indices = @transform_0, window_bounds = array<i64: 2, 64>}, {pipeline_mode = #tpu.pipeline_mode<synchronous>, transform_indices = @transform_1, window_bounds = array<i64: 64, 10>}, {transform_indices = @transform_2, window_bounds = array<i64: 2, 10>}]} {
    %c0 = arith.constant 0 : index
    %c0_0 = arith.constant 0 : index
    %0 = vector.load %arg1[%c0, %c0_0] : memref<2x64xbf16, #tpu.memory_space<vmem>>, vector<2x64xbf16>
    %c0_1 = arith.constant 0 : index
    %c0_2 = arith.constant 0 : index
    %1 = vector.load %arg2[%c0_1, %c0_2] : memref<64x10xbf16, #tpu.memory_space<vmem>>, vector<64x10xbf16>
    %cst = arith.constant dense<0.000000e+00> : vector<2x10xf32>
    %2 = tpu.matmul %0, %1, %cst {dimension_numbers = #tpu.dot_dimension_numbers<[1], [0], [0], [1], [0, 0, 1, 1], [], []>} : vector<2x64xbf16>, vector<64x10xbf16>, vector<2x10xf32> -> vector<2x10xf32>
    %cst_3 = arith.constant 0.000000e+00 : f32
    %3 = vector.broadcast %cst_3 : f32 to vector<2x10xf32>
    %cst_4 = arith.constant 0.000000e+00 : f32
    %4 = vector.broadcast %cst_4 : f32 to vector<2x10xf32>
    %cst_5 = arith.constant 1.000000e+00 : f32
    %5 = vector.broadcast %cst_5 : f32 to vector<2x10xf32>
    %6 = arith.cmpf ogt, %3, %5 : vector<2x10xf32>
    %7 = arith.extui %6 : vector<2x10xi1> to vector<2x10xi32>
    %8 = arith.sitofp %7 : vector<2x10xi32> to vector<2x10xf32>
    %cst_6 = arith.constant 0.949999988 : f32
    %9 = vector.broadcast %cst_6 : f32 to vector<2x10xf32>
    %10 = arith.mulf %9, %3 : vector<2x10xf32>
    %11 = arith.addf %10, %2 : vector<2x10xf32>
    %cst_7 = arith.constant 1.000000e+00 : f32
    %12 = vector.broadcast %cst_7 : f32 to vector<2x10xf32>
    %13 = arith.mulf %8, %12 : vector<2x10xf32>
    %14 = arith.subf %11, %13 : vector<2x10xf32>
    %cst_8 = arith.constant 1.000000e+00 : f32
    %15 = vector.broadcast %cst_8 : f32 to vector<2x10xf32>
    %16 = arith.cmpf ogt, %14, %15 : vector<2x10xf32>
    %17 = arith.extui %16 : vector<2x10xi1> to vector<2x10xi32>
    %18 = arith.sitofp %17 : vector<2x10xi32> to vector<2x10xf32>
    %19 = arith.addf %4, %18 : vector<2x10xf32>
    %cst_9 = arith.constant 1.000000e+00 : f32
    %20 = vector.broadcast %cst_9 : f32 to vector<2x10xf32>
    %21 = arith.divf %19, %20 : vector<2x10xf32>
    %22 = arith.truncf %21 : vector<2x10xf32> to vector<2x10xbf16>
    %c0_10 = arith.constant 0 : index
    %c0_11 = arith.constant 0 : index
    %23 = vector.load %arg3[%c0_10, %c0_11] : memref<2x10xbf16, #tpu.memory_space<vmem>>, vector<2x10xbf16>
    tpu.vector_store %arg3[%c0_10, %c0_11], %22 {strides = array<i32>} : memref<2x10xbf16, #tpu.memory_space<vmem>>, vector<2x10xbf16>,
    return
  }
  func.func @transform_0(%arg0: i32) -> (i32, i32) {
    %c0_i32 = arith.constant 0 : i32
    %c0_i32_0 = arith.constant 0 : i32
    return %arg0, %c0_i32 : i32, i32
  }
  func.func @transform_1(%arg0: i32) -> (i32, i32) {
    %c0_i32 = arith.constant 0 : i32
    %c0_i32_0 = arith.constant 0 : i32
    %c0_i32_1 = arith.constant 0 : i32
    return %c0_i32, %c0_i32_0 : i32, i32
  }
  func.func @transform_2(%arg0: i32) -> (i32, i32) {
    %c0_i32 = arith.constant 0 : i32
    %c0_i32_0 = arith.constant 0 : i32
    return %arg0, %c0_i32 : i32, i32
  }
}

module attributes {stable_mosaic.version = 11 : i64} {
  func.func @_mm_kernel(%arg0: i32, %arg1: memref<16x1xbf16, #tpu.memory_space<vmem>>, %arg2: memref<1x20xbf16, #tpu.memory_space<vmem>>, %arg3: memref<16x20xbf16, #tpu.memory_space<vmem>>) attributes {dimension_semantics = [#tpu.dimension_semantics<parallel>], iteration_bounds = array<i64: 1>, scalar_prefetch = 0 : i64, scratch_operands = 0 : i64, tpu.core_type = #tpu.core_type<tc>, window_params = [{transform_indices = @transform_0, window_bounds = array<i64: 16, 1>}, {pipeline_mode = #tpu.pipeline_mode<synchronous>, transform_indices = @transform_1, window_bounds = array<i64: 1, 20>}, {transform_indices = @transform_2, window_bounds = array<i64: 16, 20>}]} {
    %c0 = arith.constant 0 : index
    %c0_0 = arith.constant 0 : index
    %0 = vector.load %arg1[%c0, %c0_0] : memref<16x1xbf16, #tpu.memory_space<vmem>>, vector<16x1xbf16>
    %c0_1 = arith.constant 0 : index
    %c0_2 = arith.constant 0 : index
    %1 = vector.load %arg2[%c0_1, %c0_2] : memref<1x20xbf16, #tpu.memory_space<vmem>>, vector<1x20xbf16>
    %cst = arith.constant dense<0.000000e+00> : vector<16x20xf32>
    %2 = tpu.matmul %0, %1, %cst {dimension_numbers = #tpu.dot_dimension_numbers<[1], [0], [0], [1], [0, 0, 1, 1], [], []>} : vector<16x1xbf16>, vector<1x20xbf16>, vector<16x20xf32> -> vector<16x20xf32>
    %3 = arith.truncf %2 : vector<16x20xf32> to vector<16x20xbf16>
    %c0_3 = arith.constant 0 : index
    %c0_4 = arith.constant 0 : index
    %4 = vector.load %arg3[%c0_3, %c0_4] : memref<16x20xbf16, #tpu.memory_space<vmem>>, vector<16x20xbf16>
    tpu.vector_store %arg3[%c0_3, %c0_4], %3 {strides = array<i32>} : memref<16x20xbf16, #tpu.memory_space<vmem>>, vector<16x20xbf16>,
    return
  }
  func.func @transform_0(%arg0: i32) -> (i32, i32) {
    %c0_i32 = arith.constant 0 : i32
    %c0_i32_0 = arith.constant 0 : i32
    return %arg0, %c0_i32 : i32, i32
  }
  func.func @transform_1(%arg0: i32) -> (i32, i32) {
    %c0_i32 = arith.constant 0 : i32
    %c0_i32_0 = arith.constant 0 : i32
    %c0_i32_1 = arith.constant 0 : i32
    return %c0_i32, %c0_i32_0 : i32, i32
  }
  func.func @transform_2(%arg0: i32) -> (i32, i32) {
    %c0_i32 = arith.constant 0 : i32
    %c0_i32_0 = arith.constant 0 : i32
    return %arg0, %c0_i32 : i32, i32
  }
}

</mosaic_0001>

<llo_original>
// kernel: _lambda_.21
$region0: #{_lambda_.21}
  #allocation0 [shape = 'u32[]', space=smem, size = 0x4, offset = 0x4, fixed_abs, tag = 'smem constant byte address 0x4 - core index']
  #allocation1 [shape = 'u32[144,128]{1,0:T(1,128)}', space=vmem, size = 0x12000, scoped, tag = 'internal scratch']
  %s0 = inlined_call_operand.vmem [shape: bf16[512,27], index: 0, kind: input, shape index: {}]
  %s1 = inlined_call_operand.vmem [shape: bf16[27,4], index: 1, kind: input, shape index: {}]
  %s2 = inlined_call_operand.vmem [shape: f32[2,4], index: 2, kind: input, shape index: {}]
  %s3 = inlined_call_operand.vmem [shape: bf16[512,4], index: 3, kind: output, shape index: {}]
  %s4 = sld [smem:[#allocation0]]
  $region22: #{_lambda_.21} parent=0
    _
  %s6 = ssub.s32 1, %s4
  %s7 = scalar_select 0, %s6, %s4
  // Predicated region
  $region2: #{_lambda_.21} parent=0 // pred_check
    _
  $region3: #{_lambda_.21} parent=0 // pred_check_branch
    %9 = sbr.rel (0) target = $region5
  $region4: #{_lambda_.21} parent=0 // pred_region
    _
  $region5: #{_lambda_.21} parent=0 // pred_fallthru
    _
  // Predicated region
  $region6: #{_lambda_.21} parent=0 // pred_check
    _
  $region7: #{_lambda_.21} parent=0 // pred_check_branch
    %11 = sbr.rel (0) target = $region9
  $region8: #{_lambda_.21} parent=0 // pred_region
    _
  $region9: #{_lambda_.21} parent=0 // pred_fallthru
    _
  // Predicated region
  $region10: #{_lambda_.21} parent=0 // pred_check
    _
  $region11: #{_lambda_.21} parent=0 // pred_check_branch
    %13 = sbr.rel (0) target = $region13
  $region12: #{_lambda_.21} parent=0 // pred_region
    _
  $region13: #{_lambda_.21} parent=0 // pred_fallthru
    _
  %v15 = vld [vmem:[%s0] sm:$0xf]
  %v16 = vld [vmem:[%s0 + $0x4] sm:$0xf]
  %v17 = vld [vmem:[%s0 + $0x8] sm:$0xf]
  %v18 = vld [vmem:[%s0 + $0xc] sm:$0xf]
  %v19 = vld [vmem:[%s0 + $0x10] sm:$0xf]
  %v20 = vld [vmem:[%s0 + $0x14] sm:$0xf]
  %v21 = vld [vmem:[%s0 + $0x18] sm:$0xf]
  %v22 = vld [vmem:[%s0 + $0x1c] sm:$0xf]
  %v23 = vld [vmem:[%s0 + $0x20] sm:$0xf]
  %v24 = vld [vmem:[%s0 + $0x24] sm:$0xf]
  %v25 = vld [vmem:[%s0 + $0x28] sm:$0xf]
  %v26 = vld [vmem:[%s0 + $0x2c] sm:$0xf]
  %v27 = vld [vmem:[%s0 + $0x30] sm:$0xf]
  %v28 = vld [vmem:[%s0 + $0x34] sm:$0xf]
  %v29 = vld [vmem:[%s0 + $0x38] sm:$0xf]
  %v30 = vld [vmem:[%s0 + $0x3c] sm:$0xf]
  %v31 = vld [vmem:[%s0 + $0x40] sm:$0xf]
  %v32 = vld [vmem:[%s0 + $0x44] sm:$0xf]
  %v33 = vld [vmem:[%s0 + $0x48] sm:$0xf]
  %v34 = vld [vmem:[%s0 + $0x4c] sm:$0xf]
  %v35 = vld [vmem:[%s0 + $0x50] sm:$0xf]
  %v36 = vld [vmem:[%s0 + $0x54] sm:$0xf]
  %v37 = vld [vmem:[%s0 + $0x58] sm:$0xf]
  %v38 = vld [vmem:[%s0 + $0x5c] sm:$0xf]
  %v39 = vld [vmem:[%s0 + $0x60] sm:$0xf]
  %v40 = vld [vmem:[%s0 + $0x64] sm:$0xf]
  %v41 = vld [vmem:[%s0 + $0x68] sm:$0xf]
  %v42 = vld [vmem:[%s0 + $0x6c] sm:$0xf]
  %v43 = vld [vmem:[%s0 + $0x70] sm:$0xf]
  %v44 = vld [vmem:[%s0 + $0x74] sm:$0xf]
  %v45 = vld [vmem:[%s0 + $0x78] sm:$0xf]
  %v46 = vld [vmem:[%s0 + $0x7c] sm:$0xf]
  %v47 = vld [vmem:[%s0 + $0x80] sm:$0xf]
  %v48 = vld [vmem:[%s0 + $0x84] sm:$0xf]
  %v49 = vld [vmem:[%s0 + $0x88] sm:$0xf]
  %v50 = vld [vmem:[%s0 + $0x8c] sm:$0xf]
  %v51 = vld [vmem:[%s0 + $0x90] sm:$0xf]
  %v52 = vld [vmem:[%s0 + $0x94] sm:$0xf]
  %v53 = vld [vmem:[%s0 + $0x98] sm:$0xf]
  %v54 = vld [vmem:[%s0 + $0x9c] sm:$0xf]
  %v55 = vld [vmem:[%s0 + $0xa0] sm:$0xf]
  %v56 = vld [vmem:[%s0 + $0xa4] sm:$0xf]
  %v57 = vld [vmem:[%s0 + $0xa8] sm:$0xf]
  %v58 = vld [vmem:[%s0 + $0xac] sm:$0xf]
  %v59 = vld [vmem:[%s0 + $0xb0] sm:$0xf]
  %v60 = vld [vmem:[%s0 + $0xb4] sm:$0xf]
  %v61 = vld [vmem:[%s0 + $0xb8] sm:$0xf]
  %v62 = vld [vmem:[%s0 + $0xbc] sm:$0xf]
  %v63 = vld [vmem:[%s0 + $0xc0] sm:$0xf]
  %v64 = vld [vmem:[%s0 + $0xc4] sm:$0xf]
  %v65 = vld [vmem:[%s0 + $0xc8] sm:$0xf]
  %v66 = vld [vmem:[%s0 + $0xcc] sm:$0xf]
  %v67 = vld [vmem:[%s0 + $0xd0] sm:$0xf]
  %v68 = vld [vmem:[%s0 + $0xd4] sm:$0xf]
  %v69 = vld [vmem:[%s0 + $0xd8] sm:$0xf]
  %v70 = vld [vmem:[%s0 + $0xdc] sm:$0xf]
  %v71 = vld [vmem:[%s0 + $0xe0] sm:$0xf]
  %v72 = vld [vmem:[%s0 + $0xe4] sm:$0xf]
  %v73 = vld [vmem:[%s0 + $0xe8] sm:$0xf]
  %v74 = vld [vmem:[%s0 + $0xec] sm:$0xf]
  %v75 = vld [vmem:[%s0 + $0xf0] sm:$0xf]
  %v76 = vld [vmem:[%s0 + $0xf4] sm:$0xf]
  %v77 = vld [vmem:[%s0 + $0xf8] sm:$0xf]
  %v78 = vld [vmem:[%s0 + $0xfc] sm:$0xf]
  %v79 = vld [vmem:[%s1] sm:$0xf]
  %v80 = vld [vmem:[%s1 + $0x4] sm:$0xf]
  %v81 = vld [vmem:[%s1 + $0x8] sm:$0xf]
  %v82 = vld [vmem:[%s1 + $0xc] sm:$0x3]
  %v147 = vunpack.c.l.b16 %v15
  %v148 = vunpack.c.l.b16 %v16
  %v149 = vunpack.c.l.b16 %v17
  %v150 = vunpack.c.l.b16 %v18
  %v151 = vunpack.c.l.b16 %v19
  %v152 = vunpack.c.l.b16 %v20
  %v153 = vunpack.c.l.b16 %v21
  %v154 = vunpack.c.l.b16 %v22
  %v155 = vunpack.c.l.b16 %v23
  %v156 = vunpack.c.l.b16 %v24
  %v157 = vunpack.c.l.b16 %v25
  %v158 = vunpack.c.l.b16 %v26
  %v159 = vunpack.c.l.b16 %v27
  %v160 = vunpack.c.l.b16 %v28
  %v161 = vunpack.c.l.b16 %v29
  %v162 = vunpack.c.l.b16 %v30
  %v163 = vunpack.c.l.b16 %v31
  %v164 = vunpack.c.l.b16 %v32
  %v165 = vunpack.c.l.b16 %v33
  %v166 = vunpack.c.l.b16 %v34
  %v167 = vunpack.c.l.b16 %v35
  %v168 = vunpack.c.l.b16 %v36
  %v169 = vunpack.c.l.b16 %v37
  %v170 = vunpack.c.l.b16 %v38
  %v171 = vunpack.c.l.b16 %v39
  %v172 = vunpack.c.l.b16 %v40
  %v173 = vunpack.c.l.b16 %v41
  %v174 = vunpack.c.l.b16 %v42
  %v175 = vunpack.c.l.b16 %v43
  %v176 = vunpack.c.l.b16 %v44
  %v177 = vunpack.c.l.b16 %v45
  %v178 = vunpack.c.l.b16 %v46
  %v179 = vunpack.c.l.b16 %v47
  %v180 = vunpack.c.l.b16 %v48
  %v181 = vunpack.c.l.b16 %v49
  %v182 = vunpack.c.l.b16 %v50
  %v183 = vunpack.c.l.b16 %v51
  %v184 = vunpack.c.l.b16 %v52
  %v185 = vunpack.c.l.b16 %v53
  %v186 = vunpack.c.l.b16 %v54
  %v187 = vunpack.c.l.b16 %v55
  %v188 = vunpack.c.l.b16 %v56
  %v189 = vunpack.c.l.b16 %v57
  %v190 = vunpack.c.l.b16 %v58
  %v191 = vunpack.c.l.b16 %v59
  %v192 = vunpack.c.l.b16 %v60
  %v193 = vunpack.c.l.b16 %v61
  %v194 = vunpack.c.l.b16 %v62
  %v195 = vunpack.c.l.b16 %v63
  %v196 = vunpack.c.l.b16 %v64
  %v197 = vunpack.c.l.b16 %v65
  %v198 = vunpack.c.l.b16 %v66
  %v199 = vunpack.c.l.b16 %v67
  %v200 = vunpack.c.l.b16 %v68
  %v201 = vunpack.c.l.b16 %v69
  %v202 = vunpack.c.l.b16 %v70
  %v203 = vunpack.c.l.b16 %v71
  %v204 = vunpack.c.l.b16 %v72
  %v205 = vunpack.c.l.b16 %v73
  %v206 = vunpack.c.l.b16 %v74
  %v207 = vunpack.c.l.b16 %v75
  %v208 = vunpack.c.l.b16 %v76
  %v209 = vunpack.c.l.b16 %v77
  %v210 = vunpack.c.l.b16 %v78
  %v211 = vpack.c.b16 %v148, %v147
  %v212 = vpack.c.b16 %v150, %v149
  %v213 = vpack.c.b16 %v152, %v151
  %v214 = vpack.c.b16 %v154, %v153
  %v215 = vpack.c.b16 %v156, %v155
  %v216 = vpack.c.b16 %v158, %v157
  %v217 = vpack.c.b16 %v160, %v159
  %v218 = vpack.c.b16 %v162, %v161
  %v219 = vpack.c.b16 %v164, %v163
  %v220 = vpack.c.b16 %v166, %v165
  %v221 = vpack.c.b16 %v168, %v167
  %v222 = vpack.c.b16 %v170, %v169
  %v223 = vpack.c.b16 %v172, %v171
  %v224 = vpack.c.b16 %v174, %v173
  %v225 = vpack.c.b16 %v176, %v175
  %v226 = vpack.c.b16 %v178, %v177
  %v227 = vpack.c.b16 %v180, %v179
  %v228 = vpack.c.b16 %v182, %v181
  %v229 = vpack.c.b16 %v184, %v183
  %v230 = vpack.c.b16 %v186, %v185
  %v231 = vpack.c.b16 %v188, %v187
  %v232 = vpack.c.b16 %v190, %v189
  %v233 = vpack.c.b16 %v192, %v191
  %v234 = vpack.c.b16 %v194, %v193
  %v235 = vpack.c.b16 %v196, %v195
  %v236 = vpack.c.b16 %v198, %v197
  %v237 = vpack.c.b16 %v200, %v199
  %v238 = vpack.c.b16 %v202, %v201
  %v239 = vpack.c.b16 %v204, %v203
  %v240 = vpack.c.b16 %v206, %v205
  %v241 = vpack.c.b16 %v208, %v207
  %v242 = vpack.c.b16 %v210, %v209
  %v247 = vunpack.c.l.b16 %v79
  %v248 = vunpack.c.l.b16 %v80
  %v249 = vunpack.c.l.b16 %v81
  %v250 = vunpack.c.l.b16 %v82
  %v251 = vpack.c.b16 %v248, %v247
  %v252 = vpack.c.b16 %v250, %v249
  %vm254 = vcmask 220160
  %v256 = vsel %vm254, %v211, 0
  %v259 = vsel %vm254, %v212, 0
  %v262 = vsel %vm254, %v213, 0
  %v265 = vsel %vm254, %v214, 0
  %v268 = vsel %vm254, %v215, 0
  %v271 = vsel %vm254, %v216, 0
  %v274 = vsel %vm254, %v217, 0
  %v277 = vsel %vm254, %v218, 0
  %v280 = vsel %vm254, %v219, 0
  %v283 = vsel %vm254, %v220, 0
  %v286 = vsel %vm254, %v221, 0
  %v289 = vsel %vm254, %v222, 0
  %v292 = vsel %vm254, %v223, 0
  %v295 = vsel %vm254, %v224, 0
  %v298 = vsel %vm254, %v225, 0
  %v301 = vsel %vm254, %v226, 0
  %v304 = vsel %vm254, %v227, 0
  %v307 = vsel %vm254, %v228, 0
  %v310 = vsel %vm254, %v229, 0
  %v313 = vsel %vm254, %v230, 0
  %v316 = vsel %vm254, %v231, 0
  %v319 = vsel %vm254, %v232, 0
  %v322 = vsel %vm254, %v233, 0
  %v325 = vsel %vm254, %v234, 0
  %v328 = vsel %vm254, %v235, 0
  %v331 = vsel %vm254, %v236, 0
  %v334 = vsel %vm254, %v237, 0
  %v337 = vsel %vm254, %v238, 0
  %v340 = vsel %vm254, %v239, 0
  %v343 = vsel %vm254, %v240, 0
  %v346 = vsel %vm254, %v241, 0
  %v349 = vsel %vm254, %v242, 0
  %vm351 = vcmask 1044480
  %vm352 = vcmask 1045504
  %v353 = vsel %vm351, 4294967295, 65535
  %v354 = vsel %vm352, %v353, 0
  %v356 = vand.u32 %v252, %v354
  %358 = vmatprep.subr.bf16.mxu0 0
  %359 = vmatpush1.bf16.msra.mxu0 %v251
  %360 = vmatprep.subr.bf16.mxu0 0
  %361 = vmatpush1.bf16.msra.mxu0 %v356
  %362 = vmatprep.subr.bf16.mxu0 0
  %363 = vmatpush1.bf16.msra.mxu0 0
  %364 = vmatprep.subr.bf16.mxu0 0
  %365 = vmatpush1.bf16.msra.mxu0 0
  %366 = vmatprep.subr.bf16.mxu0 0
  %367 = vmatpush1.bf16.msra.mxu0 0
  %368 = vmatprep.subr.bf16.mxu0 0
  %369 = vmatpush1.bf16.msra.mxu0 0
  %370 = vmatprep.subr.bf16.mxu0 0
  %371 = vmatpush1.bf16.msra.mxu0 0
  %372 = vmatprep.subr.bf16.mxu0 0
  %373 = vmatpush1.bf16.msra.mxu0 0
  %374 = vmatprep.subr.bf16.mxu0 0
  %375 = vmatpush1.bf16.msra.mxu0 0
  %376 = vmatprep.subr.bf16.mxu0 0
  %377 = vmatpush1.bf16.msra.mxu0 0
  %378 = vmatprep.subr.bf16.mxu0 0
  %379 = vmatpush1.bf16.msra.mxu0 0
  %380 = vmatprep.subr.bf16.mxu0 0
  %381 = vmatpush1.bf16.msra.mxu0 0
  %382 = vmatprep.subr.bf16.mxu0 0
  %383 = vmatpush1.bf16.msra.mxu0 0
  %384 = vmatprep.subr.bf16.mxu0 0
  %385 = vmatpush1.bf16.msra.mxu0 0
  %386 = vmatprep.subr.bf16.mxu0 0
  %387 = vmatpush1.bf16.msra.mxu0 0
  %388 = vmatprep.subr.bf16.mxu0 0
  %389 = vmatpush1.bf16.msra.mxu0 0
  %390 = vmatprep.mubr.bf16.mxu0 0
  %391 = vmatmul.mubr.bf16.gmra.mrb[0].mxu0 %v256
  %v392 = vpop.f32.mrb[0].mxu0
  %v393 = vadd.f32 0.0, %v392
  %v394 = vpop.f32.mrb[0].mxu0
  %v395 = vpop.f32.mrb[0].mxu0
  %v396 = vadd.f32 0.0, %v395
  %v397 = vpop.f32.mrb[0].mxu0
  %398 = vmatprep.mubr.bf16.mxu0 0
  %399 = vmatmul.mubr.bf16.gmra.mrb[0].mxu0 %v259
  %v400 = vpop.f32.mrb[0].mxu0
  %v401 = vadd.f32 0.0, %v400
  %v402 = vpop.f32.mrb[0].mxu0
  %v403 = vpop.f32.mrb[0].mxu0
  %v404 = vadd.f32 0.0, %v403
  %v405 = vpop.f32.mrb[0].mxu0
  %406 = vmatprep.mubr.bf16.mxu0 0
  %407 = vmatmul.mubr.bf16.gmra.mrb[0].mxu0 %v262
  %v408 = vpop.f32.mrb[0].mxu0
  %v409 = vadd.f32 0.0, %v408
  %v410 = vpop.f32.mrb[0].mxu0
  %v411 = vpop.f32.mrb[0].mxu0
  %v412 = vadd.f32 0.0, %v411
  %v413 = vpop.f32.mrb[0].mxu0
  %414 = vmatprep.mubr.bf16.mxu0 0
  %415 = vmatmul.mubr.bf16.gmra.mrb[0].mxu0 %v265
  %v416 = vpop.f32.mrb[0].mxu0
  %v417 = vadd.f32 0.0, %v416
  %v418 = vpop.f32.mrb[0].mxu0
  %v419 = vpop.f32.mrb[0].mxu0
  %v420 = vadd.f32 0.0, %v419
  %v421 = vpop.f32.mrb[0].mxu0
  %422 = vmatprep.mubr.bf16.mxu0 0
  %423 = vmatmul.mubr.bf16.gmra.mrb[0].mxu0 %v268
  %v424 = vpop.f32.mrb[0].mxu0
  %v425 = vadd.f32 0.0, %v424
  %v426 = vpop.f32.mrb[0].mxu0
  %v427 = vpop.f32.mrb[0].mxu0
  %v428 = vadd.f32 0.0, %v427
  %v429 = vpop.f32.mrb[0].mxu0
  %430 = vmatprep.mubr.bf16.mxu0 0
  %431 = vmatmul.mubr.bf16.gmra.mrb[0].mxu0 %v271
  %v432 = vpop.f32.mrb[0].mxu0
  %v433 = vadd.f32 0.0, %v432
  %v434 = vpop.f32.mrb[0].mxu0
  %v435 = vpop.f32.mrb[0].mxu0
  %v436 = vadd.f32 0.0, %v435
  %v437 = vpop.f32.mrb[0].mxu0
  %438 = vmatprep.mubr.bf16.mxu0 0
  %439 = vmatmul.mubr.bf16.gmra.mrb[0].mxu0 %v274
  %v440 = vpop.f32.mrb[0].mxu0
  %v441 = vadd.f32 0.0, %v440
  %v442 = vpop.f32.mrb[0].mxu0
  %v443 = vpop.f32.mrb[0].mxu0
  %v444 = vadd.f32 0.0, %v443
  %v445 = vpop.f32.mrb[0].mxu0
  %446 = vmatprep.mubr.bf16.mxu0 0
  %447 = vmatmul.mubr.bf16.gmra.mrb[0].mxu0 %v277
  %v448 = vpop.f32.mrb[0].mxu0
  %v449 = vadd.f32 0.0, %v448
  %v450 = vpop.f32.mrb[0].mxu0
  %v451 = vpop.f32.mrb[0].mxu0
  %v452 = vadd.f32 0.0, %v451
  %v453 = vpop.f32.mrb[0].mxu0
  %454 = vmatprep.mubr.bf16.mxu0 0
  %455 = vmatmul.mubr.bf16.gmra.mrb[0].mxu0 %v280
  %v456 = vpop.f32.mrb[0].mxu0
  %v457 = vadd.f32 0.0, %v456
  %v458 = vpop.f32.mrb[0].mxu0
  %v459 = vpop.f32.mrb[0].mxu0
  %v460 = vadd.f32 0.0, %v459
  %v461 = vpop.f32.mrb[0].mxu0
  %462 = vmatprep.mubr.bf16.mxu0 0
  %463 = vmatmul.mubr.bf16.gmra.mrb[0].mxu0 %v283
  %v464 = vpop.f32.mrb[0].mxu0
  %v465 = vadd.f32 0.0, %v464
  %v466 = vpop.f32.mrb[0].mxu0
  %v467 = vpop.f32.mrb[0].mxu0
  %v468 = vadd.f32 0.0, %v467
  %v469 = vpop.f32.mrb[0].mxu0
  %470 = vmatprep.mubr.bf16.mxu0 0
  %471 = vmatmul.mubr.bf16.gmra.mrb[0].mxu0 %v286
  %v472 = vpop.f32.mrb[0].mxu0
  %v473 = vadd.f32 0.0, %v472
  %v474 = vpop.f32.mrb[0].mxu0
  %v475 = vpop.f32.mrb[0].mxu0
  %v476 = vadd.f32 0.0, %v475
  %v477 = vpop.f32.mrb[0].mxu0
  %478 = vmatprep.mubr.bf16.mxu0 0
  %479 = vmatmul.mubr.bf16.gmra.mrb[0].mxu0 %v289
  %v480 = vpop.f32.mrb[0].mxu0
  %v481 = vadd.f32 0.0, %v480
  %v482 = vpop.f32.mrb[0].mxu0
  %v483 = vpop.f32.mrb[0].mxu0
  %v484 = vadd.f32 0.0, %v483
  %v485 = vpop.f32.mrb[0].mxu0
  %486 = vmatprep.mubr.bf16.mxu0 0
  %487 = vmatmul.mubr.bf16.gmra.mrb[0].mxu0 %v292
  %v488 = vpop.f32.mrb[0].mxu0
  %v489 = vadd.f32 0.0, %v488
  %v490 = vpop.f32.mrb[0].mxu0
  %v491 = vpop.f32.mrb[0].mxu0
  %v492 = vadd.f32 0.0, %v491
  %v493 = vpop.f32.mrb[0].mxu0
  %494 = vmatprep.mubr.bf16.mxu0 0
  %495 = vmatmul.mubr.bf16.gmra.mrb[0].mxu0 %v295
  %v496 = vpop.f32.mrb[0].mxu0
  %v497 = vadd.f32 0.0, %v496
  %v498 = vpop.f32.mrb[0].mxu0
  %v499 = vpop.f32.mrb[0].mxu0
  %v500 = vadd.f32 0.0, %v499
  %v501 = vpop.f32.mrb[0].mxu0
  %502 = vmatprep.mubr.bf16.mxu0 0
  %503 = vmatmul.mubr.bf16.gmra.mrb[0].mxu0 %v298
  %v504 = vpop.f32.mrb[0].mxu0
  %v505 = vadd.f32 0.0, %v504
  %v506 = vpop.f32.mrb[0].mxu0
  %v507 = vpop.f32.mrb[0].mxu0
  %v508 = vadd.f32 0.0, %v507
  %v509 = vpop.f32.mrb[0].mxu0
  %510 = vmatprep.mubr.bf16.mxu0 0
  %511 = vmatmul.mubr.bf16.gmra.mrb[0].mxu0 %v301
  %v512 = vpop.f32.mrb[0].mxu0
  %v513 = vadd.f32 0.0, %v512
  %v514 = vpop.f32.mrb[0].mxu0
  %v515 = vpop.f32.mrb[0].mxu0
  %v516 = vadd.f32 0.0, %v515
  %v517 = vpop.f32.mrb[0].mxu0
  %518 = vmatprep.mubr.bf16.mxu0 0
  %519 = vmatmul.mubr.bf16.gmra.mrb[0].mxu0 %v304
  %v520 = vpop.f32.mrb[0].mxu0
  %v521 = vadd.f32 0.0, %v520
  %v522 = vpop.f32.mrb[0].mxu0
  %v523 = vpop.f32.mrb[0].mxu0
  %v524 = vadd.f32 0.0, %v523
  %v525 = vpop.f32.mrb[0].mxu0
  %526 = vmatprep.mubr.bf16.mxu0 0
  %527 = vmatmul.mubr.bf16.gmra.mrb[0].mxu0 %v307
  %v528 = vpop.f32.mrb[0].mxu0
  %v529 = vadd.f32 0.0, %v528
  %v530 = vpop.f32.mrb[0].mxu0
  %v531 = vpop.f32.mrb[0].mxu0
  %v532 = vadd.f32 0.0, %v531
  %v533 = vpop.f32.mrb[0].mxu0
  %534 = vmatprep.mubr.bf16.mxu0 0
  %535 = vmatmul.mubr.bf16.gmra.mrb[0].mxu0 %v310
  %v536 = vpop.f32.mrb[0].mxu0
  %v537 = vadd.f32 0.0, %v536
  %v538 = vpop.f32.mrb[0].mxu0
  %v539 = vpop.f32.mrb[0].mxu0
  %v540 = vadd.f32 0.0, %v539
  %v541 = vpop.f32.mrb[0].mxu0
  %542 = vmatprep.mubr.bf16.mxu0 0
  %543 = vmatmul.mubr.bf16.gmra.mrb[0].mxu0 %v313
  %v544 = vpop.f32.mrb[0].mxu0
  %v545 = vadd.f32 0.0, %v544
  %v546 = vpop.f32.mrb[0].mxu0
  %v547 = vpop.f32.mrb[0].mxu0
  %v548 = vadd.f32 0.0, %v547
  %v549 = vpop.f32.mrb[0].mxu0
  %550 = vmatprep.mubr.bf16.mxu0 0
  %551 = vmatmul.mubr.bf16.gmra.mrb[0].mxu0 %v316
  %v552 = vpop.f32.mrb[0].mxu0
  %v553 = vadd.f32 0.0, %v552
  %v554 = vpop.f32.mrb[0].mxu0
  %v555 = vpop.f32.mrb[0].mxu0
  %v556 = vadd.f32 0.0, %v555
  %v557 = vpop.f32.mrb[0].mxu0
  %558 = vmatprep.mubr.bf16.mxu0 0
  %559 = vmatmul.mubr.bf16.gmra.mrb[0].mxu0 %v319
  %v560 = vpop.f32.mrb[0].mxu0
  %v561 = vadd.f32 0.0, %v560
  %v562 = vpop.f32.mrb[0].mxu0
  %v563 = vpop.f32.mrb[0].mxu0
  %v564 = vadd.f32 0.0, %v563
  %v565 = vpop.f32.mrb[0].mxu0
  %566 = vmatprep.mubr.bf16.mxu0 0
  %567 = vmatmul.mubr.bf16.gmra.mrb[0].mxu0 %v322
  %v568 = vpop.f32.mrb[0].mxu0
  %v569 = vadd.f32 0.0, %v568
  %v570 = vpop.f32.mrb[0].mxu0
  %v571 = vpop.f32.mrb[0].mxu0
  %v572 = vadd.f32 0.0, %v571
  %v573 = vpop.f32.mrb[0].mxu0
  %574 = vmatprep.mubr.bf16.mxu0 0
  %575 = vmatmul.mubr.bf16.gmra.mrb[0].mxu0 %v325
  %v576 = vpop.f32.mrb[0].mxu0
  %v577 = vadd.f32 0.0, %v576
  %v578 = vpop.f32.mrb[0].mxu0
  %v579 = vpop.f32.mrb[0].mxu0
  %v580 = vadd.f32 0.0, %v579
  %v581 = vpop.f32.mrb[0].mxu0
  %582 = vmatprep.mubr.bf16.mxu0 0
  %583 = vmatmul.mubr.bf16.gmra.mrb[0].mxu0 %v328
  %v584 = vpop.f32.mrb[0].mxu0
  %v585 = vadd.f32 0.0, %v584
  %v586 = vpop.f32.mrb[0].mxu0
  %v587 = vpop.f32.mrb[0].mxu0
  %v588 = vadd.f32 0.0, %v587
  %v589 = vpop.f32.mrb[0].mxu0
  %590 = vmatprep.mubr.bf16.mxu0 0
  %591 = vmatmul.mubr.bf16.gmra.mrb[0].mxu0 %v331
  %v592 = vpop.f32.mrb[0].mxu0
  %v593 = vadd.f32 0.0, %v592
  %v594 = vpop.f32.mrb[0].mxu0
  %v595 = vpop.f32.mrb[0].mxu0
  %v596 = vadd.f32 0.0, %v595
  %v597 = vpop.f32.mrb[0].mxu0
  %598 = vmatprep.mubr.bf16.mxu0 0
  %599 = vmatmul.mubr.bf16.gmra.mrb[0].mxu0 %v334
  %v600 = vpop.f32.mrb[0].mxu0
  %v601 = vadd.f32 0.0, %v600
  %v602 = vpop.f32.mrb[0].mxu0
  %v603 = vpop.f32.mrb[0].mxu0
  %v604 = vadd.f32 0.0, %v603
  %v605 = vpop.f32.mrb[0].mxu0
  %606 = vmatprep.mubr.bf16.mxu0 0
  %607 = vmatmul.mubr.bf16.gmra.mrb[0].mxu0 %v337
  %v608 = vpop.f32.mrb[0].mxu0
  %v609 = vadd.f32 0.0, %v608
  %v610 = vpop.f32.mrb[0].mxu0
  %v611 = vpop.f32.mrb[0].mxu0
  %v612 = vadd.f32 0.0, %v611
  %v613 = vpop.f32.mrb[0].mxu0
  %614 = vmatprep.mubr.bf16.mxu0 0
  %615 = vmatmul.mubr.bf16.gmra.mrb[0].mxu0 %v340
  %v616 = vpop.f32.mrb[0].mxu0
  %v617 = vadd.f32 0.0, %v616
  %v618 = vpop.f32.mrb[0].mxu0
  %v619 = vpop.f32.mrb[0].mxu0
  %v620 = vadd.f32 0.0, %v619
  %v621 = vpop.f32.mrb[0].mxu0
  %622 = vmatprep.mubr.bf16.mxu0 0
  %623 = vmatmul.mubr.bf16.gmra.mrb[0].mxu0 %v343
  %v624 = vpop.f32.mrb[0].mxu0
  %v625 = vadd.f32 0.0, %v624
  %v626 = vpop.f32.mrb[0].mxu0
  %v627 = vpop.f32.mrb[0].mxu0
  %v628 = vadd.f32 0.0, %v627
  %v629 = vpop.f32.mrb[0].mxu0
  %630 = vmatprep.mubr.bf16.mxu0 0
  %631 = vmatmul.mubr.bf16.gmra.mrb[0].mxu0 %v346
  %v632 = vpop.f32.mrb[0].mxu0
  %v633 = vadd.f32 0.0, %v632
  %v634 = vpop.f32.mrb[0].mxu0
  %v635 = vpop.f32.mrb[0].mxu0
  %v636 = vadd.f32 0.0, %v635
  %v637 = vpop.f32.mrb[0].mxu0
  %638 = vmatprep.mubr.bf16.mxu0 0
  %639 = vmatmul.mubr.bf16.gmra.mrb[0].mxu0 %v349
  %v640 = vpop.f32.mrb[0].mxu0
  %v641 = vadd.f32 0.0, %v640
  %v642 = vpop.f32.mrb[0].mxu0
  %v643 = vpop.f32.mrb[0].mxu0
  %v644 = vadd.f32 0.0, %v643
  %v645 = vpop.f32.mrb[0].mxu0
  %646 = vdwg.mxu0
  %v647 = vld [vmem:[%s2] sm:$0x1]
  %v648 = vlaneseq
  %v649 = vshrl.u32 %v648, 7
  %v650 = vsub.s32 0, %v649
  %v651 = vrot.slane %v647, %v650
  %v652 = vmul.f32 %v393, %v651
  %v653 = vmul.f32 %v396, %v651
  %v654 = vmul.f32 %v401, %v651
  %v655 = vmul.f32 %v404, %v651
  %v656 = vmul.f32 %v409, %v651
  %v657 = vmul.f32 %v412, %v651
  %v658 = vmul.f32 %v417, %v651
  %v659 = vmul.f32 %v420, %v651
  %v660 = vmul.f32 %v425, %v651
  %v661 = vmul.f32 %v428, %v651
  %v662 = vmul.f32 %v433, %v651
  %v663 = vmul.f32 %v436, %v651
  %v664 = vmul.f32 %v441, %v651
  %v665 = vmul.f32 %v444, %v651
  %v666 = vmul.f32 %v449, %v651
  %v667 = vmul.f32 %v452, %v651
  %v668 = vmul.f32 %v457, %v651
  %v669 = vmul.f32 %v460, %v651
  %v670 = vmul.f32 %v465, %v651
  %v671 = vmul.f32 %v468, %v651
  %v672 = vmul.f32 %v473, %v651
  %v673 = vmul.f32 %v476, %v651
  %v674 = vmul.f32 %v481, %v651
  %v675 = vmul.f32 %v484, %v651
  %v676 = vmul.f32 %v489, %v651
  %v677 = vmul.f32 %v492, %v651
  %v678 = vmul.f32 %v497, %v651
  %v679 = vmul.f32 %v500, %v651
  %v680 = vmul.f32 %v505, %v651
  %v681 = vmul.f32 %v508, %v651
  %v682 = vmul.f32 %v513, %v651
  %v683 = vmul.f32 %v516, %v651
  %v684 = vmul.f32 %v521, %v651
  %v685 = vmul.f32 %v524, %v651
  %v686 = vmul.f32 %v529, %v651
  %v687 = vmul.f32 %v532, %v651
  %v688 = vmul.f32 %v537, %v651
  %v689 = vmul.f32 %v540, %v651
  %v690 = vmul.f32 %v545, %v651
  %v691 = vmul.f32 %v548, %v651
  %v692 = vmul.f32 %v553, %v651
  %v693 = vmul.f32 %v556, %v651
  %v694 = vmul.f32 %v561, %v651
  %v695 = vmul.f32 %v564, %v651
  %v696 = vmul.f32 %v569, %v651
  %v697 = vmul.f32 %v572, %v651
  %v698 = vmul.f32 %v577, %v651
  %v699 = vmul.f32 %v580, %v651
  %v700 = vmul.f32 %v585, %v651
  %v701 = vmul.f32 %v588, %v651
  %v702 = vmul.f32 %v593, %v651
  %v703 = vmul.f32 %v596, %v651
  %v704 = vmul.f32 %v601, %v651
  %v705 = vmul.f32 %v604, %v651
  %v706 = vmul.f32 %v609, %v651
  %v707 = vmul.f32 %v612, %v651
  %v708 = vmul.f32 %v617, %v651
  %v709 = vmul.f32 %v620, %v651
  %v710 = vmul.f32 %v625, %v651
  %v711 = vmul.f32 %v628, %v651
  %v712 = vmul.f32 %v633, %v651
  %v713 = vmul.f32 %v636, %v651
  %v714 = vmul.f32 %v641, %v651
  %v715 = vmul.f32 %v644, %v651
  %v716 = vld [vmem:[%s2 + $0x1] sm:$0x1]
  %v717 = vlaneseq
  %v718 = vshrl.u32 %v717, 7
  %v719 = vsub.s32 0, %v718
  %v720 = vrot.slane %v716, %v719
  %v721 = vadd.f32 %v652, %v720
  %v722 = vadd.f32 %v653, %v720
  %v723 = vadd.f32 %v654, %v720
  %v724 = vadd.f32 %v655, %v720
  %v725 = vadd.f32 %v656, %v720
  %v726 = vadd.f32 %v657, %v720
  %v727 = vadd.f32 %v658, %v720
  %v728 = vadd.f32 %v659, %v720
  %v729 = vadd.f32 %v660, %v720
  %v730 = vadd.f32 %v661, %v720
  %v731 = vadd.f32 %v662, %v720
  %v732 = vadd.f32 %v663, %v720
  %v733 = vadd.f32 %v664, %v720
  %v734 = vadd.f32 %v665, %v720
  %v735 = vadd.f32 %v666, %v720
  %v736 = vadd.f32 %v667, %v720
  %v737 = vadd.f32 %v668, %v720
  %v738 = vadd.f32 %v669, %v720
  %v739 = vadd.f32 %v670, %v720
  %v740 = vadd.f32 %v671, %v720
  %v741 = vadd.f32 %v672, %v720
  %v742 = vadd.f32 %v673, %v720
  %v743 = vadd.f32 %v674, %v720
  %v744 = vadd.f32 %v675, %v720
  %v745 = vadd.f32 %v676, %v720
  %v746 = vadd.f32 %v677, %v720
  %v747 = vadd.f32 %v678, %v720
  %v748 = vadd.f32 %v679, %v720
  %v749 = vadd.f32 %v680, %v720
  %v750 = vadd.f32 %v681, %v720
  %v751 = vadd.f32 %v682, %v720
  %v752 = vadd.f32 %v683, %v720
  %v753 = vadd.f32 %v684, %v720
  %v754 = vadd.f32 %v685, %v720
  %v755 = vadd.f32 %v686, %v720
  %v756 = vadd.f32 %v687, %v720
  %v757 = vadd.f32 %v688, %v720
  %v758 = vadd.f32 %v689, %v720
  %v759 = vadd.f32 %v690, %v720
  %v760 = vadd.f32 %v691, %v720
  %v761 = vadd.f32 %v692, %v720
  %v762 = vadd.f32 %v693, %v720
  %v763 = vadd.f32 %v694, %v720
  %v764 = vadd.f32 %v695, %v720
  %v765 = vadd.f32 %v696, %v720
  %v766 = vadd.f32 %v697, %v720
  %v767 = vadd.f32 %v698, %v720
  %v768 = vadd.f32 %v699, %v720
  %v769 = vadd.f32 %v700, %v720
  %v770 = vadd.f32 %v701, %v720
  %v771 = vadd.f32 %v702, %v720
  %v772 = vadd.f32 %v703, %v720
  %v773 = vadd.f32 %v704, %v720
  %v774 = vadd.f32 %v705, %v720
  %v775 = vadd.f32 %v706, %v720
  %v776 = vadd.f32 %v707, %v720
  %v777 = vadd.f32 %v708, %v720
  %v778 = vadd.f32 %v709, %v720
  %v779 = vadd.f32 %v710, %v720
  %v780 = vadd.f32 %v711, %v720
  %v781 = vadd.f32 %v712, %v720
  %v782 = vadd.f32 %v713, %v720
  %v783 = vadd.f32 %v714, %v720
  %v784 = vadd.f32 %v715, %v720
  %v785 = vmax.f32 %v721, 0.0
  %v786 = vmax.f32 %v722, 0.0
  %v787 = vmax.f32 %v723, 0.0
  %v788 = vmax.f32 %v724, 0.0
  %v789 = vmax.f32 %v725, 0.0
  %v790 = vmax.f32 %v726, 0.0
  %v791 = vmax.f32 %v727, 0.0
  %v792 = vmax.f32 %v728, 0.0
  %v793 = vmax.f32 %v729, 0.0
  %v794 = vmax.f32 %v730, 0.0
  %v795 = vmax.f32 %v731, 0.0
  %v796 = vmax.f32 %v732, 0.0
  %v797 = vmax.f32 %v733, 0.0
  %v798 = vmax.f32 %v734, 0.0
  %v799 = vmax.f32 %v735, 0.0
  %v800 = vmax.f32 %v736, 0.0
  %v801 = vmax.f32 %v737, 0.0
  %v802 = vmax.f32 %v738, 0.0
  %v803 = vmax.f32 %v739, 0.0
  %v804 = vmax.f32 %v740, 0.0
  %v805 = vmax.f32 %v741, 0.0
  %v806 = vmax.f32 %v742, 0.0
  %v807 = vmax.f32 %v743, 0.0
  %v808 = vmax.f32 %v744, 0.0
  %v809 = vmax.f32 %v745, 0.0
  %v810 = vmax.f32 %v746, 0.0
  %v811 = vmax.f32 %v747, 0.0
  %v812 = vmax.f32 %v748, 0.0
  %v813 = vmax.f32 %v749, 0.0
  %v814 = vmax.f32 %v750, 0.0
  %v815 = vmax.f32 %v751, 0.0
  %v816 = vmax.f32 %v752, 0.0
  %v817 = vmax.f32 %v753, 0.0
  %v818 = vmax.f32 %v754, 0.0
  %v819 = vmax.f32 %v755, 0.0
  %v820 = vmax.f32 %v756, 0.0
  %v821 = vmax.f32 %v757, 0.0
  %v822 = vmax.f32 %v758, 0.0
  %v823 = vmax.f32 %v759, 0.0
  %v824 = vmax.f32 %v760, 0.0
  %v825 = vmax.f32 %v761, 0.0
  %v826 = vmax.f32 %v762, 0.0
  %v827 = vmax.f32 %v763, 0.0
  %v828 = vmax.f32 %v764, 0.0
  %v829 = vmax.f32 %v765, 0.0
  %v830 = vmax.f32 %v766, 0.0
  %v831 = vmax.f32 %v767, 0.0
  %v832 = vmax.f32 %v768, 0.0
  %v833 = vmax.f32 %v769, 0.0
  %v834 = vmax.f32 %v770, 0.0
  %v835 = vmax.f32 %v771, 0.0
  %v836 = vmax.f32 %v772, 0.0
  %v837 = vmax.f32 %v773, 0.0
  %v838 = vmax.f32 %v774, 0.0
  %v839 = vmax.f32 %v775, 0.0
  %v840 = vmax.f32 %v776, 0.0
  %v841 = vmax.f32 %v777, 0.0
  %v842 = vmax.f32 %v778, 0.0
  %v843 = vmax.f32 %v779, 0.0
  %v844 = vmax.f32 %v780, 0.0
  %v845 = vmax.f32 %v781, 0.0
  %v846 = vmax.f32 %v782, 0.0
  %v847 = vmax.f32 %v783, 0.0
  %v848 = vmax.f32 %v784, 0.0
  %v849 = vpack.c.bf16 %v786, %v785
  %v850 = vpack.c.bf16 %v788, %v787
  %v851 = vpack.c.bf16 %v790, %v789
  %v852 = vpack.c.bf16 %v792, %v791
  %v853 = vpack.c.bf16 %v794, %v793
  %v854 = vpack.c.bf16 %v796, %v795
  %v855 = vpack.c.bf16 %v798, %v797
  %v856 = vpack.c.bf16 %v800, %v799
  %v857 = vpack.c.bf16 %v802, %v801
  %v858 = vpack.c.bf16 %v804, %v803
  %v859 = vpack.c.bf16 %v806, %v805
  %v860 = vpack.c.bf16 %v808, %v807
  %v861 = vpack.c.bf16 %v810, %v809
  %v862 = vpack.c.bf16 %v812, %v811
  %v863 = vpack.c.bf16 %v814, %v813
  %v864 = vpack.c.bf16 %v816, %v815
  %v865 = vpack.c.bf16 %v818, %v817
  %v866 = vpack.c.bf16 %v820, %v819
  %v867 = vpack.c.bf16 %v822, %v821
  %v868 = vpack.c.bf16 %v824, %v823
  %v869 = vpack.c.bf16 %v826, %v825
  %v870 = vpack.c.bf16 %v828, %v827
  %v871 = vpack.c.bf16 %v830, %v829
  %v872 = vpack.c.bf16 %v832, %v831
  %v873 = vpack.c.bf16 %v834, %v833
  %v874 = vpack.c.bf16 %v836, %v835
  %v875 = vpack.c.bf16 %v838, %v837
  %v876 = vpack.c.bf16 %v840, %v839
  %v877 = vpack.c.bf16 %v842, %v841
  %v878 = vpack.c.bf16 %v844, %v843
  %v879 = vpack.c.bf16 %v846, %v845
  %v880 = vpack.c.bf16 %v848, %v847
  %v913 = vunpack.c.l.b16 %v849
  %v914 = vunpack.c.h.b16 %v849
  %v915 = vunpack.c.l.b16 %v850
  %v916 = vunpack.c.h.b16 %v850
  %v917 = vunpack.c.l.b16 %v851
  %v918 = vunpack.c.h.b16 %v851
  %v919 = vunpack.c.l.b16 %v852
  %v920 = vunpack.c.h.b16 %v852
  %v921 = vunpack.c.l.b16 %v853
  %v922 = vunpack.c.h.b16 %v853
  %v923 = vunpack.c.l.b16 %v854
  %v924 = vunpack.c.h.b16 %v854
  %v925 = vunpack.c.l.b16 %v855
  %v926 = vunpack.c.h.b16 %v855
  %v927 = vunpack.c.l.b16 %v856
  %v928 = vunpack.c.h.b16 %v856
  %v929 = vunpack.c.l.b16 %v857
  %v930 = vunpack.c.h.b16 %v857
  %v931 = vunpack.c.l.b16 %v858
  %v932 = vunpack.c.h.b16 %v858
  %v933 = vunpack.c.l.b16 %v859
  %v934 = vunpack.c.h.b16 %v859
  %v935 = vunpack.c.l.b16 %v860
  %v936 = vunpack.c.h.b16 %v860
  %v937 = vunpack.c.l.b16 %v861
  %v938 = vunpack.c.h.b16 %v861
  %v939 = vunpack.c.l.b16 %v862
  %v940 = vunpack.c.h.b16 %v862
  %v941 = vunpack.c.l.b16 %v863
  %v942 = vunpack.c.h.b16 %v863
  %v943 = vunpack.c.l.b16 %v864
  %v944 = vunpack.c.h.b16 %v864
  %v945 = vunpack.c.l.b16 %v865
  %v946 = vunpack.c.h.b16 %v865
  %v947 = vunpack.c.l.b16 %v866
  %v948 = vunpack.c.h.b16 %v866
  %v949 = vunpack.c.l.b16 %v867
  %v950 = vunpack.c.h.b16 %v867
  %v951 = vunpack.c.l.b16 %v868
  %v952 = vunpack.c.h.b16 %v868
  %v953 = vunpack.c.l.b16 %v869
  %v954 = vunpack.c.h.b16 %v869
  %v955 = vunpack.c.l.b16 %v870
  %v956 = vunpack.c.h.b16 %v870
  %v957 = vunpack.c.l.b16 %v871
  %v958 = vunpack.c.h.b16 %v871
  %v959 = vunpack.c.l.b16 %v872
  %v960 = vunpack.c.h.b16 %v872
  %v961 = vunpack.c.l.b16 %v873
  %v962 = vunpack.c.h.b16 %v873
  %v963 = vunpack.c.l.b16 %v874
  %v964 = vunpack.c.h.b16 %v874
  %v965 = vunpack.c.l.b16 %v875
  %v966 = vunpack.c.h.b16 %v875
  %v967 = vunpack.c.l.b16 %v876
  %v968 = vunpack.c.h.b16 %v876
  %v969 = vunpack.c.l.b16 %v877
  %v970 = vunpack.c.h.b16 %v877
  %v971 = vunpack.c.l.b16 %v878
  %v972 = vunpack.c.h.b16 %v878
  %v973 = vunpack.c.l.b16 %v879
  %v974 = vunpack.c.h.b16 %v879
  %v975 = vunpack.c.l.b16 %v880
  %v976 = vunpack.c.h.b16 %v880
  %v977 = vpack.c.b16 %v913, %v913
  %v978 = vpack.c.b16 %v914, %v914
  %v979 = vpack.c.b16 %v915, %v915
  %v980 = vpack.c.b16 %v916, %v916
  %v981 = vpack.c.b16 %v917, %v917
  %v982 = vpack.c.b16 %v918, %v918
  %v983 = vpack.c.b16 %v919, %v919
  %v984 = vpack.c.b16 %v920, %v920
  %v985 = vpack.c.b16 %v921, %v921
  %v986 = vpack.c.b16 %v922, %v922
  %v987 = vpack.c.b16 %v923, %v923
  %v988 = vpack.c.b16 %v924, %v924
  %v989 = vpack.c.b16 %v925, %v925
  %v990 = vpack.c.b16 %v926, %v926
  %v991 = vpack.c.b16 %v927, %v927
  %v992 = vpack.c.b16 %v928, %v928
  %v993 = vpack.c.b16 %v929, %v929
  %v994 = vpack.c.b16 %v930, %v930
  %v995 = vpack.c.b16 %v931, %v931
  %v996 = vpack.c.b16 %v932, %v932
  %v997 = vpack.c.b16 %v933, %v933
  %v998 = vpack.c.b16 %v934, %v934
  %v999 = vpack.c.b16 %v935, %v935
  %v1000 = vpack.c.b16 %v936, %v936
  %v1001 = vpack.c.b16 %v937, %v937
  %v1002 = vpack.c.b16 %v938, %v938
  %v1003 = vpack.c.b16 %v939, %v939
  %v1004 = vpack.c.b16 %v940, %v940
  %v1005 = vpack.c.b16 %v941, %v941
  %v1006 = vpack.c.b16 %v942, %v942
  %v1007 = vpack.c.b16 %v943, %v943
  %v1008 = vpack.c.b16 %v944, %v944
  %v1009 = vpack.c.b16 %v945, %v945
  %v1010 = vpack.c.b16 %v946, %v946
  %v1011 = vpack.c.b16 %v947, %v947
  %v1012 = vpack.c.b16 %v948, %v948
  %v1013 = vpack.c.b16 %v949, %v949
  %v1014 = vpack.c.b16 %v950, %v950
  %v1015 = vpack.c.b16 %v951, %v951
  %v1016 = vpack.c.b16 %v952, %v952
  %v1017 = vpack.c.b16 %v953, %v953
  %v1018 = vpack.c.b16 %v954, %v954
  %v1019 = vpack.c.b16 %v955, %v955
  %v1020 = vpack.c.b16 %v956, %v956
  %v1021 = vpack.c.b16 %v957, %v957
  %v1022 = vpack.c.b16 %v958, %v958
  %v1023 = vpack.c.b16 %v959, %v959
  %v1024 = vpack.c.b16 %v960, %v960
  %v1025 = vpack.c.b16 %v961, %v961
  %v1026 = vpack.c.b16 %v962, %v962
  %v1027 = vpack.c.b16 %v963, %v963
  %v1028 = vpack.c.b16 %v964, %v964
  %v1029 = vpack.c.b16 %v965, %v965
  %v1030 = vpack.c.b16 %v966, %v966
  %v1031 = vpack.c.b16 %v967, %v967
  %v1032 = vpack.c.b16 %v968, %v968
  %v1033 = vpack.c.b16 %v969, %v969
  %v1034 = vpack.c.b16 %v970, %v970
  %v1035 = vpack.c.b16 %v971, %v971
  %v1036 = vpack.c.b16 %v972, %v972
  %v1037 = vpack.c.b16 %v973, %v973
  %v1038 = vpack.c.b16 %v974, %v974
  %v1039 = vpack.c.b16 %v975, %v975
  %v1040 = vpack.c.b16 %v976, %v976
  %vm1105 = vcmask 27648
  %1106 = vst.msk [vmem:[%s3] sm:$0xf] %vm1105, %v977
  %1107 = vst.msk [vmem:[%s3 + $0x4] sm:$0xf] %vm1105, %v978
  %1108 = vst.msk [vmem:[%s3 + $0x8] sm:$0xf] %vm1105, %v979
  %1109 = vst.msk [vmem:[%s3 + $0xc] sm:$0xf] %vm1105, %v980
  %1110 = vst.msk [vmem:[%s3 + $0x10] sm:$0xf] %vm1105, %v981
  %1111 = vst.msk [vmem:[%s3 + $0x14] sm:$0xf] %vm1105, %v982
  %1112 = vst.msk [vmem:[%s3 + $0x18] sm:$0xf] %vm1105, %v983
  %1113 = vst.msk [vmem:[%s3 + $0x1c] sm:$0xf] %vm1105, %v984
  %1114 = vst.msk [vmem:[%s3 + $0x20] sm:$0xf] %vm1105, %v985
  %1115 = vst.msk [vmem:[%s3 + $0x24] sm:$0xf] %vm1105, %v986
  %1116 = vst.msk [vmem:[%s3 + $0x28] sm:$0xf] %vm1105, %v987
  %1117 = vst.msk [vmem:[%s3 + $0x2c] sm:$0xf] %vm1105, %v988
  %1118 = vst.msk [vmem:[%s3 + $0x30] sm:$0xf] %vm1105, %v989
  %1119 = vst.msk [vmem:[%s3 + $0x34] sm:$0xf] %vm1105, %v990
  %1120 = vst.msk [vmem:[%s3 + $0x38] sm:$0xf] %vm1105, %v991
  %1121 = vst.msk [vmem:[%s3 + $0x3c] sm:$0xf] %vm1105, %v992
  %1122 = vst.msk [vmem:[%s3 + $0x40] sm:$0xf] %vm1105, %v993
  %1123 = vst.msk [vmem:[%s3 + $0x44] sm:$0xf] %vm1105, %v994
  %1124 = vst.msk [vmem:[%s3 + $0x48] sm:$0xf] %vm1105, %v995
  %1125 = vst.msk [vmem:[%s3 + $0x4c] sm:$0xf] %vm1105, %v996
  %1126 = vst.msk [vmem:[%s3 + $0x50] sm:$0xf] %vm1105, %v997
  %1127 = vst.msk [vmem:[%s3 + $0x54] sm:$0xf] %vm1105, %v998
  %1128 = vst.msk [vmem:[%s3 + $0x58] sm:$0xf] %vm1105, %v999
  %1129 = vst.msk [vmem:[%s3 + $0x5c] sm:$0xf] %vm1105, %v1000
  %1130 = vst.msk [vmem:[%s3 + $0x60] sm:$0xf] %vm1105, %v1001
  %1131 = vst.msk [vmem:[%s3 + $0x64] sm:$0xf] %vm1105, %v1002
  %1132 = vst.msk [vmem:[%s3 + $0x68] sm:$0xf] %vm1105, %v1003
  %1133 = vst.msk [vmem:[%s3 + $0x6c] sm:$0xf] %vm1105, %v1004
  %1134 = vst.msk [vmem:[%s3 + $0x70] sm:$0xf] %vm1105, %v1005
  %1135 = vst.msk [vmem:[%s3 + $0x74] sm:$0xf] %vm1105, %v1006
  %1136 = vst.msk [vmem:[%s3 + $0x78] sm:$0xf] %vm1105, %v1007
  %1137 = vst.msk [vmem:[%s3 + $0x7c] sm:$0xf] %vm1105, %v1008
  %1138 = vst.msk [vmem:[%s3 + $0x80] sm:$0xf] %vm1105, %v1009
  %1139 = vst.msk [vmem:[%s3 + $0x84] sm:$0xf] %vm1105, %v1010
  %1140 = vst.msk [vmem:[%s3 + $0x88] sm:$0xf] %vm1105, %v1011
  %1141 = vst.msk [vmem:[%s3 + $0x8c] sm:$0xf] %vm1105, %v1012
  %1142 = vst.msk [vmem:[%s3 + $0x90] sm:$0xf] %vm1105, %v1013
  %1143 = vst.msk [vmem:[%s3 + $0x94] sm:$0xf] %vm1105, %v1014
  %1144 = vst.msk [vmem:[%s3 + $0x98] sm:$0xf] %vm1105, %v1015
  %1145 = vst.msk [vmem:[%s3 + $0x9c] sm:$0xf] %vm1105, %v1016
  %1146 = vst.msk [vmem:[%s3 + $0xa0] sm:$0xf] %vm1105, %v1017
  %1147 = vst.msk [vmem:[%s3 + $0xa4] sm:$0xf] %vm1105, %v1018
  %1148 = vst.msk [vmem:[%s3 + $0xa8] sm:$0xf] %vm1105, %v1019
  %1149 = vst.msk [vmem:[%s3 + $0xac] sm:$0xf] %vm1105, %v1020
  %1150 = vst.msk [vmem:[%s3 + $0xb0] sm:$0xf] %vm1105, %v1021
  %1151 = vst.msk [vmem:[%s3 + $0xb4] sm:$0xf] %vm1105, %v1022
  %1152 = vst.msk [vmem:[%s3 + $0xb8] sm:$0xf] %vm1105, %v1023
  %1153 = vst.msk [vmem:[%s3 + $0xbc] sm:$0xf] %vm1105, %v1024
  %1154 = vst.msk [vmem:[%s3 + $0xc0] sm:$0xf] %vm1105, %v1025
  %1155 = vst.msk [vmem:[%s3 + $0xc4] sm:$0xf] %vm1105, %v1026
  %1156 = vst.msk [vmem:[%s3 + $0xc8] sm:$0xf] %vm1105, %v1027
  %1157 = vst.msk [vmem:[%s3 + $0xcc] sm:$0xf] %vm1105, %v1028
  %1158 = vst.msk [vmem:[%s3 + $0xd0] sm:$0xf] %vm1105, %v1029
  %1159 = vst.msk [vmem:[%s3 + $0xd4] sm:$0xf] %vm1105, %v1030
  %1160 = vst.msk [vmem:[%s3 + $0xd8] sm:$0xf] %vm1105, %v1031
  %1161 = vst.msk [vmem:[%s3 + $0xdc] sm:$0xf] %vm1105, %v1032
  %1162 = vst.msk [vmem:[%s3 + $0xe0] sm:$0xf] %vm1105, %v1033
  %1163 = vst.msk [vmem:[%s3 + $0xe4] sm:$0xf] %vm1105, %v1034
  %1164 = vst.msk [vmem:[%s3 + $0xe8] sm:$0xf] %vm1105, %v1035
  %1165 = vst.msk [vmem:[%s3 + $0xec] sm:$0xf] %vm1105, %v1036
  %1166 = vst.msk [vmem:[%s3 + $0xf0] sm:$0xf] %vm1105, %v1037
  %1167 = vst.msk [vmem:[%s3 + $0xf4] sm:$0xf] %vm1105, %v1038
  %1168 = vst.msk [vmem:[%s3 + $0xf8] sm:$0xf] %vm1105, %v1039
  %1169 = vst.msk [vmem:[%s3 + $0xfc] sm:$0xf] %vm1105, %v1040
  // Predicated region
  $region14: #{_lambda_.21} parent=0 // pred_check
    _
  $region15: #{_lambda_.21} parent=0 // pred_check_branch
    %1171 = sbr.rel (0) target = $region17
  $region16: #{_lambda_.21} parent=0 // pred_region
    _
  $region17: #{_lambda_.21} parent=0 // pred_fallthru
    _
  // Predicated region
  $region18: #{_lambda_.21} parent=0 // pred_check
    _
  $region19: #{_lambda_.21} parent=0 // pred_check_branch
    %1173 = sbr.rel (0) target = $region21
  $region20: #{_lambda_.21} parent=0 // pred_region
    _
  $region21: #{_lambda_.21} parent=0 // pred_fallthru
    _

// kernel: _lambda_.22
$region0: #{_lambda_.22}
  #allocation0 [shape = 'u32[]', space=smem, size = 0x4, offset = 0x4, fixed_abs, tag = 'smem constant byte address 0x4 - core index']
  #allocation1 [shape = 'u32[144,128]{1,0:T(1,128)}', space=vmem, size = 0x12000, scoped, tag = 'internal scratch']
  %s0 = inlined_call_operand.vmem [shape: bf16[128,36], index: 0, kind: input, shape index: {}]
  %s1 = inlined_call_operand.vmem [shape: bf16[36,8], index: 1, kind: input, shape index: {}]
  %s2 = inlined_call_operand.vmem [shape: f32[2,8], index: 2, kind: input, shape index: {}]
  %s3 = inlined_call_operand.vmem [shape: bf16[128,8], index: 3, kind: output, shape index: {}]
  %s4 = sld [smem:[#allocation0]]
  $region22: #{_lambda_.22} parent=0
    _
  %s6 = ssub.s32 1, %s4
  %s7 = scalar_select 0, %s6, %s4
  // Predicated region
  $region2: #{_lambda_.22} parent=0 // pred_check
    _
  $region3: #{_lambda_.22} parent=0 // pred_check_branch
    %9 = sbr.rel (0) target = $region5
  $region4: #{_lambda_.22} parent=0 // pred_region
    _
  $region5: #{_lambda_.22} parent=0 // pred_fallthru
    _
  // Predicated region
  $region6: #{_lambda_.22} parent=0 // pred_check
    _
  $region7: #{_lambda_.22} parent=0 // pred_check_branch
    %11 = sbr.rel (0) target = $region9
  $region8: #{_lambda_.22} parent=0 // pred_region
    _
  $region9: #{_lambda_.22} parent=0 // pred_fallthru
    _
  // Predicated region
  $region10: #{_lambda_.22} parent=0 // pred_check
    _
  $region11: #{_lambda_.22} parent=0 // pred_check_branch
    %13 = sbr.rel (0) target = $region13
  $region12: #{_lambda_.22} parent=0 // pred_region
    _
  $region13: #{_lambda_.22} parent=0 // pred_fallthru
    _
  %v15 = vld [vmem:[%s0] sm:$0xf]
  %v16 = vld [vmem:[%s0 + $0x4] sm:$0xf]
  %v17 = vld [vmem:[%s0 + $0x8] sm:$0xf]
  %v18 = vld [vmem:[%s0 + $0xc] sm:$0xf]
  %v19 = vld [vmem:[%s0 + $0x10] sm:$0xf]
  %v20 = vld [vmem:[%s0 + $0x14] sm:$0xf]
  %v21 = vld [vmem:[%s0 + $0x18] sm:$0xf]
  %v22 = vld [vmem:[%s0 + $0x1c] sm:$0xf]
  %v23 = vld [vmem:[%s0 + $0x20] sm:$0xf]
  %v24 = vld [vmem:[%s0 + $0x24] sm:$0xf]
  %v25 = vld [vmem:[%s0 + $0x28] sm:$0xf]
  %v26 = vld [vmem:[%s0 + $0x2c] sm:$0xf]
  %v27 = vld [vmem:[%s0 + $0x30] sm:$0xf]
  %v28 = vld [vmem:[%s0 + $0x34] sm:$0xf]
  %v29 = vld [vmem:[%s0 + $0x38] sm:$0xf]
  %v30 = vld [vmem:[%s0 + $0x3c] sm:$0xf]
  %v31 = vld [vmem:[%s1] sm:$0xf]
  %v32 = vld [vmem:[%s1 + $0x4] sm:$0xf]
  %v33 = vld [vmem:[%s1 + $0x8] sm:$0xf]
  %v34 = vld [vmem:[%s1 + $0xc] sm:$0xf]
  %v35 = vld [vmem:[%s1 + $0x10] sm:$0x3]
  %v52 = vunpack.c.l.b16 %v15
  %v53 = vunpack.c.l.b16 %v16
  %v54 = vunpack.c.l.b16 %v17
  %v55 = vunpack.c.l.b16 %v18
  %v56 = vunpack.c.l.b16 %v19
  %v57 = vunpack.c.l.b16 %v20
  %v58 = vunpack.c.l.b16 %v21
  %v59 = vunpack.c.l.b16 %v22
  %v60 = vunpack.c.l.b16 %v23
  %v61 = vunpack.c.l.b16 %v24
  %v62 = vunpack.c.l.b16 %v25
  %v63 = vunpack.c.l.b16 %v26
  %v64 = vunpack.c.l.b16 %v27
  %v65 = vunpack.c.l.b16 %v28
  %v66 = vunpack.c.l.b16 %v29
  %v67 = vunpack.c.l.b16 %v30
  %v68 = vpack.c.b16 %v53, %v52
  %v69 = vpack.c.b16 %v55, %v54
  %v70 = vpack.c.b16 %v57, %v56
  %v71 = vpack.c.b16 %v59, %v58
  %v72 = vpack.c.b16 %v61, %v60
  %v73 = vpack.c.b16 %v63, %v62
  %v74 = vpack.c.b16 %v65, %v64
  %v75 = vpack.c.b16 %v67, %v66
  %v81 = vunpack.c.l.b16 %v31
  %v82 = vunpack.c.l.b16 %v32
  %v83 = vunpack.c.l.b16 %v33
  %v84 = vunpack.c.l.b16 %v34
  %v85 = vunpack.c.l.b16 %v35
  %v86 = vpack.c.b16 %v82, %v81
  %v87 = vpack.c.b16 %v84, %v83
  %v88 = vpack.c.b16 %v85, %v85
  %vm91 = vcmask 293888
  %v93 = vsel %vm91, %v68, 0
  %v96 = vsel %vm91, %v69, 0
  %v99 = vsel %vm91, %v70, 0
  %v102 = vsel %vm91, %v71, 0
  %v105 = vsel %vm91, %v72, 0
  %v108 = vsel %vm91, %v73, 0
  %v111 = vsel %vm91, %v74, 0
  %v114 = vsel %vm91, %v75, 0
  %vm116 = vcmask 1041408
  %v118 = vsel %vm116, %v88, 0
  %120 = vmatprep.subr.bf16.mxu0 0
  %121 = vmatpush1.bf16.msra.mxu0 %v86
  %122 = vmatprep.subr.bf16.mxu0 0
  %123 = vmatpush1.bf16.msra.mxu0 %v87
  %124 = vmatprep.subr.bf16.mxu0 0
  %125 = vmatpush1.bf16.msra.mxu0 %v118
  %126 = vmatprep.subr.bf16.mxu0 0
  %127 = vmatpush1.bf16.msra.mxu0 0
  %128 = vmatprep.subr.bf16.mxu0 0
  %129 = vmatpush1.bf16.msra.mxu0 0
  %130 = vmatprep.subr.bf16.mxu0 0
  %131 = vmatpush1.bf16.msra.mxu0 0
  %132 = vmatprep.subr.bf16.mxu0 0
  %133 = vmatpush1.bf16.msra.mxu0 0
  %134 = vmatprep.subr.bf16.mxu0 0
  %135 = vmatpush1.bf16.msra.mxu0 0
  %136 = vmatprep.subr.bf16.mxu0 0
  %137 = vmatpush1.bf16.msra.mxu0 0
  %138 = vmatprep.subr.bf16.mxu0 0
  %139 = vmatpush1.bf16.msra.mxu0 0
  %140 = vmatprep.subr.bf16.mxu0 0
  %141 = vmatpush1.bf16.msra.mxu0 0
  %142 = vmatprep.subr.bf16.mxu0 0
  %143 = vmatpush1.bf16.msra.mxu0 0
  %144 = vmatprep.subr.bf16.mxu0 0
  %145 = vmatpush1.bf16.msra.mxu0 0
  %146 = vmatprep.subr.bf16.mxu0 0
  %147 = vmatpush1.bf16.msra.mxu0 0
  %148 = vmatprep.subr.bf16.mxu0 0
  %149 = vmatpush1.bf16.msra.mxu0 0
  %150 = vmatprep.subr.bf16.mxu0 0
  %151 = vmatpush1.bf16.msra.mxu0 0
  %152 = vmatprep.mubr.bf16.mxu0 0
  %153 = vmatmul.mubr.bf16.gmra.mrb[0].mxu0 %v93
  %v154 = vpop.f32.mrb[0].mxu0
  %v155 = vadd.f32 0.0, %v154
  %v156 = vpop.f32.mrb[0].mxu0
  %v157 = vpop.f32.mrb[0].mxu0
  %v158 = vadd.f32 0.0, %v157
  %v159 = vpop.f32.mrb[0].mxu0
  %160 = vmatprep.mubr.bf16.mxu0 0
  %161 = vmatmul.mubr.bf16.gmra.mrb[0].mxu0 %v96
  %v162 = vpop.f32.mrb[0].mxu0
  %v163 = vadd.f32 0.0, %v162
  %v164 = vpop.f32.mrb[0].mxu0
  %v165 = vpop.f32.mrb[0].mxu0
  %v166 = vadd.f32 0.0, %v165
  %v167 = vpop.f32.mrb[0].mxu0
  %168 = vmatprep.mubr.bf16.mxu0 0
  %169 = vmatmul.mubr.bf16.gmra.mrb[0].mxu0 %v99
  %v170 = vpop.f32.mrb[0].mxu0
  %v171 = vadd.f32 0.0, %v170
  %v172 = vpop.f32.mrb[0].mxu0
  %v173 = vpop.f32.mrb[0].mxu0
  %v174 = vadd.f32 0.0, %v173
  %v175 = vpop.f32.mrb[0].mxu0
  %176 = vmatprep.mubr.bf16.mxu0 0
  %177 = vmatmul.mubr.bf16.gmra.mrb[0].mxu0 %v102
  %v178 = vpop.f32.mrb[0].mxu0
  %v179 = vadd.f32 0.0, %v178
  %v180 = vpop.f32.mrb[0].mxu0
  %v181 = vpop.f32.mrb[0].mxu0
  %v182 = vadd.f32 0.0, %v181
  %v183 = vpop.f32.mrb[0].mxu0
  %184 = vmatprep.mubr.bf16.mxu0 0
  %185 = vmatmul.mubr.bf16.gmra.mrb[0].mxu0 %v105
  %v186 = vpop.f32.mrb[0].mxu0
  %v187 = vadd.f32 0.0, %v186
  %v188 = vpop.f32.mrb[0].mxu0
  %v189 = vpop.f32.mrb[0].mxu0
  %v190 = vadd.f32 0.0, %v189
  %v191 = vpop.f32.mrb[0].mxu0
  %192 = vmatprep.mubr.bf16.mxu0 0
  %193 = vmatmul.mubr.bf16.gmra.mrb[0].mxu0 %v108
  %v194 = vpop.f32.mrb[0].mxu0
  %v195 = vadd.f32 0.0, %v194
  %v196 = vpop.f32.mrb[0].mxu0
  %v197 = vpop.f32.mrb[0].mxu0
  %v198 = vadd.f32 0.0, %v197
  %v199 = vpop.f32.mrb[0].mxu0
  %200 = vmatprep.mubr.bf16.mxu0 0
  %201 = vmatmul.mubr.bf16.gmra.mrb[0].mxu0 %v111
  %v202 = vpop.f32.mrb[0].mxu0
  %v203 = vadd.f32 0.0, %v202
  %v204 = vpop.f32.mrb[0].mxu0
  %v205 = vpop.f32.mrb[0].mxu0
  %v206 = vadd.f32 0.0, %v205
  %v207 = vpop.f32.mrb[0].mxu0
  %208 = vmatprep.mubr.bf16.mxu0 0
  %209 = vmatmul.mubr.bf16.gmra.mrb[0].mxu0 %v114
  %v210 = vpop.f32.mrb[0].mxu0
  %v211 = vadd.f32 0.0, %v210
  %v212 = vpop.f32.mrb[0].mxu0
  %v213 = vpop.f32.mrb[0].mxu0
  %v214 = vadd.f32 0.0, %v213
  %v215 = vpop.f32.mrb[0].mxu0
  %216 = vdwg.mxu0
  %v217 = vld [vmem:[%s2] sm:$0x1]
  %v218 = vlaneseq
  %v219 = vshrl.u32 %v218, 7
  %v220 = vsub.s32 0, %v219
  %v221 = vrot.slane %v217, %v220
  %v222 = vmul.f32 %v155, %v221
  %v223 = vmul.f32 %v158, %v221
  %v224 = vmul.f32 %v163, %v221
  %v225 = vmul.f32 %v166, %v221
  %v226 = vmul.f32 %v171, %v221
  %v227 = vmul.f32 %v174, %v221
  %v228 = vmul.f32 %v179, %v221
  %v229 = vmul.f32 %v182, %v221
  %v230 = vmul.f32 %v187, %v221
  %v231 = vmul.f32 %v190, %v221
  %v232 = vmul.f32 %v195, %v221
  %v233 = vmul.f32 %v198, %v221
  %v234 = vmul.f32 %v203, %v221
  %v235 = vmul.f32 %v206, %v221
  %v236 = vmul.f32 %v211, %v221
  %v237 = vmul.f32 %v214, %v221
  %v238 = vld [vmem:[%s2 + $0x1] sm:$0x1]
  %v239 = vlaneseq
  %v240 = vshrl.u32 %v239, 7
  %v241 = vsub.s32 0, %v240
  %v242 = vrot.slane %v238, %v241
  %v243 = vadd.f32 %v222, %v242
  %v244 = vadd.f32 %v223, %v242
  %v245 = vadd.f32 %v224, %v242
  %v246 = vadd.f32 %v225, %v242
  %v247 = vadd.f32 %v226, %v242
  %v248 = vadd.f32 %v227, %v242
  %v249 = vadd.f32 %v228, %v242
  %v250 = vadd.f32 %v229, %v242
  %v251 = vadd.f32 %v230, %v242
  %v252 = vadd.f32 %v231, %v242
  %v253 = vadd.f32 %v232, %v242
  %v254 = vadd.f32 %v233, %v242
  %v255 = vadd.f32 %v234, %v242
  %v256 = vadd.f32 %v235, %v242
  %v257 = vadd.f32 %v236, %v242
  %v258 = vadd.f32 %v237, %v242
  %v259 = vpack.c.bf16 %v244, %v243
  %v260 = vpack.c.bf16 %v246, %v245
  %v261 = vpack.c.bf16 %v248, %v247
  %v262 = vpack.c.bf16 %v250, %v249
  %v263 = vpack.c.bf16 %v252, %v251
  %v264 = vpack.c.bf16 %v254, %v253
  %v265 = vpack.c.bf16 %v256, %v255
  %v266 = vpack.c.bf16 %v258, %v257
  %v275 = vunpack.c.l.b16 %v259
  %v276 = vunpack.c.h.b16 %v259
  %v277 = vunpack.c.l.b16 %v260
  %v278 = vunpack.c.h.b16 %v260
  %v279 = vunpack.c.l.b16 %v261
  %v280 = vunpack.c.h.b16 %v261
  %v281 = vunpack.c.l.b16 %v262
  %v282 = vunpack.c.h.b16 %v262
  %v283 = vunpack.c.l.b16 %v263
  %v284 = vunpack.c.h.b16 %v263
  %v285 = vunpack.c.l.b16 %v264
  %v286 = vunpack.c.h.b16 %v264
  %v287 = vunpack.c.l.b16 %v265
  %v288 = vunpack.c.h.b16 %v265
  %v289 = vunpack.c.l.b16 %v266
  %v290 = vunpack.c.h.b16 %v266
  %v291 = vpack.c.b16 %v275, %v275
  %v292 = vpack.c.b16 %v276, %v276
  %v293 = vpack.c.b16 %v277, %v277
  %v294 = vpack.c.b16 %v278, %v278
  %v295 = vpack.c.b16 %v279, %v279
  %v296 = vpack.c.b16 %v280, %v280
  %v297 = vpack.c.b16 %v281, %v281
  %v298 = vpack.c.b16 %v282, %v282
  %v299 = vpack.c.b16 %v283, %v283
  %v300 = vpack.c.b16 %v284, %v284
  %v301 = vpack.c.b16 %v285, %v285
  %v302 = vpack.c.b16 %v286, %v286
  %v303 = vpack.c.b16 %v287, %v287
  %v304 = vpack.c.b16 %v288, %v288
  %v305 = vpack.c.b16 %v289, %v289
  %v306 = vpack.c.b16 %v290, %v290
  %vm323 = vcmask 60416
  %324 = vst.msk [vmem:[%s3] sm:$0xf] %vm323, %v291
  %325 = vst.msk [vmem:[%s3 + $0x4] sm:$0xf] %vm323, %v292
  %326 = vst.msk [vmem:[%s3 + $0x8] sm:$0xf] %vm323, %v293
  %327 = vst.msk [vmem:[%s3 + $0xc] sm:$0xf] %vm323, %v294
  %328 = vst.msk [vmem:[%s3 + $0x10] sm:$0xf] %vm323, %v295
  %329 = vst.msk [vmem:[%s3 + $0x14] sm:$0xf] %vm323, %v296
  %330 = vst.msk [vmem:[%s3 + $0x18] sm:$0xf] %vm323, %v297
  %331 = vst.msk [vmem:[%s3 + $0x1c] sm:$0xf] %vm323, %v298
  %332 = vst.msk [vmem:[%s3 + $0x20] sm:$0xf] %vm323, %v299
  %333 = vst.msk [vmem:[%s3 + $0x24] sm:$0xf] %vm323, %v300
  %334 = vst.msk [vmem:[%s3 + $0x28] sm:$0xf] %vm323, %v301
  %335 = vst.msk [vmem:[%s3 + $0x2c] sm:$0xf] %vm323, %v302
  %336 = vst.msk [vmem:[%s3 + $0x30] sm:$0xf] %vm323, %v303
  %337 = vst.msk [vmem:[%s3 + $0x34] sm:$0xf] %vm323, %v304
  %338 = vst.msk [vmem:[%s3 + $0x38] sm:$0xf] %vm323, %v305
  %339 = vst.msk [vmem:[%s3 + $0x3c] sm:$0xf] %vm323, %v306
  // Predicated region
  $region14: #{_lambda_.22} parent=0 // pred_check
    _
  $region15: #{_lambda_.22} parent=0 // pred_check_branch
    %341 = sbr.rel (0) target = $region17
  $region16: #{_lambda_.22} parent=0 // pred_region
    _
  $region17: #{_lambda_.22} parent=0 // pred_fallthru
    _
  // Predicated region
  $region18: #{_lambda_.22} parent=0 // pred_check
    _
  $region19: #{_lambda_.22} parent=0 // pred_check_branch
    %343 = sbr.rel (0) target = $region21
  $region20: #{_lambda_.22} parent=0 // pred_region
    _
  $region21: #{_lambda_.22} parent=0 // pred_fallthru
    _

// kernel: _lambda_.23
$region0: #{_lambda_.23}
  #allocation0 [shape = 'u32[]', space=smem, size = 0x4, offset = 0x4, fixed_abs, tag = 'smem constant byte address 0x4 - core index']
  #allocation1 [shape = 'u32[144,128]{1,0:T(1,128)}', space=vmem, size = 0x12000, scoped, tag = 'internal scratch']
  %s0 = inlined_call_operand.vmem [shape: bf16[32,72], index: 0, kind: input, shape index: {}]
  %s1 = inlined_call_operand.vmem [shape: bf16[72,8], index: 1, kind: input, shape index: {}]
  %s2 = inlined_call_operand.vmem [shape: f32[2,8], index: 2, kind: input, shape index: {}]
  %s3 = inlined_call_operand.vmem [shape: bf16[32,8], index: 3, kind: output, shape index: {}]
  %s4 = sld [smem:[#allocation0]]
  $region22: #{_lambda_.23} parent=0
    _
  %s6 = ssub.s32 1, %s4
  %s7 = scalar_select 0, %s6, %s4
  // Predicated region
  $region2: #{_lambda_.23} parent=0 // pred_check
    _
  $region3: #{_lambda_.23} parent=0 // pred_check_branch
    %9 = sbr.rel (0) target = $region5
  $region4: #{_lambda_.23} parent=0 // pred_region
    _
  $region5: #{_lambda_.23} parent=0 // pred_fallthru
    _
  // Predicated region
  $region6: #{_lambda_.23} parent=0 // pred_check
    _
  $region7: #{_lambda_.23} parent=0 // pred_check_branch
    %11 = sbr.rel (0) target = $region9
  $region8: #{_lambda_.23} parent=0 // pred_region
    _
  $region9: #{_lambda_.23} parent=0 // pred_fallthru
    _
  // Predicated region
  $region10: #{_lambda_.23} parent=0 // pred_check
    _
  $region11: #{_lambda_.23} parent=0 // pred_check_branch
    %13 = sbr.rel (0) target = $region13
  $region12: #{_lambda_.23} parent=0 // pred_region
    _
  $region13: #{_lambda_.23} parent=0 // pred_fallthru
    _
  %v15 = vld [vmem:[%s0] sm:$0xf]
  %v16 = vld [vmem:[%s0 + $0x4] sm:$0xf]
  %v17 = vld [vmem:[%s0 + $0x8] sm:$0xf]
  %v18 = vld [vmem:[%s0 + $0xc] sm:$0xf]
  %v19 = vmax.bf16 %v15, 0
  %v20 = vmax.bf16 %v16, 0
  %v21 = vmax.bf16 %v17, 0
  %v22 = vmax.bf16 %v18, 0
  %v23 = vld [vmem:[%s1] sm:$0xf]
  %v24 = vld [vmem:[%s1 + $0x4] sm:$0xf]
  %v25 = vld [vmem:[%s1 + $0x8] sm:$0xf]
  %v26 = vld [vmem:[%s1 + $0xc] sm:$0xf]
  %v27 = vld [vmem:[%s1 + $0x10] sm:$0xf]
  %v28 = vld [vmem:[%s1 + $0x14] sm:$0xf]
  %v29 = vld [vmem:[%s1 + $0x18] sm:$0xf]
  %v30 = vld [vmem:[%s1 + $0x1c] sm:$0xf]
  %v31 = vld [vmem:[%s1 + $0x20] sm:$0xf]
  %v36 = vunpack.c.l.b16 %v19
  %v37 = vunpack.c.l.b16 %v20
  %v38 = vunpack.c.l.b16 %v21
  %v39 = vunpack.c.l.b16 %v22
  %v40 = vpack.c.b16 %v37, %v36
  %v41 = vpack.c.b16 %v39, %v38
  %v51 = vunpack.c.l.b16 %v23
  %v52 = vunpack.c.l.b16 %v24
  %v53 = vunpack.c.l.b16 %v25
  %v54 = vunpack.c.l.b16 %v26
  %v55 = vunpack.c.l.b16 %v27
  %v56 = vunpack.c.l.b16 %v28
  %v57 = vunpack.c.l.b16 %v29
  %v58 = vunpack.c.l.b16 %v30
  %v59 = vunpack.c.l.b16 %v31
  %v60 = vpack.c.b16 %v52, %v51
  %v61 = vpack.c.b16 %v54, %v53
  %v62 = vpack.c.b16 %v56, %v55
  %v63 = vpack.c.b16 %v58, %v57
  %v64 = vpack.c.b16 %v59, %v59
  %vm69 = vcmask 588800
  %v71 = vsel %vm69, %v40, 0
  %v74 = vsel %vm69, %v41, 0
  %vm76 = vcmask 1043456
  %v78 = vsel %vm76, %v64, 0
  %80 = vmatprep.subr.bf16.mxu0 0
  %81 = vmatpush1.bf16.msra.mxu0 %v60
  %82 = vmatprep.subr.bf16.mxu0 0
  %83 = vmatpush1.bf16.msra.mxu0 %v61
  %84 = vmatprep.subr.bf16.mxu0 0
  %85 = vmatpush1.bf16.msra.mxu0 %v62
  %86 = vmatprep.subr.bf16.mxu0 0
  %87 = vmatpush1.bf16.msra.mxu0 %v63
  %88 = vmatprep.subr.bf16.mxu0 0
  %89 = vmatpush1.bf16.msra.mxu0 %v78
  %90 = vmatprep.subr.bf16.mxu0 0
  %91 = vmatpush1.bf16.msra.mxu0 0
  %92 = vmatprep.subr.bf16.mxu0 0
  %93 = vmatpush1.bf16.msra.mxu0 0
  %94 = vmatprep.subr.bf16.mxu0 0
  %95 = vmatpush1.bf16.msra.mxu0 0
  %96 = vmatprep.subr.bf16.mxu0 0
  %97 = vmatpush1.bf16.msra.mxu0 0
  %98 = vmatprep.subr.bf16.mxu0 0
  %99 = vmatpush1.bf16.msra.mxu0 0
  %100 = vmatprep.subr.bf16.mxu0 0
  %101 = vmatpush1.bf16.msra.mxu0 0
  %102 = vmatprep.subr.bf16.mxu0 0
  %103 = vmatpush1.bf16.msra.mxu0 0
  %104 = vmatprep.subr.bf16.mxu0 0
  %105 = vmatpush1.bf16.msra.mxu0 0
  %106 = vmatprep.subr.bf16.mxu0 0
  %107 = vmatpush1.bf16.msra.mxu0 0
  %108 = vmatprep.subr.bf16.mxu0 0
  %109 = vmatpush1.bf16.msra.mxu0 0
  %110 = vmatprep.subr.bf16.mxu0 0
  %111 = vmatpush1.bf16.msra.mxu0 0
  %112 = vmatprep.mubr.bf16.mxu0 0
  %113 = vmatmul.mubr.bf16.gmra.mrb[0].mxu0 %v71
  %v114 = vpop.f32.mrb[0].mxu0
  %v115 = vadd.f32 0.0, %v114
  %v116 = vpop.f32.mrb[0].mxu0
  %v117 = vpop.f32.mrb[0].mxu0
  %v118 = vadd.f32 0.0, %v117
  %v119 = vpop.f32.mrb[0].mxu0
  %120 = vmatprep.mubr.bf16.mxu0 0
  %121 = vmatmul.mubr.bf16.gmra.mrb[0].mxu0 %v74
  %v122 = vpop.f32.mrb[0].mxu0
  %v123 = vadd.f32 0.0, %v122
  %v124 = vpop.f32.mrb[0].mxu0
  %v125 = vpop.f32.mrb[0].mxu0
  %v126 = vadd.f32 0.0, %v125
  %v127 = vpop.f32.mrb[0].mxu0
  %128 = vdwg.mxu0
  %v129 = vld [vmem:[%s2] sm:$0x1]
  %v130 = vlaneseq
  %v131 = vshrl.u32 %v130, 7
  %v132 = vsub.s32 0, %v131
  %v133 = vrot.slane %v129, %v132
  %v134 = vmul.f32 %v115, %v133
  %v135 = vmul.f32 %v118, %v133
  %v136 = vmul.f32 %v123, %v133
  %v137 = vmul.f32 %v126, %v133
  %v138 = vld [vmem:[%s2 + $0x1] sm:$0x1]
  %v139 = vlaneseq
  %v140 = vshrl.u32 %v139, 7
  %v141 = vsub.s32 0, %v140
  %v142 = vrot.slane %v138, %v141
  %v143 = vadd.f32 %v134, %v142
  %v144 = vadd.f32 %v135, %v142
  %v145 = vadd.f32 %v136, %v142
  %v146 = vadd.f32 %v137, %v142
  %v147 = vpack.c.bf16 %v144, %v143
  %v148 = vpack.c.bf16 %v146, %v145
  %v151 = vunpack.c.l.b16 %v147
  %v152 = vunpack.c.h.b16 %v147
  %v153 = vunpack.c.l.b16 %v148
  %v154 = vunpack.c.h.b16 %v148
  %v155 = vpack.c.b16 %v151, %v151
  %v156 = vpack.c.b16 %v152, %v152
  %v157 = vpack.c.b16 %v153, %v153
  %v158 = vpack.c.b16 %v154, %v154
  %vm163 = vcmask 60416
  %164 = vst.msk [vmem:[%s3] sm:$0xf] %vm163, %v155
  %165 = vst.msk [vmem:[%s3 + $0x4] sm:$0xf] %vm163, %v156
  %166 = vst.msk [vmem:[%s3 + $0x8] sm:$0xf] %vm163, %v157
  %167 = vst.msk [vmem:[%s3 + $0xc] sm:$0xf] %vm163, %v158
  // Predicated region
  $region14: #{_lambda_.23} parent=0 // pred_check
    _
  $region15: #{_lambda_.23} parent=0 // pred_check_branch
    %169 = sbr.rel (0) target = $region17
  $region16: #{_lambda_.23} parent=0 // pred_region
    _
  $region17: #{_lambda_.23} parent=0 // pred_fallthru
    _
  // Predicated region
  $region18: #{_lambda_.23} parent=0 // pred_check
    _
  $region19: #{_lambda_.23} parent=0 // pred_check_branch
    %171 = sbr.rel (0) target = $region21
  $region20: #{_lambda_.23} parent=0 // pred_region
    _
  $region21: #{_lambda_.23} parent=0 // pred_fallthru
    _

// kernel: _lambda_.26
$region0: #{_lambda_.26}
  #allocation0 [shape = 'u32[]', space=smem, size = 0x4, offset = 0x4, fixed_abs, tag = 'smem constant byte address 0x4 - core index']
  #allocation1 [shape = 'u32[144,128]{1,0:T(1,128)}', space=vmem, size = 0x12000, scoped, tag = 'internal scratch']
  %s0 = inlined_call_operand.vmem [shape: bf16[32,8], index: 0, kind: input, shape index: {}]
  %s1 = inlined_call_operand.vmem [shape: bf16[8,8], index: 1, kind: input, shape index: {}]
  %s2 = inlined_call_operand.vmem [shape: f32[2,8], index: 2, kind: input, shape index: {}]
  %s3 = inlined_call_operand.vmem [shape: bf16[32,8], index: 3, kind: output, shape index: {}]
  %s4 = sld [smem:[#allocation0]]
  $region22: #{_lambda_.26} parent=0
    _
  %s6 = ssub.s32 1, %s4
  %s7 = scalar_select 0, %s6, %s4
  // Predicated region
  $region2: #{_lambda_.26} parent=0 // pred_check
    _
  $region3: #{_lambda_.26} parent=0 // pred_check_branch
    %9 = sbr.rel (0) target = $region5
  $region4: #{_lambda_.26} parent=0 // pred_region
    _
  $region5: #{_lambda_.26} parent=0 // pred_fallthru
    _
  // Predicated region
  $region6: #{_lambda_.26} parent=0 // pred_check
    _
  $region7: #{_lambda_.26} parent=0 // pred_check_branch
    %11 = sbr.rel (0) target = $region9
  $region8: #{_lambda_.26} parent=0 // pred_region
    _
  $region9: #{_lambda_.26} parent=0 // pred_fallthru
    _
  // Predicated region
  $region10: #{_lambda_.26} parent=0 // pred_check
    _
  $region11: #{_lambda_.26} parent=0 // pred_check_branch
    %13 = sbr.rel (0) target = $region13
  $region12: #{_lambda_.26} parent=0 // pred_region
    _
  $region13: #{_lambda_.26} parent=0 // pred_fallthru
    _
  %v15 = vld [vmem:[%s0] sm:$0xf]
  %v16 = vld [vmem:[%s0 + $0x4] sm:$0xf]
  %v17 = vld [vmem:[%s0 + $0x8] sm:$0xf]
  %v18 = vld [vmem:[%s0 + $0xc] sm:$0xf]
  %v19 = vmax.bf16 %v15, 0
  %v20 = vmax.bf16 %v16, 0
  %v21 = vmax.bf16 %v17, 0
  %v22 = vmax.bf16 %v18, 0
  %v23 = vld [vmem:[%s1] sm:$0xf]
  %v28 = vunpack.c.l.b16 %v19
  %v29 = vunpack.c.l.b16 %v20
  %v30 = vunpack.c.l.b16 %v21
  %v31 = vunpack.c.l.b16 %v22
  %v32 = vpack.c.b16 %v29, %v28
  %v33 = vpack.c.b16 %v31, %v30
  %vm34 = vcmask 64512
  %v36 = vsel %vm34, %v32, 0
  %v39 = vsel %vm34, %v33, 0
  %vm41 = vcmask 1043456
  %v43 = vsel %vm41, %v23, 0
  %45 = vmatprep.subr.bf16.mxu0 0
  %46 = vmatpush1.bf16.msra.mxu0 %v43
  %47 = vmatprep.subr.bf16.mxu0 0
  %48 = vmatpush1.bf16.msra.mxu0 0
  %49 = vmatprep.subr.bf16.mxu0 0
  %50 = vmatpush1.bf16.msra.mxu0 0
  %51 = vmatprep.subr.bf16.mxu0 0
  %52 = vmatpush1.bf16.msra.mxu0 0
  %53 = vmatprep.subr.bf16.mxu0 0
  %54 = vmatpush1.bf16.msra.mxu0 0
  %55 = vmatprep.subr.bf16.mxu0 0
  %56 = vmatpush1.bf16.msra.mxu0 0
  %57 = vmatprep.subr.bf16.mxu0 0
  %58 = vmatpush1.bf16.msra.mxu0 0
  %59 = vmatprep.subr.bf16.mxu0 0
  %60 = vmatpush1.bf16.msra.mxu0 0
  %61 = vmatprep.subr.bf16.mxu0 0
  %62 = vmatpush1.bf16.msra.mxu0 0
  %63 = vmatprep.subr.bf16.mxu0 0
  %64 = vmatpush1.bf16.msra.mxu0 0
  %65 = vmatprep.subr.bf16.mxu0 0
  %66 = vmatpush1.bf16.msra.mxu0 0
  %67 = vmatprep.subr.bf16.mxu0 0
  %68 = vmatpush1.bf16.msra.mxu0 0
  %69 = vmatprep.subr.bf16.mxu0 0
  %70 = vmatpush1.bf16.msra.mxu0 0
  %71 = vmatprep.subr.bf16.mxu0 0
  %72 = vmatpush1.bf16.msra.mxu0 0
  %73 = vmatprep.subr.bf16.mxu0 0
  %74 = vmatpush1.bf16.msra.mxu0 0
  %75 = vmatprep.subr.bf16.mxu0 0
  %76 = vmatpush1.bf16.msra.mxu0 0
  %77 = vmatprep.mubr.bf16.mxu0 0
  %78 = vmatmul.mubr.bf16.gmra.mrb[0].mxu0 %v36
  %v79 = vpop.f32.mrb[0].mxu0
  %v80 = vadd.f32 0.0, %v79
  %v81 = vpop.f32.mrb[0].mxu0
  %v82 = vpop.f32.mrb[0].mxu0
  %v83 = vadd.f32 0.0, %v82
  %v84 = vpop.f32.mrb[0].mxu0
  %85 = vmatprep.mubr.bf16.mxu0 0
  %86 = vmatmul.mubr.bf16.gmra.mrb[0].mxu0 %v39
  %v87 = vpop.f32.mrb[0].mxu0
  %v88 = vadd.f32 0.0, %v87
  %v89 = vpop.f32.mrb[0].mxu0
  %v90 = vpop.f32.mrb[0].mxu0
  %v91 = vadd.f32 0.0, %v90
  %v92 = vpop.f32.mrb[0].mxu0
  %93 = vdwg.mxu0
  %v94 = vld [vmem:[%s2] sm:$0x1]
  %v95 = vlaneseq
  %v96 = vshrl.u32 %v95, 7
  %v97 = vsub.s32 0, %v96
  %v98 = vrot.slane %v94, %v97
  %v99 = vmul.f32 %v80, %v98
  %v100 = vmul.f32 %v83, %v98
  %v101 = vmul.f32 %v88, %v98
  %v102 = vmul.f32 %v91, %v98
  %v103 = vld [vmem:[%s2 + $0x1] sm:$0x1]
  %v104 = vlaneseq
  %v105 = vshrl.u32 %v104, 7
  %v106 = vsub.s32 0, %v105
  %v107 = vrot.slane %v103, %v106
  %v108 = vadd.f32 %v99, %v107
  %v109 = vadd.f32 %v100, %v107
  %v110 = vadd.f32 %v101, %v107
  %v111 = vadd.f32 %v102, %v107
  %v112 = vpack.c.bf16 %v109, %v108
  %v113 = vpack.c.bf16 %v111, %v110
  %v116 = vunpack.c.l.b16 %v112
  %v117 = vunpack.c.h.b16 %v112
  %v118 = vunpack.c.l.b16 %v113
  %v119 = vunpack.c.h.b16 %v113
  %v120 = vpack.c.b16 %v116, %v116
  %v121 = vpack.c.b16 %v117, %v117
  %v122 = vpack.c.b16 %v118, %v118
  %v123 = vpack.c.b16 %v119, %v119
  %vm128 = vcmask 60416
  %129 = vst.msk [vmem:[%s3] sm:$0xf] %vm128, %v120
  %130 = vst.msk [vmem:[%s3 + $0x4] sm:$0xf] %vm128, %v121
  %131 = vst.msk [vmem:[%s3 + $0x8] sm:$0xf] %vm128, %v122
  %132 = vst.msk [vmem:[%s3 + $0xc] sm:$0xf] %vm128, %v123
  // Predicated region
  $region14: #{_lambda_.26} parent=0 // pred_check
    _
  $region15: #{_lambda_.26} parent=0 // pred_check_branch
    %134 = sbr.rel (0) target = $region17
  $region16: #{_lambda_.26} parent=0 // pred_region
    _
  $region17: #{_lambda_.26} parent=0 // pred_fallthru
    _
  // Predicated region
  $region18: #{_lambda_.26} parent=0 // pred_check
    _
  $region19: #{_lambda_.26} parent=0 // pred_check_branch
    %136 = sbr.rel (0) target = $region21
  $region20: #{_lambda_.26} parent=0 // pred_region
    _
  $region21: #{_lambda_.26} parent=0 // pred_fallthru
    _

// kernel: _lambda_.27
$region0: #{_lambda_.27}
  #allocation0 [shape = 'u32[]', space=smem, size = 0x4, offset = 0x4, fixed_abs, tag = 'smem constant byte address 0x4 - core index']
  #allocation1 [shape = 'u32[144,128]{1,0:T(1,128)}', space=vmem, size = 0x12000, scoped, tag = 'internal scratch']
  %s0 = inlined_call_operand.vmem [shape: bf16[2,6,6,8], index: 0, kind: input, shape index: {}]
  %s1 = inlined_call_operand.vmem [shape: f32[1,4,4,1], index: 1, kind: input, shape index: {}]
  %s2 = inlined_call_operand.vmem [shape: bf16[2,4,4,8], index: 2, kind: output, shape index: {}]
  %s3 = sld [smem:[#allocation0]]
  $region41: #{_lambda_.27} parent=0
    _
  %s5 = ssub.s32 1, %s3
  %s6 = scalar_select 0, %s5, %s3
  loop: start=0, step=1, limit=4
  $region2: #{_lambda_.27} parent=0 // loop_pre_header
    _
  $region3: #{_lambda_.27} parent=0 // loop_header
    %s8 = sphi 0, %s12
    %p9 = scmp.ge.s32.totalorder %s8, 4
    %s18 = sphi 0, %s20
    %s21 = sphi 0, %s18
    %s22 = sphi 0, %s21
    %s38 = sphi 0, %s22
    %s42 = sphi 0, %s42
    %s44 = sphi 0, %s42
    %s45 = sphi 0, %s44
    %s59 = sphi 0, %s45
    %s65 = sphi 0, %s67
    %s68 = sphi 0, %s65
    %s69 = sphi 0, %s68
    %s85 = sphi 0, %s69
  $region4: #{_lambda_.27} parent=0 // loop_header_branch
    %11 = sbr.rel (%p9) target = $region8
  $region5: #{_lambda_.27} parent=0 // loop_body
    %s13 = ssub.s32 %s8, 1
    %s14 = ssub.s32 %s8, 2
    %s15 = sadd.s32 %s8, 1
    %s16 = ssub.s32 %s8, %s15
    %p17 = scmp.eq.s32.totalorder %s16, 0
    %s19 = sadd.s32 %s18, 1
    %s20 = scalar_select %p17, %s18, %s19
    %p23 = pneg %p17
    %p24 = scmp.eq.s32.totalorder %s8, 1
    %p25 = por %p23, %p24
    %p26 = scmp.ne.s32.totalorder %s18, %s21
    %p27 = scmp.eq.s32.totalorder %s8, 0
    %p28 = por %p26, %p27
    %p29 = scmp.ne.s32.totalorder %s18, %s21
    %p30 = scmp.eq.s32.totalorder %s13, 1
    %p31 = por %p29, %p30
    %p32 = scmp.ne.s32.totalorder %s21, %s22
    %p33 = scmp.eq.s32.totalorder %s13, 0
    %p34 = por %p32, %p33
    %p35 = scmp.ne.s32.totalorder %s21, %s22
    %p36 = scmp.eq.s32.totalorder %s14, 1
    %p37 = por %p35, %p36
    %p39 = scmp.ne.s32.totalorder %s22, %s38
    %p40 = scmp.eq.s32.totalorder %s14, 0
    %p41 = por %p39, %p40
    %s43 = sadd.s32 %s42, 1
    %p46 = scmp.eq.s32.totalorder %s8, 1
    %p47 = scmp.ne.s32.totalorder %s42, %s44
    %p48 = scmp.eq.s32.totalorder %s8, 0
    %p49 = por %p47, %p48
    %p50 = scmp.ne.s32.totalorder %s42, %s44
    %p51 = scmp.eq.s32.totalorder %s13, 1
    %p52 = por %p50, %p51
    %p53 = scmp.ne.s32.totalorder %s44, %s45
    %p54 = scmp.eq.s32.totalorder %s13, 0
    %p55 = por %p53, %p54
    %p56 = scmp.ne.s32.totalorder %s44, %s45
    %p57 = scmp.eq.s32.totalorder %s14, 1
    %p58 = por %p56, %p57
    %p60 = scmp.ne.s32.totalorder %s45, %s59
    %p61 = scmp.eq.s32.totalorder %s14, 0
    %p62 = por %p60, %p61
    %s63 = ssub.s32 %s8, %s15
    %p64 = scmp.eq.s32.totalorder %s63, 0
    %s66 = sadd.s32 %s65, 1
    %s67 = scalar_select %p64, %s65, %s66
    %p70 = pneg %p64
    %p71 = scmp.eq.s32.totalorder %s8, 1
    %p72 = por %p70, %p71
    %p73 = scmp.ne.s32.totalorder %s65, %s68
    %p74 = scmp.eq.s32.totalorder %s8, 0
    %p75 = por %p73, %p74
    %p76 = scmp.ne.s32.totalorder %s65, %s68
    %p77 = scmp.eq.s32.totalorder %s13, 1
    %p78 = por %p76, %p77
    %p79 = scmp.ne.s32.totalorder %s68, %s69
    %p80 = scmp.eq.s32.totalorder %s13, 0
    %p81 = por %p79, %p80
    %p82 = scmp.ne.s32.totalorder %s68, %s69
    %p83 = scmp.eq.s32.totalorder %s14, 1
    %p84 = por %p82, %p83
    %p86 = scmp.ne.s32.totalorder %s69, %s85
    %p87 = scmp.eq.s32.totalorder %s14, 0
    %p88 = por %p86, %p87
    %p89 = scmp.le.s32.totalorder 1, %s8
    %p90 = scmp.lt.s32.totalorder %s8, 3
    %p91 = pnand %p89, %p90
    %p92 = pneg %p91
    // Predicated region
    $region9: #{_lambda_.27} parent=5 // pred_check
      _
    $region10: #{_lambda_.27} parent=5 // pred_check_branch
      %94 = sbr.rel (%p91) target = $region12
    $region11: #{_lambda_.27} parent=5 // pred_region
      %s95 = ssub.s32 %s8, 1
      // Predicated region
      $region13: #{_lambda_.27} parent=11 // pred_check
        %p96 = pneg %p55
      $region14: #{_lambda_.27} parent=11 // pred_check_branch
        %98 = sbr.rel (%p96) target = $region16
      $region15: #{_lambda_.27} parent=11 // pred_region
        _
      $region16: #{_lambda_.27} parent=11 // pred_fallthru
        _
    $region12: #{_lambda_.27} parent=5 // pred_fallthru
      _
    %p99 = scmp.lt.s32.totalorder %s8, 2
    // Predicated region
    $region17: #{_lambda_.27} parent=5 // pred_check
      %p100 = pneg %p99
    $region18: #{_lambda_.27} parent=5 // pred_check_branch
      %102 = sbr.rel (%p100) target = $region20
    $region19: #{_lambda_.27} parent=5 // pred_region
      // Predicated region
      $region21: #{_lambda_.27} parent=19 // pred_check
        %p103 = pneg %p28
      $region22: #{_lambda_.27} parent=19 // pred_check_branch
        %105 = sbr.rel (%p103) target = $region24
      $region23: #{_lambda_.27} parent=19 // pred_region
        %p106 = scmp.lt.s32.totalorder %s8, 1
        %s107 = scalar_select %p106, %s8, 1
        %s108 = smul.addr %s107, 6
        %s109 = smul.addr %s108, 4
        %s110 = scalar_lea.vmem %s0, %s109
      $region24: #{_lambda_.27} parent=19 // pred_fallthru
        _
    $region20: #{_lambda_.27} parent=5 // pred_fallthru
      _
    %p111 = scmp.le.s32.totalorder 1, %s8
    %p112 = scmp.lt.s32.totalorder %s8, 3
    %p113 = pnand %p111, %p112
    %p114 = pneg %p113
    // Predicated region
    $region25: #{_lambda_.27} parent=5 // pred_check
      _
    $region26: #{_lambda_.27} parent=5 // pred_check_branch
      %116 = sbr.rel (%p113) target = $region28
    $region27: #{_lambda_.27} parent=5 // pred_region
      %s117 = ssub.s32 %s8, 1
      %p118 = scmp.lt.s32.totalorder %s13, 1
      %s119 = scalar_select %p118, %s13, 1
      %s120 = smul.addr %s119, 6
      %s121 = smul.addr %s120, 4
      %s122 = scalar_lea.vmem %s0, %s121
      %p123 = pneg %p34
      %p124 = pneg %p31
      %p125 = pneg %p55
      %p126 = pneg %p52
      %p127 = pneg %p81
      %p128 = pneg %p78
      %p129 = scmp.lt.s32.totalorder %s13, 1
      %s130 = scalar_select %p129, %s13, 1
      %s131 = smul.addr %s130, 4
      %s132 = smul.addr %s131, 2
      %s133 = scalar_lea.vmem %s2, %s132
      %p134 = scmp.lt.s32.totalorder %s13, 1
      %s135 = scalar_select %p134, %s13, 1
      %s136 = smul.addr %s135, 6
      %s137 = smul.addr %s136, 4
      %s138 = scalar_lea.vmem %s0, %s137
      %p139 = scmp.lt.s32.totalorder %s13, 1
      %s140 = scalar_select %p139, %s13, 1
      %s141 = smul.addr %s140, 4
      %s142 = smul.addr %s141, 2
      %s143 = scalar_lea.vmem %s2, %s142
      %v144 = vld [vmem:[%s138] sm:$0x7]
      %v145 = vld [vmem:[%s138 + $0x4] sm:$0x7]
      %v146 = vld [vmem:[%s138 + $0x8] sm:$0x7]
      %v147 = vld [vmem:[%s138 + $0xc] sm:$0x7]
      %v148 = vld [vmem:[%s138 + $0x10] sm:$0x7]
      %v149 = vld [vmem:[%s138 + $0x14] sm:$0x7]
      %v150 = vunpack.c.l.bf16 %v144
      %v151 = vunpack.c.l.bf16 %v145
      %v152 = vunpack.c.l.bf16 %v146
      %v153 = vunpack.c.l.bf16 %v147
      %v154 = vunpack.c.l.bf16 %v148
      %v155 = vunpack.c.l.bf16 %v149
      %v160 = vrot.slane %v150, 1
      %v161 = vrot.slane %v151, 1
      %v162 = vrot.slane %v152, 1
      %v163 = vrot.slane %v153, 1
      %v168 = vadd.f32 %v150, %v160
      %v169 = vadd.f32 %v151, %v161
      %v170 = vadd.f32 %v152, %v162
      %v171 = vadd.f32 %v153, %v163
      %v172 = vrot.slane %v150, 2
      %v173 = vrot.slane %v151, 2
      %v174 = vrot.slane %v152, 2
      %v175 = vrot.slane %v153, 2
      %v180 = vadd.f32 %v168, %v172
      %v181 = vadd.f32 %v169, %v173
      %v182 = vadd.f32 %v170, %v174
      %v183 = vadd.f32 %v171, %v175
      %v184 = vadd.f32 %v180, %v151
      %v185 = vadd.f32 %v181, %v152
      %v186 = vadd.f32 %v182, %v153
      %v187 = vadd.f32 %v183, %v154
      %v189 = vrot.slane %v154, 1
      %v191 = vadd.f32 %v184, %v161
      %v192 = vadd.f32 %v185, %v162
      %v193 = vadd.f32 %v186, %v163
      %v194 = vadd.f32 %v187, %v189
      %v195 = vrot.slane %v154, 2
      %v197 = vadd.f32 %v191, %v173
      %v198 = vadd.f32 %v192, %v174
      %v199 = vadd.f32 %v193, %v175
      %v200 = vadd.f32 %v194, %v195
      %v201 = vadd.f32 %v197, %v152
      %v202 = vadd.f32 %v198, %v153
      %v203 = vadd.f32 %v199, %v154
      %v204 = vadd.f32 %v200, %v155
      %v206 = vrot.slane %v155, 1
      %v208 = vadd.f32 %v201, %v162
      %v209 = vadd.f32 %v202, %v163
      %v210 = vadd.f32 %v203, %v189
      %v211 = vadd.f32 %v204, %v206
      %v212 = vrot.slane %v155, 2
      %v214 = vadd.f32 %v208, %v174
      %v215 = vadd.f32 %v209, %v175
      %v216 = vadd.f32 %v210, %v195
      %v217 = vadd.f32 %v211, %v212
      %v218 = vld [vmem:[%s1] sm:$0xf]
      %v219 = vld [vmem:[%s1 + $0x4] sm:$0xf]
      %v220 = vld [vmem:[%s1 + $0x8] sm:$0xf]
      %v221 = vld [vmem:[%s1 + $0xc] sm:$0xf]
      %223 = vset.pattern.permute.xlu0 0
      %224 = vperm.xlu0 %223, %v218
      %v225 = vpop.permute.xlu0 %224
      %228 = vset.pattern.permute.xlu0 0
      %229 = vperm.xlu0 %228, %v219
      %v230 = vpop.permute.xlu0 %229
      %233 = vset.pattern.permute.xlu0 0
      %234 = vperm.xlu0 %233, %v220
      %v235 = vpop.permute.xlu0 %234
      %238 = vset.pattern.permute.xlu0 0
      %239 = vperm.xlu0 %238, %v221
      %v240 = vpop.permute.xlu0 %239
      %v242 = vmul.f32 %v214, %v225
      %v243 = vmul.f32 %v215, %v230
      %v244 = vmul.f32 %v216, %v235
      %v245 = vmul.f32 %v217, %v240
      %v246 = vpack.c.bf16 %v242, %v242
      %v247 = vpack.c.bf16 %v243, %v243
      %v248 = vpack.c.bf16 %v244, %v244
      %v249 = vpack.c.bf16 %v245, %v245
      %vm250 = vcmask 58368
      %251 = vst.msk [vmem:[%s143] sm:$0x3] %vm250, %v246
      %252 = vst.msk [vmem:[%s143 + $0x2] sm:$0x3] %vm250, %v247
      %253 = vst.msk [vmem:[%s143 + $0x4] sm:$0x3] %vm250, %v248
      %254 = vst.msk [vmem:[%s143 + $0x6] sm:$0x3] %vm250, %v249
      %p255 = scmp.lt.s32.totalorder %s13, 1
      %s256 = scalar_select %p255, %s13, 1
      %s257 = smul.addr %s256, 4
      %s258 = smul.addr %s257, 2
      %s259 = scalar_lea.vmem %s2, %s258
      // Predicated region
      $region29: #{_lambda_.27} parent=27 // pred_check
        %p260 = pneg %p78
      $region30: #{_lambda_.27} parent=27 // pred_check_branch
        %262 = sbr.rel (%p260) target = $region32
      $region31: #{_lambda_.27} parent=27 // pred_region
        _
      $region32: #{_lambda_.27} parent=27 // pred_fallthru
        _
    $region28: #{_lambda_.27} parent=5 // pred_fallthru
      _
    %p263 = scmp.le.s32.totalorder 2, %s8
    // Predicated region
    $region33: #{_lambda_.27} parent=5 // pred_check
      %p264 = pneg %p263
    $region34: #{_lambda_.27} parent=5 // pred_check_branch
      %266 = sbr.rel (%p264) target = $region36
    $region35: #{_lambda_.27} parent=5 // pred_region
      %s267 = ssub.s32 %s8, 2
      // Predicated region
      $region37: #{_lambda_.27} parent=35 // pred_check
        %p268 = pneg %p84
      $region38: #{_lambda_.27} parent=35 // pred_check_branch
        %270 = sbr.rel (%p268) target = $region40
      $region39: #{_lambda_.27} parent=35 // pred_region
        %p271 = scmp.lt.s32.totalorder %s14, 1
        %s272 = scalar_select %p271, %s14, 1
        %s273 = smul.addr %s272, 4
        %s274 = smul.addr %s273, 2
        %s275 = scalar_lea.vmem %s2, %s274
      $region40: #{_lambda_.27} parent=35 // pred_fallthru
        _
    $region36: #{_lambda_.27} parent=5 // pred_fallthru
      _
  $region6: #{_lambda_.27} parent=0 // loop_footer
    %s12 = sadd.s32 1, %s8
  $region7: #{_lambda_.27} parent=0 // loop_footer_branch
    %7 = sbr.rel target = $region3
  $region8: #{_lambda_.27} parent=0 // loop_exit
    _

// kernel: _lambda_.25
$region0: #{_lambda_.25}
  #allocation0 [shape = 'u32[]', space=smem, size = 0x4, offset = 0x4, fixed_abs, tag = 'smem constant byte address 0x4 - core index']
  #allocation1 [shape = 'u32[144,128]{1,0:T(1,128)}', space=vmem, size = 0x12000, scoped, tag = 'internal scratch']
  %s0 = inlined_call_operand.vmem [shape: bf16[32,8], index: 0, kind: input, shape index: {}]
  %s1 = inlined_call_operand.vmem [shape: bf16[8,4], index: 1, kind: input, shape index: {}]
  %s2 = inlined_call_operand.vmem [shape: f32[2,4], index: 2, kind: input, shape index: {}]
  %s3 = inlined_call_operand.vmem [shape: bf16[32,4], index: 3, kind: output, shape index: {}]
  %s4 = sld [smem:[#allocation0]]
  $region22: #{_lambda_.25} parent=0
    _
  %s6 = ssub.s32 1, %s4
  %s7 = scalar_select 0, %s6, %s4
  // Predicated region
  $region2: #{_lambda_.25} parent=0 // pred_check
    _
  $region3: #{_lambda_.25} parent=0 // pred_check_branch
    %9 = sbr.rel (0) target = $region5
  $region4: #{_lambda_.25} parent=0 // pred_region
    _
  $region5: #{_lambda_.25} parent=0 // pred_fallthru
    _
  // Predicated region
  $region6: #{_lambda_.25} parent=0 // pred_check
    _
  $region7: #{_lambda_.25} parent=0 // pred_check_branch
    %11 = sbr.rel (0) target = $region9
  $region8: #{_lambda_.25} parent=0 // pred_region
    _
  $region9: #{_lambda_.25} parent=0 // pred_fallthru
    _
  // Predicated region
  $region10: #{_lambda_.25} parent=0 // pred_check
    _
  $region11: #{_lambda_.25} parent=0 // pred_check_branch
    %13 = sbr.rel (0) target = $region13
  $region12: #{_lambda_.25} parent=0 // pred_region
    _
  $region13: #{_lambda_.25} parent=0 // pred_fallthru
    _
  %v15 = vld [vmem:[%s0] sm:$0xf]
  %v16 = vld [vmem:[%s0 + $0x4] sm:$0xf]
  %v17 = vld [vmem:[%s0 + $0x8] sm:$0xf]
  %v18 = vld [vmem:[%s0 + $0xc] sm:$0xf]
  %v19 = vmax.bf16 %v15, 0
  %v20 = vmax.bf16 %v16, 0
  %v21 = vmax.bf16 %v17, 0
  %v22 = vmax.bf16 %v18, 0
  %v23 = vld [vmem:[%s1] sm:$0xf]
  %v28 = vunpack.c.l.b16 %v19
  %v29 = vunpack.c.l.b16 %v20
  %v30 = vunpack.c.l.b16 %v21
  %v31 = vunpack.c.l.b16 %v22
  %v32 = vpack.c.b16 %v29, %v28
  %v33 = vpack.c.b16 %v31, %v30
  %vm34 = vcmask 64512
  %v36 = vsel %vm34, %v32, 0
  %v39 = vsel %vm34, %v33, 0
  %vm41 = vcmask 1043456
  %v43 = vsel %vm41, %v23, 0
  %45 = vmatprep.subr.bf16.mxu0 0
  %46 = vmatpush1.bf16.msra.mxu0 %v43
  %47 = vmatprep.subr.bf16.mxu0 0
  %48 = vmatpush1.bf16.msra.mxu0 0
  %49 = vmatprep.subr.bf16.mxu0 0
  %50 = vmatpush1.bf16.msra.mxu0 0
  %51 = vmatprep.subr.bf16.mxu0 0
  %52 = vmatpush1.bf16.msra.mxu0 0
  %53 = vmatprep.subr.bf16.mxu0 0
  %54 = vmatpush1.bf16.msra.mxu0 0
  %55 = vmatprep.subr.bf16.mxu0 0
  %56 = vmatpush1.bf16.msra.mxu0 0
  %57 = vmatprep.subr.bf16.mxu0 0
  %58 = vmatpush1.bf16.msra.mxu0 0
  %59 = vmatprep.subr.bf16.mxu0 0
  %60 = vmatpush1.bf16.msra.mxu0 0
  %61 = vmatprep.subr.bf16.mxu0 0
  %62 = vmatpush1.bf16.msra.mxu0 0
  %63 = vmatprep.subr.bf16.mxu0 0
  %64 = vmatpush1.bf16.msra.mxu0 0
  %65 = vmatprep.subr.bf16.mxu0 0
  %66 = vmatpush1.bf16.msra.mxu0 0
  %67 = vmatprep.subr.bf16.mxu0 0
  %68 = vmatpush1.bf16.msra.mxu0 0
  %69 = vmatprep.subr.bf16.mxu0 0
  %70 = vmatpush1.bf16.msra.mxu0 0
  %71 = vmatprep.subr.bf16.mxu0 0
  %72 = vmatpush1.bf16.msra.mxu0 0
  %73 = vmatprep.subr.bf16.mxu0 0
  %74 = vmatpush1.bf16.msra.mxu0 0
  %75 = vmatprep.subr.bf16.mxu0 0
  %76 = vmatpush1.bf16.msra.mxu0 0
  %77 = vmatprep.mubr.bf16.mxu0 0
  %78 = vmatmul.mubr.bf16.gmra.mrb[0].mxu0 %v36
  %v79 = vpop.f32.mrb[0].mxu0
  %v80 = vadd.f32 0.0, %v79
  %v81 = vpop.f32.mrb[0].mxu0
  %v82 = vpop.f32.mrb[0].mxu0
  %v83 = vadd.f32 0.0, %v82
  %v84 = vpop.f32.mrb[0].mxu0
  %85 = vmatprep.mubr.bf16.mxu0 0
  %86 = vmatmul.mubr.bf16.gmra.mrb[0].mxu0 %v39
  %v87 = vpop.f32.mrb[0].mxu0
  %v88 = vadd.f32 0.0, %v87
  %v89 = vpop.f32.mrb[0].mxu0
  %v90 = vpop.f32.mrb[0].mxu0
  %v91 = vadd.f32 0.0, %v90
  %v92 = vpop.f32.mrb[0].mxu0
  %93 = vdwg.mxu0
  %v94 = vld [vmem:[%s2] sm:$0x1]
  %v95 = vlaneseq
  %v96 = vshrl.u32 %v95, 7
  %v97 = vsub.s32 0, %v96
  %v98 = vrot.slane %v94, %v97
  %v99 = vmul.f32 %v80, %v98
  %v100 = vmul.f32 %v83, %v98
  %v101 = vmul.f32 %v88, %v98
  %v102 = vmul.f32 %v91, %v98
  %v103 = vld [vmem:[%s2 + $0x1] sm:$0x1]
  %v104 = vlaneseq
  %v105 = vshrl.u32 %v104, 7
  %v106 = vsub.s32 0, %v105
  %v107 = vrot.slane %v103, %v106
  %v108 = vadd.f32 %v99, %v107
  %v109 = vadd.f32 %v100, %v107
  %v110 = vadd.f32 %v101, %v107
  %v111 = vadd.f32 %v102, %v107
  %v112 = vpack.c.bf16 %v109, %v108
  %v113 = vpack.c.bf16 %v111, %v110
  %v116 = vunpack.c.l.b16 %v112
  %v117 = vunpack.c.h.b16 %v112
  %v118 = vunpack.c.l.b16 %v113
  %v119 = vunpack.c.h.b16 %v113
  %v120 = vpack.c.b16 %v116, %v116
  %v121 = vpack.c.b16 %v117, %v117
  %v122 = vpack.c.b16 %v118, %v118
  %v123 = vpack.c.b16 %v119, %v119
  %vm128 = vcmask 27648
  %129 = vst.msk [vmem:[%s3] sm:$0xf] %vm128, %v120
  %130 = vst.msk [vmem:[%s3 + $0x4] sm:$0xf] %vm128, %v121
  %131 = vst.msk [vmem:[%s3 + $0x8] sm:$0xf] %vm128, %v122
  %132 = vst.msk [vmem:[%s3 + $0xc] sm:$0xf] %vm128, %v123
  // Predicated region
  $region14: #{_lambda_.25} parent=0 // pred_check
    _
  $region15: #{_lambda_.25} parent=0 // pred_check_branch
    %134 = sbr.rel (0) target = $region17
  $region16: #{_lambda_.25} parent=0 // pred_region
    _
  $region17: #{_lambda_.25} parent=0 // pred_fallthru
    _
  // Predicated region
  $region18: #{_lambda_.25} parent=0 // pred_check
    _
  $region19: #{_lambda_.25} parent=0 // pred_check_branch
    %136 = sbr.rel (0) target = $region21
  $region20: #{_lambda_.25} parent=0 // pred_region
    _
  $region21: #{_lambda_.25} parent=0 // pred_fallthru
    _

// kernel: _lambda_.28
$region0: #{_lambda_.28}
  #allocation0 [shape = 'u32[]', space=smem, size = 0x4, offset = 0x4, fixed_abs, tag = 'smem constant byte address 0x4 - core index']
  #allocation1 [shape = 'u32[144,128]{1,0:T(1,128)}', space=vmem, size = 0x12000, scoped, tag = 'internal scratch']
  %s0 = inlined_call_operand.vmem [shape: bf16[2,6,6,8], index: 0, kind: input, shape index: {}]
  %s1 = inlined_call_operand.vmem [shape: bf16[2,4,4,8], index: 1, kind: output, shape index: {}]
  %s2 = sld [smem:[#allocation0]]
  $region37: #{_lambda_.28} parent=0
    _
  %s4 = ssub.s32 1, %s2
  %s5 = scalar_select 0, %s4, %s2
  loop: start=0, step=1, limit=4
  $region2: #{_lambda_.28} parent=0 // loop_pre_header
    _
  $region3: #{_lambda_.28} parent=0 // loop_header
    %s7 = sphi 0, %s11
    %p8 = scmp.ge.s32.totalorder %s7, 4
    %s17 = sphi 0, %s19
    %s20 = sphi 0, %s17
    %s21 = sphi 0, %s20
    %s37 = sphi 0, %s21
    %s43 = sphi 0, %s45
    %s46 = sphi 0, %s43
    %s47 = sphi 0, %s46
    %s63 = sphi 0, %s47
  $region4: #{_lambda_.28} parent=0 // loop_header_branch
    %10 = sbr.rel (%p8) target = $region8
  $region5: #{_lambda_.28} parent=0 // loop_body
    %s12 = ssub.s32 %s7, 1
    %s13 = ssub.s32 %s7, 2
    %s14 = sadd.s32 %s7, 1
    %s15 = ssub.s32 %s7, %s14
    %p16 = scmp.eq.s32.totalorder %s15, 0
    %s18 = sadd.s32 %s17, 1
    %s19 = scalar_select %p16, %s17, %s18
    %p22 = pneg %p16
    %p23 = scmp.eq.s32.totalorder %s7, 1
    %p24 = por %p22, %p23
    %p25 = scmp.ne.s32.totalorder %s17, %s20
    %p26 = scmp.eq.s32.totalorder %s7, 0
    %p27 = por %p25, %p26
    %p28 = scmp.ne.s32.totalorder %s17, %s20
    %p29 = scmp.eq.s32.totalorder %s12, 1
    %p30 = por %p28, %p29
    %p31 = scmp.ne.s32.totalorder %s20, %s21
    %p32 = scmp.eq.s32.totalorder %s12, 0
    %p33 = por %p31, %p32
    %p34 = scmp.ne.s32.totalorder %s20, %s21
    %p35 = scmp.eq.s32.totalorder %s13, 1
    %p36 = por %p34, %p35
    %p38 = scmp.ne.s32.totalorder %s21, %s37
    %p39 = scmp.eq.s32.totalorder %s13, 0
    %p40 = por %p38, %p39
    %s41 = ssub.s32 %s7, %s14
    %p42 = scmp.eq.s32.totalorder %s41, 0
    %s44 = sadd.s32 %s43, 1
    %s45 = scalar_select %p42, %s43, %s44
    %p48 = pneg %p42
    %p49 = scmp.eq.s32.totalorder %s7, 1
    %p50 = por %p48, %p49
    %p51 = scmp.ne.s32.totalorder %s43, %s46
    %p52 = scmp.eq.s32.totalorder %s7, 0
    %p53 = por %p51, %p52
    %p54 = scmp.ne.s32.totalorder %s43, %s46
    %p55 = scmp.eq.s32.totalorder %s12, 1
    %p56 = por %p54, %p55
    %p57 = scmp.ne.s32.totalorder %s46, %s47
    %p58 = scmp.eq.s32.totalorder %s12, 0
    %p59 = por %p57, %p58
    %p60 = scmp.ne.s32.totalorder %s46, %s47
    %p61 = scmp.eq.s32.totalorder %s13, 1
    %p62 = por %p60, %p61
    %p64 = scmp.ne.s32.totalorder %s47, %s63
    %p65 = scmp.eq.s32.totalorder %s13, 0
    %p66 = por %p64, %p65
    %p67 = scmp.le.s32.totalorder 1, %s7
    %p68 = scmp.lt.s32.totalorder %s7, 3
    %p69 = pnand %p67, %p68
    %p70 = pneg %p69
    // Predicated region
    $region9: #{_lambda_.28} parent=5 // pred_check
      _
    $region10: #{_lambda_.28} parent=5 // pred_check_branch
      %72 = sbr.rel (%p69) target = $region12
    $region11: #{_lambda_.28} parent=5 // pred_region
      %s73 = ssub.s32 %s7, 1
    $region12: #{_lambda_.28} parent=5 // pred_fallthru
      _
    %p74 = scmp.lt.s32.totalorder %s7, 2
    // Predicated region
    $region13: #{_lambda_.28} parent=5 // pred_check
      %p75 = pneg %p74
    $region14: #{_lambda_.28} parent=5 // pred_check_branch
      %77 = sbr.rel (%p75) target = $region16
    $region15: #{_lambda_.28} parent=5 // pred_region
      // Predicated region
      $region17: #{_lambda_.28} parent=15 // pred_check
        %p78 = pneg %p27
      $region18: #{_lambda_.28} parent=15 // pred_check_branch
        %80 = sbr.rel (%p78) target = $region20
      $region19: #{_lambda_.28} parent=15 // pred_region
        %p81 = scmp.lt.s32.totalorder %s7, 1
        %s82 = scalar_select %p81, %s7, 1
        %s83 = smul.addr %s82, 6
        %s84 = smul.addr %s83, 4
        %s85 = scalar_lea.vmem %s0, %s84
      $region20: #{_lambda_.28} parent=15 // pred_fallthru
        _
    $region16: #{_lambda_.28} parent=5 // pred_fallthru
      _
    %p86 = scmp.le.s32.totalorder 1, %s7
    %p87 = scmp.lt.s32.totalorder %s7, 3
    %p88 = pnand %p86, %p87
    %p89 = pneg %p88
    // Predicated region
    $region21: #{_lambda_.28} parent=5 // pred_check
      _
    $region22: #{_lambda_.28} parent=5 // pred_check_branch
      %91 = sbr.rel (%p88) target = $region24
    $region23: #{_lambda_.28} parent=5 // pred_region
      %s92 = ssub.s32 %s7, 1
      %p93 = scmp.lt.s32.totalorder %s12, 1
      %s94 = scalar_select %p93, %s12, 1
      %s95 = smul.addr %s94, 6
      %s96 = smul.addr %s95, 4
      %s97 = scalar_lea.vmem %s0, %s96
      %p98 = pneg %p33
      %p99 = pneg %p30
      %p100 = pneg %p59
      %p101 = pneg %p56
      %p102 = scmp.lt.s32.totalorder %s12, 1
      %s103 = scalar_select %p102, %s12, 1
      %s104 = smul.addr %s103, 4
      %s105 = smul.addr %s104, 2
      %s106 = scalar_lea.vmem %s1, %s105
      %p107 = scmp.lt.s32.totalorder %s12, 1
      %s108 = scalar_select %p107, %s12, 1
      %s109 = smul.addr %s108, 6
      %s110 = smul.addr %s109, 4
      %s111 = scalar_lea.vmem %s0, %s110
      %p112 = scmp.lt.s32.totalorder %s12, 1
      %s113 = scalar_select %p112, %s12, 1
      %s114 = smul.addr %s113, 4
      %s115 = smul.addr %s114, 2
      %s116 = scalar_lea.vmem %s1, %s115
      %v117 = vld [vmem:[%s111] sm:$0x7]
      %v118 = vld [vmem:[%s111 + $0x4] sm:$0x7]
      %v119 = vld [vmem:[%s111 + $0x8] sm:$0x7]
      %v120 = vld [vmem:[%s111 + $0xc] sm:$0x7]
      %v121 = vld [vmem:[%s111 + $0x10] sm:$0x7]
      %v122 = vld [vmem:[%s111 + $0x14] sm:$0x7]
      %v123 = vunpack.c.l.bf16 %v117
      %v124 = vunpack.c.l.bf16 %v118
      %v125 = vunpack.c.l.bf16 %v119
      %v126 = vunpack.c.l.bf16 %v120
      %v127 = vunpack.c.l.bf16 %v121
      %v128 = vunpack.c.l.bf16 %v122
      %v133 = vrot.slane %v123, 1
      %v134 = vrot.slane %v124, 1
      %v135 = vrot.slane %v125, 1
      %v136 = vrot.slane %v126, 1
      %v141 = vmax.f32 %v123, %v133
      %v142 = vmax.f32 %v124, %v134
      %v143 = vmax.f32 %v125, %v135
      %v144 = vmax.f32 %v126, %v136
      %v145 = vrot.slane %v123, 2
      %v146 = vrot.slane %v124, 2
      %v147 = vrot.slane %v125, 2
      %v148 = vrot.slane %v126, 2
      %v153 = vmax.f32 %v141, %v145
      %v154 = vmax.f32 %v142, %v146
      %v155 = vmax.f32 %v143, %v147
      %v156 = vmax.f32 %v144, %v148
      %v157 = vmax.f32 %v153, %v124
      %v158 = vmax.f32 %v154, %v125
      %v159 = vmax.f32 %v155, %v126
      %v160 = vmax.f32 %v156, %v127
      %v162 = vrot.slane %v127, 1
      %v164 = vmax.f32 %v157, %v134
      %v165 = vmax.f32 %v158, %v135
      %v166 = vmax.f32 %v159, %v136
      %v167 = vmax.f32 %v160, %v162
      %v168 = vrot.slane %v127, 2
      %v170 = vmax.f32 %v164, %v146
      %v171 = vmax.f32 %v165, %v147
      %v172 = vmax.f32 %v166, %v148
      %v173 = vmax.f32 %v167, %v168
      %v174 = vmax.f32 %v170, %v125
      %v175 = vmax.f32 %v171, %v126
      %v176 = vmax.f32 %v172, %v127
      %v177 = vmax.f32 %v173, %v128
      %v179 = vrot.slane %v128, 1
      %v181 = vmax.f32 %v174, %v135
      %v182 = vmax.f32 %v175, %v136
      %v183 = vmax.f32 %v176, %v162
      %v184 = vmax.f32 %v177, %v179
      %v185 = vrot.slane %v128, 2
      %v187 = vmax.f32 %v181, %v147
      %v188 = vmax.f32 %v182, %v148
      %v189 = vmax.f32 %v183, %v168
      %v190 = vmax.f32 %v184, %v185
      %v191 = vpack.c.bf16 %v187, %v187
      %v192 = vpack.c.bf16 %v188, %v188
      %v193 = vpack.c.bf16 %v189, %v189
      %v194 = vpack.c.bf16 %v190, %v190
      %vm195 = vcmask 58368
      %196 = vst.msk [vmem:[%s116] sm:$0x3] %vm195, %v191
      %197 = vst.msk [vmem:[%s116 + $0x2] sm:$0x3] %vm195, %v192
      %198 = vst.msk [vmem:[%s116 + $0x4] sm:$0x3] %vm195, %v193
      %199 = vst.msk [vmem:[%s116 + $0x6] sm:$0x3] %vm195, %v194
      %p200 = scmp.lt.s32.totalorder %s12, 1
      %s201 = scalar_select %p200, %s12, 1
      %s202 = smul.addr %s201, 4
      %s203 = smul.addr %s202, 2
      %s204 = scalar_lea.vmem %s1, %s203
      // Predicated region
      $region25: #{_lambda_.28} parent=23 // pred_check
        %p205 = pneg %p56
      $region26: #{_lambda_.28} parent=23 // pred_check_branch
        %207 = sbr.rel (%p205) target = $region28
      $region27: #{_lambda_.28} parent=23 // pred_region
        _
      $region28: #{_lambda_.28} parent=23 // pred_fallthru
        _
    $region24: #{_lambda_.28} parent=5 // pred_fallthru
      _
    %p208 = scmp.le.s32.totalorder 2, %s7
    // Predicated region
    $region29: #{_lambda_.28} parent=5 // pred_check
      %p209 = pneg %p208
    $region30: #{_lambda_.28} parent=5 // pred_check_branch
      %211 = sbr.rel (%p209) target = $region32
    $region31: #{_lambda_.28} parent=5 // pred_region
      %s212 = ssub.s32 %s7, 2
      // Predicated region
      $region33: #{_lambda_.28} parent=31 // pred_check
        %p213 = pneg %p62
      $region34: #{_lambda_.28} parent=31 // pred_check_branch
        %215 = sbr.rel (%p213) target = $region36
      $region35: #{_lambda_.28} parent=31 // pred_region
        %p216 = scmp.lt.s32.totalorder %s13, 1
        %s217 = scalar_select %p216, %s13, 1
        %s218 = smul.addr %s217, 4
        %s219 = smul.addr %s218, 2
        %s220 = scalar_lea.vmem %s1, %s219
      $region36: #{_lambda_.28} parent=31 // pred_fallthru
        _
    $region32: #{_lambda_.28} parent=5 // pred_fallthru
      _
  $region6: #{_lambda_.28} parent=0 // loop_footer
    %s11 = sadd.s32 1, %s7
  $region7: #{_lambda_.28} parent=0 // loop_footer_branch
    %6 = sbr.rel target = $region3
  $region8: #{_lambda_.28} parent=0 // loop_exit
    _

// kernel: _lambda_.35
$region0: #{_lambda_.35}
  #allocation0 [shape = 'u32[]', space=smem, size = 0x4, offset = 0x4, fixed_abs, tag = 'smem constant byte address 0x4 - core index']
  #allocation1 [shape = 'u32[144,128]{1,0:T(1,128)}', space=vmem, size = 0x12000, scoped, tag = 'internal scratch']
  %s0 = inlined_call_operand.vmem [shape: bf16[8,16], index: 0, kind: input, shape index: {}]
  %s1 = inlined_call_operand.vmem [shape: bf16[16,16], index: 1, kind: input, shape index: {}]
  %s2 = inlined_call_operand.vmem [shape: f32[2,16], index: 2, kind: input, shape index: {}]
  %s3 = inlined_call_operand.vmem [shape: bf16[8,16], index: 3, kind: output, shape index: {}]
  %s4 = sld [smem:[#allocation0]]
  $region22: #{_lambda_.35} parent=0
    _
  %s6 = ssub.s32 1, %s4
  %s7 = scalar_select 0, %s6, %s4
  // Predicated region
  $region2: #{_lambda_.35} parent=0 // pred_check
    _
  $region3: #{_lambda_.35} parent=0 // pred_check_branch
    %9 = sbr.rel (0) target = $region5
  $region4: #{_lambda_.35} parent=0 // pred_region
    _
  $region5: #{_lambda_.35} parent=0 // pred_fallthru
    _
  // Predicated region
  $region6: #{_lambda_.35} parent=0 // pred_check
    _
  $region7: #{_lambda_.35} parent=0 // pred_check_branch
    %11 = sbr.rel (0) target = $region9
  $region8: #{_lambda_.35} parent=0 // pred_region
    _
  $region9: #{_lambda_.35} parent=0 // pred_fallthru
    _
  // Predicated region
  $region10: #{_lambda_.35} parent=0 // pred_check
    _
  $region11: #{_lambda_.35} parent=0 // pred_check_branch
    %13 = sbr.rel (0) target = $region13
  $region12: #{_lambda_.35} parent=0 // pred_region
    _
  $region13: #{_lambda_.35} parent=0 // pred_fallthru
    _
  %v15 = vld [vmem:[%s0] sm:$0xf]
  %v16 = vmax.bf16 %v15, 0
  %v17 = vld [vmem:[%s1] sm:$0xf]
  %v18 = vld [vmem:[%s1 + $0x4] sm:$0xf]
  %v21 = vunpack.c.l.b16 %v17
  %v22 = vunpack.c.l.b16 %v18
  %v23 = vpack.c.b16 %v22, %v21
  %vm25 = vcmask 130048
  %v27 = vsel %vm25, %v16, 0
  %29 = vmatprep.subr.bf16.mxu0 0
  %30 = vmatpush1.bf16.msra.mxu0 %v23
  %31 = vmatprep.subr.bf16.mxu0 0
  %32 = vmatpush1.bf16.msra.mxu0 0
  %33 = vmatprep.subr.bf16.mxu0 0
  %34 = vmatpush1.bf16.msra.mxu0 0
  %35 = vmatprep.subr.bf16.mxu0 0
  %36 = vmatpush1.bf16.msra.mxu0 0
  %37 = vmatprep.subr.bf16.mxu0 0
  %38 = vmatpush1.bf16.msra.mxu0 0
  %39 = vmatprep.subr.bf16.mxu0 0
  %40 = vmatpush1.bf16.msra.mxu0 0
  %41 = vmatprep.subr.bf16.mxu0 0
  %42 = vmatpush1.bf16.msra.mxu0 0
  %43 = vmatprep.subr.bf16.mxu0 0
  %44 = vmatpush1.bf16.msra.mxu0 0
  %45 = vmatprep.subr.bf16.mxu0 0
  %46 = vmatpush1.bf16.msra.mxu0 0
  %47 = vmatprep.subr.bf16.mxu0 0
  %48 = vmatpush1.bf16.msra.mxu0 0
  %49 = vmatprep.subr.bf16.mxu0 0
  %50 = vmatpush1.bf16.msra.mxu0 0
  %51 = vmatprep.subr.bf16.mxu0 0
  %52 = vmatpush1.bf16.msra.mxu0 0
  %53 = vmatprep.subr.bf16.mxu0 0
  %54 = vmatpush1.bf16.msra.mxu0 0
  %55 = vmatprep.subr.bf16.mxu0 0
  %56 = vmatpush1.bf16.msra.mxu0 0
  %57 = vmatprep.subr.bf16.mxu0 0
  %58 = vmatpush1.bf16.msra.mxu0 0
  %59 = vmatprep.subr.bf16.mxu0 0
  %60 = vmatpush1.bf16.msra.mxu0 0
  %61 = vmatprep.mubr.bf16.mxu0 0
  %62 = vmatmul.mubr.bf16.gmra.mrb[0].mxu0 %v27
  %v63 = vpop.f32.mrb[0].mxu0
  %v64 = vadd.f32 0.0, %v63
  %v65 = vpop.f32.mrb[0].mxu0
  %v66 = vpop.f32.mrb[0].mxu0
  %v67 = vpop.f32.mrb[0].mxu0
  %68 = vdwg.mxu0
  %v69 = vld [vmem:[%s2] sm:$0x1]
  %v70 = vlaneseq
  %v71 = vshrl.u32 %v70, 7
  %v72 = vsub.s32 0, %v71
  %v73 = vrot.slane %v69, %v72
  %v74 = vmul.f32 %v64, %v73
  %v75 = vld [vmem:[%s2 + $0x1] sm:$0x1]
  %v76 = vlaneseq
  %v77 = vshrl.u32 %v76, 7
  %v78 = vsub.s32 0, %v77
  %v79 = vrot.slane %v75, %v78
  %v80 = vadd.f32 %v74, %v79
  %v81 = vpack.c.bf16 %v80, %v80
  %vm82 = vcmask 125952
  %83 = vst.msk [vmem:[%s3] sm:$0xf] %vm82, %v81
  // Predicated region
  $region14: #{_lambda_.35} parent=0 // pred_check
    _
  $region15: #{_lambda_.35} parent=0 // pred_check_branch
    %85 = sbr.rel (0) target = $region17
  $region16: #{_lambda_.35} parent=0 // pred_region
    _
  $region17: #{_lambda_.35} parent=0 // pred_fallthru
    _
  // Predicated region
  $region18: #{_lambda_.35} parent=0 // pred_check
    _
  $region19: #{_lambda_.35} parent=0 // pred_check_branch
    %87 = sbr.rel (0) target = $region21
  $region20: #{_lambda_.35} parent=0 // pred_region
    _
  $region21: #{_lambda_.35} parent=0 // pred_fallthru
    _

// kernel: _lambda_.37
$region0: #{_lambda_.37}
  #allocation0 [shape = 'u32[]', space=smem, size = 0x4, offset = 0x4, fixed_abs, tag = 'smem constant byte address 0x4 - core index']
  #allocation1 [shape = 'u32[144,128]{1,0:T(1,128)}', space=vmem, size = 0x12000, scoped, tag = 'internal scratch']
  %s0 = inlined_call_operand.vmem [shape: bf16[2,4,4,32], index: 0, kind: input, shape index: {}]
  %s1 = inlined_call_operand.vmem [shape: bf16[2,2,2,32], index: 1, kind: output, shape index: {}]
  %s2 = sld [smem:[#allocation0]]
  $region37: #{_lambda_.37} parent=0
    _
  %s4 = ssub.s32 1, %s2
  %s5 = scalar_select 0, %s4, %s2
  loop: start=0, step=1, limit=4
  $region2: #{_lambda_.37} parent=0 // loop_pre_header
    _
  $region3: #{_lambda_.37} parent=0 // loop_header
    %s7 = sphi 0, %s11
    %p8 = scmp.ge.s32.totalorder %s7, 4
    %s17 = sphi 0, %s19
    %s20 = sphi 0, %s17
    %s21 = sphi 0, %s20
    %s37 = sphi 0, %s21
    %s43 = sphi 0, %s45
    %s46 = sphi 0, %s43
    %s47 = sphi 0, %s46
    %s63 = sphi 0, %s47
  $region4: #{_lambda_.37} parent=0 // loop_header_branch
    %10 = sbr.rel (%p8) target = $region8
  $region5: #{_lambda_.37} parent=0 // loop_body
    %s12 = ssub.s32 %s7, 1
    %s13 = ssub.s32 %s7, 2
    %s14 = sadd.s32 %s7, 1
    %s15 = ssub.s32 %s7, %s14
    %p16 = scmp.eq.s32.totalorder %s15, 0
    %s18 = sadd.s32 %s17, 1
    %s19 = scalar_select %p16, %s17, %s18
    %p22 = pneg %p16
    %p23 = scmp.eq.s32.totalorder %s7, 1
    %p24 = por %p22, %p23
    %p25 = scmp.ne.s32.totalorder %s17, %s20
    %p26 = scmp.eq.s32.totalorder %s7, 0
    %p27 = por %p25, %p26
    %p28 = scmp.ne.s32.totalorder %s17, %s20
    %p29 = scmp.eq.s32.totalorder %s12, 1
    %p30 = por %p28, %p29
    %p31 = scmp.ne.s32.totalorder %s20, %s21
    %p32 = scmp.eq.s32.totalorder %s12, 0
    %p33 = por %p31, %p32
    %p34 = scmp.ne.s32.totalorder %s20, %s21
    %p35 = scmp.eq.s32.totalorder %s13, 1
    %p36 = por %p34, %p35
    %p38 = scmp.ne.s32.totalorder %s21, %s37
    %p39 = scmp.eq.s32.totalorder %s13, 0
    %p40 = por %p38, %p39
    %s41 = ssub.s32 %s7, %s14
    %p42 = scmp.eq.s32.totalorder %s41, 0
    %s44 = sadd.s32 %s43, 1
    %s45 = scalar_select %p42, %s43, %s44
    %p48 = pneg %p42
    %p49 = scmp.eq.s32.totalorder %s7, 1
    %p50 = por %p48, %p49
    %p51 = scmp.ne.s32.totalorder %s43, %s46
    %p52 = scmp.eq.s32.totalorder %s7, 0
    %p53 = por %p51, %p52
    %p54 = scmp.ne.s32.totalorder %s43, %s46
    %p55 = scmp.eq.s32.totalorder %s12, 1
    %p56 = por %p54, %p55
    %p57 = scmp.ne.s32.totalorder %s46, %s47
    %p58 = scmp.eq.s32.totalorder %s12, 0
    %p59 = por %p57, %p58
    %p60 = scmp.ne.s32.totalorder %s46, %s47
    %p61 = scmp.eq.s32.totalorder %s13, 1
    %p62 = por %p60, %p61
    %p64 = scmp.ne.s32.totalorder %s47, %s63
    %p65 = scmp.eq.s32.totalorder %s13, 0
    %p66 = por %p64, %p65
    %p67 = scmp.le.s32.totalorder 1, %s7
    %p68 = scmp.lt.s32.totalorder %s7, 3
    %p69 = pnand %p67, %p68
    %p70 = pneg %p69
    // Predicated region
    $region9: #{_lambda_.37} parent=5 // pred_check
      _
    $region10: #{_lambda_.37} parent=5 // pred_check_branch
      %72 = sbr.rel (%p69) target = $region12
    $region11: #{_lambda_.37} parent=5 // pred_region
      %s73 = ssub.s32 %s7, 1
    $region12: #{_lambda_.37} parent=5 // pred_fallthru
      _
    %p74 = scmp.lt.s32.totalorder %s7, 2
    // Predicated region
    $region13: #{_lambda_.37} parent=5 // pred_check
      %p75 = pneg %p74
    $region14: #{_lambda_.37} parent=5 // pred_check_branch
      %77 = sbr.rel (%p75) target = $region16
    $region15: #{_lambda_.37} parent=5 // pred_region
      // Predicated region
      $region17: #{_lambda_.37} parent=15 // pred_check
        %p78 = pneg %p27
      $region18: #{_lambda_.37} parent=15 // pred_check_branch
        %80 = sbr.rel (%p78) target = $region20
      $region19: #{_lambda_.37} parent=15 // pred_region
        %p81 = scmp.lt.s32.totalorder %s7, 1
        %s82 = scalar_select %p81, %s7, 1
        %s83 = smul.addr %s82, 4
        %s84 = smul.addr %s83, 2
        %s85 = scalar_lea.vmem %s0, %s84
      $region20: #{_lambda_.37} parent=15 // pred_fallthru
        _
    $region16: #{_lambda_.37} parent=5 // pred_fallthru
      _
    %p86 = scmp.le.s32.totalorder 1, %s7
    %p87 = scmp.lt.s32.totalorder %s7, 3
    %p88 = pnand %p86, %p87
    %p89 = pneg %p88
    // Predicated region
    $region21: #{_lambda_.37} parent=5 // pred_check
      _
    $region22: #{_lambda_.37} parent=5 // pred_check_branch
      %91 = sbr.rel (%p88) target = $region24
    $region23: #{_lambda_.37} parent=5 // pred_region
      %s92 = ssub.s32 %s7, 1
      %p93 = scmp.lt.s32.totalorder %s12, 1
      %s94 = scalar_select %p93, %s12, 1
      %s95 = smul.addr %s94, 4
      %s96 = smul.addr %s95, 2
      %s97 = scalar_lea.vmem %s0, %s96
      %p98 = pneg %p33
      %p99 = pneg %p30
      %p100 = pneg %p59
      %p101 = pneg %p56
      %p102 = scmp.lt.s32.totalorder %s12, 1
      %s103 = scalar_select %p102, %s12, 1
      %s104 = smul.addr %s103, 2
      %s105 = scalar_lea.vmem %s1, %s104
      %p106 = scmp.lt.s32.totalorder %s12, 1
      %s107 = scalar_select %p106, %s12, 1
      %s108 = smul.addr %s107, 4
      %s109 = smul.addr %s108, 2
      %s110 = scalar_lea.vmem %s0, %s109
      %p111 = scmp.lt.s32.totalorder %s12, 1
      %s112 = scalar_select %p111, %s12, 1
      %s113 = smul.addr %s112, 2
      %s114 = scalar_lea.vmem %s1, %s113
      %v115 = vld [vmem:[%s110] sm:$0x3]
      %v116 = vld [vmem:[%s110 + $0x2] sm:$0x3]
      %v117 = vld [vmem:[%s110 + $0x4] sm:$0x3]
      %v118 = vld [vmem:[%s110 + $0x6] sm:$0x3]
      %v119 = vunpack.c.l.bf16 %v115
      %v120 = vunpack.c.l.bf16 %v116
      %v121 = vunpack.c.l.bf16 %v117
      %v122 = vunpack.c.l.bf16 %v118
      %v125 = vrot.slane %v119, 5
      %v126 = vrot.slane %v125, 4
      %v127 = vrot.slane %v120, 5
      %v128 = vrot.slane %v127, 4
      %v131 = vmax.f32 %v119, %v126
      %v132 = vmax.f32 %v120, %v128
      %v133 = vrot.slane %v119, 6
      %v134 = vrot.slane %v133, 4
      %v135 = vrot.slane %v120, 6
      %v136 = vrot.slane %v135, 4
      %v139 = vmax.f32 %v131, %v134
      %v140 = vmax.f32 %v132, %v136
      %v141 = vmax.f32 %v139, %v120
      %v142 = vmax.f32 %v140, %v121
      %v144 = vrot.slane %v121, 5
      %v145 = vrot.slane %v144, 4
      %v147 = vmax.f32 %v141, %v128
      %v148 = vmax.f32 %v142, %v145
      %v149 = vrot.slane %v121, 6
      %v150 = vrot.slane %v149, 4
      %v152 = vmax.f32 %v147, %v136
      %v153 = vmax.f32 %v148, %v150
      %v154 = vmax.f32 %v152, %v121
      %v155 = vmax.f32 %v153, %v122
      %v157 = vrot.slane %v122, 5
      %v158 = vrot.slane %v157, 4
      %v160 = vmax.f32 %v154, %v145
      %v161 = vmax.f32 %v155, %v158
      %v162 = vrot.slane %v122, 6
      %v163 = vrot.slane %v162, 4
      %v165 = vmax.f32 %v160, %v150
      %v166 = vmax.f32 %v161, %v163
      %v167 = vpack.c.bf16 %v165, %v165
      %v168 = vpack.c.bf16 %v166, %v166
      %vm169 = vcmask 253952
      %170 = vst.msk [vmem:[%s114] sm:$0x1] %vm169, %v167
      %171 = vst.msk [vmem:[%s114 + $0x1] sm:$0x1] %vm169, %v168
      %p172 = scmp.lt.s32.totalorder %s12, 1
      %s173 = scalar_select %p172, %s12, 1
      %s174 = smul.addr %s173, 2
      %s175 = scalar_lea.vmem %s1, %s174
      // Predicated region
      $region25: #{_lambda_.37} parent=23 // pred_check
        %p176 = pneg %p56
      $region26: #{_lambda_.37} parent=23 // pred_check_branch
        %178 = sbr.rel (%p176) target = $region28
      $region27: #{_lambda_.37} parent=23 // pred_region
        _
      $region28: #{_lambda_.37} parent=23 // pred_fallthru
        _
    $region24: #{_lambda_.37} parent=5 // pred_fallthru
      _
    %p179 = scmp.le.s32.totalorder 2, %s7
    // Predicated region
    $region29: #{_lambda_.37} parent=5 // pred_check
      %p180 = pneg %p179
    $region30: #{_lambda_.37} parent=5 // pred_check_branch
      %182 = sbr.rel (%p180) target = $region32
    $region31: #{_lambda_.37} parent=5 // pred_region
      %s183 = ssub.s32 %s7, 2
      // Predicated region
      $region33: #{_lambda_.37} parent=31 // pred_check
        %p184 = pneg %p62
      $region34: #{_lambda_.37} parent=31 // pred_check_branch
        %186 = sbr.rel (%p184) target = $region36
      $region35: #{_lambda_.37} parent=31 // pred_region
        %p187 = scmp.lt.s32.totalorder %s13, 1
        %s188 = scalar_select %p187, %s13, 1
        %s189 = smul.addr %s188, 2
        %s190 = scalar_lea.vmem %s1, %s189
      $region36: #{_lambda_.37} parent=31 // pred_fallthru
        _
    $region32: #{_lambda_.37} parent=5 // pred_fallthru
      _
  $region6: #{_lambda_.37} parent=0 // loop_footer
    %s11 = sadd.s32 1, %s7
  $region7: #{_lambda_.37} parent=0 // loop_footer_branch
    %6 = sbr.rel target = $region3
  $region8: #{_lambda_.37} parent=0 // loop_exit
    _

// kernel: _lambda_.30
$region0: #{_lambda_.30}
  #allocation0 [shape = 'u32[]', space=smem, size = 0x4, offset = 0x4, fixed_abs, tag = 'smem constant byte address 0x4 - core index']
  #allocation1 [shape = 'u32[144,128]{1,0:T(1,128)}', space=vmem, size = 0x12000, scoped, tag = 'internal scratch']
  %s0 = inlined_call_operand.vmem [shape: bf16[32,16], index: 0, kind: input, shape index: {}]
  %s1 = inlined_call_operand.vmem [shape: bf16[16,16], index: 1, kind: input, shape index: {}]
  %s2 = inlined_call_operand.vmem [shape: f32[2,16], index: 2, kind: input, shape index: {}]
  %s3 = inlined_call_operand.vmem [shape: bf16[32,16], index: 3, kind: output, shape index: {}]
  %s4 = sld [smem:[#allocation0]]
  $region22: #{_lambda_.30} parent=0
    _
  %s6 = ssub.s32 1, %s4
  %s7 = scalar_select 0, %s6, %s4
  // Predicated region
  $region2: #{_lambda_.30} parent=0 // pred_check
    _
  $region3: #{_lambda_.30} parent=0 // pred_check_branch
    %9 = sbr.rel (0) target = $region5
  $region4: #{_lambda_.30} parent=0 // pred_region
    _
  $region5: #{_lambda_.30} parent=0 // pred_fallthru
    _
  // Predicated region
  $region6: #{_lambda_.30} parent=0 // pred_check
    _
  $region7: #{_lambda_.30} parent=0 // pred_check_branch
    %11 = sbr.rel (0) target = $region9
  $region8: #{_lambda_.30} parent=0 // pred_region
    _
  $region9: #{_lambda_.30} parent=0 // pred_fallthru
    _
  // Predicated region
  $region10: #{_lambda_.30} parent=0 // pred_check
    _
  $region11: #{_lambda_.30} parent=0 // pred_check_branch
    %13 = sbr.rel (0) target = $region13
  $region12: #{_lambda_.30} parent=0 // pred_region
    _
  $region13: #{_lambda_.30} parent=0 // pred_fallthru
    _
  %v15 = vld [vmem:[%s0] sm:$0xf]
  %v16 = vld [vmem:[%s0 + $0x4] sm:$0xf]
  %v17 = vld [vmem:[%s0 + $0x8] sm:$0xf]
  %v18 = vld [vmem:[%s0 + $0xc] sm:$0xf]
  %v19 = vmax.bf16 %v15, 0
  %v20 = vmax.bf16 %v16, 0
  %v21 = vmax.bf16 %v17, 0
  %v22 = vmax.bf16 %v18, 0
  %v23 = vld [vmem:[%s1] sm:$0xf]
  %v24 = vld [vmem:[%s1 + $0x4] sm:$0xf]
  %v29 = vunpack.c.l.b16 %v19
  %v30 = vunpack.c.l.b16 %v20
  %v31 = vunpack.c.l.b16 %v21
  %v32 = vunpack.c.l.b16 %v22
  %v33 = vpack.c.b16 %v30, %v29
  %v34 = vpack.c.b16 %v32, %v31
  %v37 = vunpack.c.l.b16 %v23
  %v38 = vunpack.c.l.b16 %v24
  %v39 = vpack.c.b16 %v38, %v37
  %vm41 = vcmask 130048
  %v43 = vsel %vm41, %v33, 0
  %v46 = vsel %vm41, %v34, 0
  %48 = vmatprep.subr.bf16.mxu0 0
  %49 = vmatpush1.bf16.msra.mxu0 %v39
  %50 = vmatprep.subr.bf16.mxu0 0
  %51 = vmatpush1.bf16.msra.mxu0 0
  %52 = vmatprep.subr.bf16.mxu0 0
  %53 = vmatpush1.bf16.msra.mxu0 0
  %54 = vmatprep.subr.bf16.mxu0 0
  %55 = vmatpush1.bf16.msra.mxu0 0
  %56 = vmatprep.subr.bf16.mxu0 0
  %57 = vmatpush1.bf16.msra.mxu0 0
  %58 = vmatprep.subr.bf16.mxu0 0
  %59 = vmatpush1.bf16.msra.mxu0 0
  %60 = vmatprep.subr.bf16.mxu0 0
  %61 = vmatpush1.bf16.msra.mxu0 0
  %62 = vmatprep.subr.bf16.mxu0 0
  %63 = vmatpush1.bf16.msra.mxu0 0
  %64 = vmatprep.subr.bf16.mxu0 0
  %65 = vmatpush1.bf16.msra.mxu0 0
  %66 = vmatprep.subr.bf16.mxu0 0
  %67 = vmatpush1.bf16.msra.mxu0 0
  %68 = vmatprep.subr.bf16.mxu0 0
  %69 = vmatpush1.bf16.msra.mxu0 0
  %70 = vmatprep.subr.bf16.mxu0 0
  %71 = vmatpush1.bf16.msra.mxu0 0
  %72 = vmatprep.subr.bf16.mxu0 0
  %73 = vmatpush1.bf16.msra.mxu0 0
  %74 = vmatprep.subr.bf16.mxu0 0
  %75 = vmatpush1.bf16.msra.mxu0 0
  %76 = vmatprep.subr.bf16.mxu0 0
  %77 = vmatpush1.bf16.msra.mxu0 0
  %78 = vmatprep.subr.bf16.mxu0 0
  %79 = vmatpush1.bf16.msra.mxu0 0
  %80 = vmatprep.mubr.bf16.mxu0 0
  %81 = vmatmul.mubr.bf16.gmra.mrb[0].mxu0 %v43
  %v82 = vpop.f32.mrb[0].mxu0
  %v83 = vadd.f32 0.0, %v82
  %v84 = vpop.f32.mrb[0].mxu0
  %v85 = vpop.f32.mrb[0].mxu0
  %v86 = vadd.f32 0.0, %v85
  %v87 = vpop.f32.mrb[0].mxu0
  %88 = vmatprep.mubr.bf16.mxu0 0
  %89 = vmatmul.mubr.bf16.gmra.mrb[0].mxu0 %v46
  %v90 = vpop.f32.mrb[0].mxu0
  %v91 = vadd.f32 0.0, %v90
  %v92 = vpop.f32.mrb[0].mxu0
  %v93 = vpop.f32.mrb[0].mxu0
  %v94 = vadd.f32 0.0, %v93
  %v95 = vpop.f32.mrb[0].mxu0
  %96 = vdwg.mxu0
  %v97 = vld [vmem:[%s2] sm:$0x1]
  %v98 = vlaneseq
  %v99 = vshrl.u32 %v98, 7
  %v100 = vsub.s32 0, %v99
  %v101 = vrot.slane %v97, %v100
  %v102 = vmul.f32 %v83, %v101
  %v103 = vmul.f32 %v86, %v101
  %v104 = vmul.f32 %v91, %v101
  %v105 = vmul.f32 %v94, %v101
  %v106 = vld [vmem:[%s2 + $0x1] sm:$0x1]
  %v107 = vlaneseq
  %v108 = vshrl.u32 %v107, 7
  %v109 = vsub.s32 0, %v108
  %v110 = vrot.slane %v106, %v109
  %v111 = vadd.f32 %v102, %v110
  %v112 = vadd.f32 %v103, %v110
  %v113 = vadd.f32 %v104, %v110
  %v114 = vadd.f32 %v105, %v110
  %v115 = vpack.c.bf16 %v112, %v111
  %v116 = vpack.c.bf16 %v114, %v113
  %v119 = vunpack.c.l.b16 %v115
  %v120 = vunpack.c.h.b16 %v115
  %v121 = vunpack.c.l.b16 %v116
  %v122 = vunpack.c.h.b16 %v116
  %v123 = vpack.c.b16 %v119, %v119
  %v124 = vpack.c.b16 %v120, %v120
  %v125 = vpack.c.b16 %v121, %v121
  %v126 = vpack.c.b16 %v122, %v122
  %vm131 = vcmask 125952
  %132 = vst.msk [vmem:[%s3] sm:$0xf] %vm131, %v123
  %133 = vst.msk [vmem:[%s3 + $0x4] sm:$0xf] %vm131, %v124
  %134 = vst.msk [vmem:[%s3 + $0x8] sm:$0xf] %vm131, %v125
  %135 = vst.msk [vmem:[%s3 + $0xc] sm:$0xf] %vm131, %v126
  // Predicated region
  $region14: #{_lambda_.30} parent=0 // pred_check
    _
  $region15: #{_lambda_.30} parent=0 // pred_check_branch
    %137 = sbr.rel (0) target = $region17
  $region16: #{_lambda_.30} parent=0 // pred_region
    _
  $region17: #{_lambda_.30} parent=0 // pred_fallthru
    _
  // Predicated region
  $region18: #{_lambda_.30} parent=0 // pred_check
    _
  $region19: #{_lambda_.30} parent=0 // pred_check_branch
    %139 = sbr.rel (0) target = $region21
  $region20: #{_lambda_.30} parent=0 // pred_region
    _
  $region21: #{_lambda_.30} parent=0 // pred_fallthru
    _

// kernel: _lambda_.32
$region0: #{_lambda_.32}
  #allocation0 [shape = 'u32[]', space=smem, size = 0x4, offset = 0x4, fixed_abs, tag = 'smem constant byte address 0x4 - core index']
  #allocation1 [shape = 'u32[144,128]{1,0:T(1,128)}', space=vmem, size = 0x12000, scoped, tag = 'internal scratch']
  %s0 = inlined_call_operand.vmem [shape: bf16[2,6,6,16], index: 0, kind: input, shape index: {}]
  %s1 = inlined_call_operand.vmem [shape: f32[1,4,4,1], index: 1, kind: input, shape index: {}]
  %s2 = inlined_call_operand.vmem [shape: bf16[2,4,4,16], index: 2, kind: output, shape index: {}]
  %s3 = sld [smem:[#allocation0]]
  $region41: #{_lambda_.32} parent=0
    _
  %s5 = ssub.s32 1, %s3
  %s6 = scalar_select 0, %s5, %s3
  loop: start=0, step=1, limit=4
  $region2: #{_lambda_.32} parent=0 // loop_pre_header
    _
  $region3: #{_lambda_.32} parent=0 // loop_header
    %s8 = sphi 0, %s12
    %p9 = scmp.ge.s32.totalorder %s8, 4
    %s18 = sphi 0, %s20
    %s21 = sphi 0, %s18
    %s22 = sphi 0, %s21
    %s38 = sphi 0, %s22
    %s42 = sphi 0, %s42
    %s44 = sphi 0, %s42
    %s45 = sphi 0, %s44
    %s59 = sphi 0, %s45
    %s65 = sphi 0, %s67
    %s68 = sphi 0, %s65
    %s69 = sphi 0, %s68
    %s85 = sphi 0, %s69
  $region4: #{_lambda_.32} parent=0 // loop_header_branch
    %11 = sbr.rel (%p9) target = $region8
  $region5: #{_lambda_.32} parent=0 // loop_body
    %s13 = ssub.s32 %s8, 1
    %s14 = ssub.s32 %s8, 2
    %s15 = sadd.s32 %s8, 1
    %s16 = ssub.s32 %s8, %s15
    %p17 = scmp.eq.s32.totalorder %s16, 0
    %s19 = sadd.s32 %s18, 1
    %s20 = scalar_select %p17, %s18, %s19
    %p23 = pneg %p17
    %p24 = scmp.eq.s32.totalorder %s8, 1
    %p25 = por %p23, %p24
    %p26 = scmp.ne.s32.totalorder %s18, %s21
    %p27 = scmp.eq.s32.totalorder %s8, 0
    %p28 = por %p26, %p27
    %p29 = scmp.ne.s32.totalorder %s18, %s21
    %p30 = scmp.eq.s32.totalorder %s13, 1
    %p31 = por %p29, %p30
    %p32 = scmp.ne.s32.totalorder %s21, %s22
    %p33 = scmp.eq.s32.totalorder %s13, 0
    %p34 = por %p32, %p33
    %p35 = scmp.ne.s32.totalorder %s21, %s22
    %p36 = scmp.eq.s32.totalorder %s14, 1
    %p37 = por %p35, %p36
    %p39 = scmp.ne.s32.totalorder %s22, %s38
    %p40 = scmp.eq.s32.totalorder %s14, 0
    %p41 = por %p39, %p40
    %s43 = sadd.s32 %s42, 1
    %p46 = scmp.eq.s32.totalorder %s8, 1
    %p47 = scmp.ne.s32.totalorder %s42, %s44
    %p48 = scmp.eq.s32.totalorder %s8, 0
    %p49 = por %p47, %p48
    %p50 = scmp.ne.s32.totalorder %s42, %s44
    %p51 = scmp.eq.s32.totalorder %s13, 1
    %p52 = por %p50, %p51
    %p53 = scmp.ne.s32.totalorder %s44, %s45
    %p54 = scmp.eq.s32.totalorder %s13, 0
    %p55 = por %p53, %p54
    %p56 = scmp.ne.s32.totalorder %s44, %s45
    %p57 = scmp.eq.s32.totalorder %s14, 1
    %p58 = por %p56, %p57
    %p60 = scmp.ne.s32.totalorder %s45, %s59
    %p61 = scmp.eq.s32.totalorder %s14, 0
    %p62 = por %p60, %p61
    %s63 = ssub.s32 %s8, %s15
    %p64 = scmp.eq.s32.totalorder %s63, 0
    %s66 = sadd.s32 %s65, 1
    %s67 = scalar_select %p64, %s65, %s66
    %p70 = pneg %p64
    %p71 = scmp.eq.s32.totalorder %s8, 1
    %p72 = por %p70, %p71
    %p73 = scmp.ne.s32.totalorder %s65, %s68
    %p74 = scmp.eq.s32.totalorder %s8, 0
    %p75 = por %p73, %p74
    %p76 = scmp.ne.s32.totalorder %s65, %s68
    %p77 = scmp.eq.s32.totalorder %s13, 1
    %p78 = por %p76, %p77
    %p79 = scmp.ne.s32.totalorder %s68, %s69
    %p80 = scmp.eq.s32.totalorder %s13, 0
    %p81 = por %p79, %p80
    %p82 = scmp.ne.s32.totalorder %s68, %s69
    %p83 = scmp.eq.s32.totalorder %s14, 1
    %p84 = por %p82, %p83
    %p86 = scmp.ne.s32.totalorder %s69, %s85
    %p87 = scmp.eq.s32.totalorder %s14, 0
    %p88 = por %p86, %p87
    %p89 = scmp.le.s32.totalorder 1, %s8
    %p90 = scmp.lt.s32.totalorder %s8, 3
    %p91 = pnand %p89, %p90
    %p92 = pneg %p91
    // Predicated region
    $region9: #{_lambda_.32} parent=5 // pred_check
      _
    $region10: #{_lambda_.32} parent=5 // pred_check_branch
      %94 = sbr.rel (%p91) target = $region12
    $region11: #{_lambda_.32} parent=5 // pred_region
      %s95 = ssub.s32 %s8, 1
      // Predicated region
      $region13: #{_lambda_.32} parent=11 // pred_check
        %p96 = pneg %p55
      $region14: #{_lambda_.32} parent=11 // pred_check_branch
        %98 = sbr.rel (%p96) target = $region16
      $region15: #{_lambda_.32} parent=11 // pred_region
        _
      $region16: #{_lambda_.32} parent=11 // pred_fallthru
        _
    $region12: #{_lambda_.32} parent=5 // pred_fallthru
      _
    %p99 = scmp.lt.s32.totalorder %s8, 2
    // Predicated region
    $region17: #{_lambda_.32} parent=5 // pred_check
      %p100 = pneg %p99
    $region18: #{_lambda_.32} parent=5 // pred_check_branch
      %102 = sbr.rel (%p100) target = $region20
    $region19: #{_lambda_.32} parent=5 // pred_region
      // Predicated region
      $region21: #{_lambda_.32} parent=19 // pred_check
        %p103 = pneg %p28
      $region22: #{_lambda_.32} parent=19 // pred_check_branch
        %105 = sbr.rel (%p103) target = $region24
      $region23: #{_lambda_.32} parent=19 // pred_region
        %p106 = scmp.lt.s32.totalorder %s8, 1
        %s107 = scalar_select %p106, %s8, 1
        %s108 = smul.addr %s107, 6
        %s109 = smul.addr %s108, 4
        %s110 = scalar_lea.vmem %s0, %s109
      $region24: #{_lambda_.32} parent=19 // pred_fallthru
        _
    $region20: #{_lambda_.32} parent=5 // pred_fallthru
      _
    %p111 = scmp.le.s32.totalorder 1, %s8
    %p112 = scmp.lt.s32.totalorder %s8, 3
    %p113 = pnand %p111, %p112
    %p114 = pneg %p113
    // Predicated region
    $region25: #{_lambda_.32} parent=5 // pred_check
      _
    $region26: #{_lambda_.32} parent=5 // pred_check_branch
      %116 = sbr.rel (%p113) target = $region28
    $region27: #{_lambda_.32} parent=5 // pred_region
      %s117 = ssub.s32 %s8, 1
      %p118 = scmp.lt.s32.totalorder %s13, 1
      %s119 = scalar_select %p118, %s13, 1
      %s120 = smul.addr %s119, 6
      %s121 = smul.addr %s120, 4
      %s122 = scalar_lea.vmem %s0, %s121
      %p123 = pneg %p34
      %p124 = pneg %p31
      %p125 = pneg %p55
      %p126 = pneg %p52
      %p127 = pneg %p81
      %p128 = pneg %p78
      %p129 = scmp.lt.s32.totalorder %s13, 1
      %s130 = scalar_select %p129, %s13, 1
      %s131 = smul.addr %s130, 4
      %s132 = smul.addr %s131, 2
      %s133 = scalar_lea.vmem %s2, %s132
      %p134 = scmp.lt.s32.totalorder %s13, 1
      %s135 = scalar_select %p134, %s13, 1
      %s136 = smul.addr %s135, 6
      %s137 = smul.addr %s136, 4
      %s138 = scalar_lea.vmem %s0, %s137
      %p139 = scmp.lt.s32.totalorder %s13, 1
      %s140 = scalar_select %p139, %s13, 1
      %s141 = smul.addr %s140, 4
      %s142 = smul.addr %s141, 2
      %s143 = scalar_lea.vmem %s2, %s142
      %v144 = vld [vmem:[%s138] sm:$0x7]
      %v145 = vld [vmem:[%s138 + $0x4] sm:$0x7]
      %v146 = vld [vmem:[%s138 + $0x8] sm:$0x7]
      %v147 = vld [vmem:[%s138 + $0xc] sm:$0x7]
      %v148 = vld [vmem:[%s138 + $0x10] sm:$0x7]
      %v149 = vld [vmem:[%s138 + $0x14] sm:$0x7]
      %v150 = vunpack.c.l.bf16 %v144
      %v151 = vunpack.c.l.bf16 %v145
      %v152 = vunpack.c.l.bf16 %v146
      %v153 = vunpack.c.l.bf16 %v147
      %v154 = vunpack.c.l.bf16 %v148
      %v155 = vunpack.c.l.bf16 %v149
      %v160 = vrot.slane %v150, 1
      %v161 = vrot.slane %v151, 1
      %v162 = vrot.slane %v152, 1
      %v163 = vrot.slane %v153, 1
      %v168 = vadd.f32 %v150, %v160
      %v169 = vadd.f32 %v151, %v161
      %v170 = vadd.f32 %v152, %v162
      %v171 = vadd.f32 %v153, %v163
      %v172 = vrot.slane %v150, 2
      %v173 = vrot.slane %v151, 2
      %v174 = vrot.slane %v152, 2
      %v175 = vrot.slane %v153, 2
      %v180 = vadd.f32 %v168, %v172
      %v181 = vadd.f32 %v169, %v173
      %v182 = vadd.f32 %v170, %v174
      %v183 = vadd.f32 %v171, %v175
      %v184 = vadd.f32 %v180, %v151
      %v185 = vadd.f32 %v181, %v152
      %v186 = vadd.f32 %v182, %v153
      %v187 = vadd.f32 %v183, %v154
      %v189 = vrot.slane %v154, 1
      %v191 = vadd.f32 %v184, %v161
      %v192 = vadd.f32 %v185, %v162
      %v193 = vadd.f32 %v186, %v163
      %v194 = vadd.f32 %v187, %v189
      %v195 = vrot.slane %v154, 2
      %v197 = vadd.f32 %v191, %v173
      %v198 = vadd.f32 %v192, %v174
      %v199 = vadd.f32 %v193, %v175
      %v200 = vadd.f32 %v194, %v195
      %v201 = vadd.f32 %v197, %v152
      %v202 = vadd.f32 %v198, %v153
      %v203 = vadd.f32 %v199, %v154
      %v204 = vadd.f32 %v200, %v155
      %v206 = vrot.slane %v155, 1
      %v208 = vadd.f32 %v201, %v162
      %v209 = vadd.f32 %v202, %v163
      %v210 = vadd.f32 %v203, %v189
      %v211 = vadd.f32 %v204, %v206
      %v212 = vrot.slane %v155, 2
      %v214 = vadd.f32 %v208, %v174
      %v215 = vadd.f32 %v209, %v175
      %v216 = vadd.f32 %v210, %v195
      %v217 = vadd.f32 %v211, %v212
      %v218 = vld [vmem:[%s1] sm:$0xf]
      %v219 = vld [vmem:[%s1 + $0x4] sm:$0xf]
      %v220 = vld [vmem:[%s1 + $0x8] sm:$0xf]
      %v221 = vld [vmem:[%s1 + $0xc] sm:$0xf]
      %223 = vset.pattern.permute.xlu0 0
      %224 = vperm.xlu0 %223, %v218
      %v225 = vpop.permute.xlu0 %224
      %228 = vset.pattern.permute.xlu0 0
      %229 = vperm.xlu0 %228, %v219
      %v230 = vpop.permute.xlu0 %229
      %233 = vset.pattern.permute.xlu0 0
      %234 = vperm.xlu0 %233, %v220
      %v235 = vpop.permute.xlu0 %234
      %238 = vset.pattern.permute.xlu0 0
      %239 = vperm.xlu0 %238, %v221
      %v240 = vpop.permute.xlu0 %239
      %v242 = vmul.f32 %v214, %v225
      %v243 = vmul.f32 %v215, %v230
      %v244 = vmul.f32 %v216, %v235
      %v245 = vmul.f32 %v217, %v240
      %v246 = vpack.c.bf16 %v242, %v242
      %v247 = vpack.c.bf16 %v243, %v243
      %v248 = vpack.c.bf16 %v244, %v244
      %v249 = vpack.c.bf16 %v245, %v245
      %vm250 = vcmask 123904
      %251 = vst.msk [vmem:[%s143] sm:$0x3] %vm250, %v246
      %252 = vst.msk [vmem:[%s143 + $0x2] sm:$0x3] %vm250, %v247
      %253 = vst.msk [vmem:[%s143 + $0x4] sm:$0x3] %vm250, %v248
      %254 = vst.msk [vmem:[%s143 + $0x6] sm:$0x3] %vm250, %v249
      %p255 = scmp.lt.s32.totalorder %s13, 1
      %s256 = scalar_select %p255, %s13, 1
      %s257 = smul.addr %s256, 4
      %s258 = smul.addr %s257, 2
      %s259 = scalar_lea.vmem %s2, %s258
      // Predicated region
      $region29: #{_lambda_.32} parent=27 // pred_check
        %p260 = pneg %p78
      $region30: #{_lambda_.32} parent=27 // pred_check_branch
        %262 = sbr.rel (%p260) target = $region32
      $region31: #{_lambda_.32} parent=27 // pred_region
        _
      $region32: #{_lambda_.32} parent=27 // pred_fallthru
        _
    $region28: #{_lambda_.32} parent=5 // pred_fallthru
      _
    %p263 = scmp.le.s32.totalorder 2, %s8
    // Predicated region
    $region33: #{_lambda_.32} parent=5 // pred_check
      %p264 = pneg %p263
    $region34: #{_lambda_.32} parent=5 // pred_check_branch
      %266 = sbr.rel (%p264) target = $region36
    $region35: #{_lambda_.32} parent=5 // pred_region
      %s267 = ssub.s32 %s8, 2
      // Predicated region
      $region37: #{_lambda_.32} parent=35 // pred_check
        %p268 = pneg %p84
      $region38: #{_lambda_.32} parent=35 // pred_check_branch
        %270 = sbr.rel (%p268) target = $region40
      $region39: #{_lambda_.32} parent=35 // pred_region
        %p271 = scmp.lt.s32.totalorder %s14, 1
        %s272 = scalar_select %p271, %s14, 1
        %s273 = smul.addr %s272, 4
        %s274 = smul.addr %s273, 2
        %s275 = scalar_lea.vmem %s2, %s274
      $region40: #{_lambda_.32} parent=35 // pred_fallthru
        _
    $region36: #{_lambda_.32} parent=5 // pred_fallthru
      _
  $region6: #{_lambda_.32} parent=0 // loop_footer
    %s12 = sadd.s32 1, %s8
  $region7: #{_lambda_.32} parent=0 // loop_footer_branch
    %7 = sbr.rel target = $region3
  $region8: #{_lambda_.32} parent=0 // loop_exit
    _

// kernel: _lambda_.33
$region0: #{_lambda_.33}
  #allocation0 [shape = 'u32[]', space=smem, size = 0x4, offset = 0x4, fixed_abs, tag = 'smem constant byte address 0x4 - core index']
  #allocation1 [shape = 'u32[144,128]{1,0:T(1,128)}', space=vmem, size = 0x12000, scoped, tag = 'internal scratch']
  %s0 = inlined_call_operand.vmem [shape: bf16[2,6,6,16], index: 0, kind: input, shape index: {}]
  %s1 = inlined_call_operand.vmem [shape: bf16[2,4,4,16], index: 1, kind: output, shape index: {}]
  %s2 = sld [smem:[#allocation0]]
  $region37: #{_lambda_.33} parent=0
    _
  %s4 = ssub.s32 1, %s2
  %s5 = scalar_select 0, %s4, %s2
  loop: start=0, step=1, limit=4
  $region2: #{_lambda_.33} parent=0 // loop_pre_header
    _
  $region3: #{_lambda_.33} parent=0 // loop_header
    %s7 = sphi 0, %s11
    %p8 = scmp.ge.s32.totalorder %s7, 4
    %s17 = sphi 0, %s19
    %s20 = sphi 0, %s17
    %s21 = sphi 0, %s20
    %s37 = sphi 0, %s21
    %s43 = sphi 0, %s45
    %s46 = sphi 0, %s43
    %s47 = sphi 0, %s46
    %s63 = sphi 0, %s47
  $region4: #{_lambda_.33} parent=0 // loop_header_branch
    %10 = sbr.rel (%p8) target = $region8
  $region5: #{_lambda_.33} parent=0 // loop_body
    %s12 = ssub.s32 %s7, 1
    %s13 = ssub.s32 %s7, 2
    %s14 = sadd.s32 %s7, 1
    %s15 = ssub.s32 %s7, %s14
    %p16 = scmp.eq.s32.totalorder %s15, 0
    %s18 = sadd.s32 %s17, 1
    %s19 = scalar_select %p16, %s17, %s18
    %p22 = pneg %p16
    %p23 = scmp.eq.s32.totalorder %s7, 1
    %p24 = por %p22, %p23
    %p25 = scmp.ne.s32.totalorder %s17, %s20
    %p26 = scmp.eq.s32.totalorder %s7, 0
    %p27 = por %p25, %p26
    %p28 = scmp.ne.s32.totalorder %s17, %s20
    %p29 = scmp.eq.s32.totalorder %s12, 1
    %p30 = por %p28, %p29
    %p31 = scmp.ne.s32.totalorder %s20, %s21
    %p32 = scmp.eq.s32.totalorder %s12, 0
    %p33 = por %p31, %p32
    %p34 = scmp.ne.s32.totalorder %s20, %s21
    %p35 = scmp.eq.s32.totalorder %s13, 1
    %p36 = por %p34, %p35
    %p38 = scmp.ne.s32.totalorder %s21, %s37
    %p39 = scmp.eq.s32.totalorder %s13, 0
    %p40 = por %p38, %p39
    %s41 = ssub.s32 %s7, %s14
    %p42 = scmp.eq.s32.totalorder %s41, 0
    %s44 = sadd.s32 %s43, 1
    %s45 = scalar_select %p42, %s43, %s44
    %p48 = pneg %p42
    %p49 = scmp.eq.s32.totalorder %s7, 1
    %p50 = por %p48, %p49
    %p51 = scmp.ne.s32.totalorder %s43, %s46
    %p52 = scmp.eq.s32.totalorder %s7, 0
    %p53 = por %p51, %p52
    %p54 = scmp.ne.s32.totalorder %s43, %s46
    %p55 = scmp.eq.s32.totalorder %s12, 1
    %p56 = por %p54, %p55
    %p57 = scmp.ne.s32.totalorder %s46, %s47
    %p58 = scmp.eq.s32.totalorder %s12, 0
    %p59 = por %p57, %p58
    %p60 = scmp.ne.s32.totalorder %s46, %s47
    %p61 = scmp.eq.s32.totalorder %s13, 1
    %p62 = por %p60, %p61
    %p64 = scmp.ne.s32.totalorder %s47, %s63
    %p65 = scmp.eq.s32.totalorder %s13, 0
    %p66 = por %p64, %p65
    %p67 = scmp.le.s32.totalorder 1, %s7
    %p68 = scmp.lt.s32.totalorder %s7, 3
    %p69 = pnand %p67, %p68
    %p70 = pneg %p69
    // Predicated region
    $region9: #{_lambda_.33} parent=5 // pred_check
      _
    $region10: #{_lambda_.33} parent=5 // pred_check_branch
      %72 = sbr.rel (%p69) target = $region12
    $region11: #{_lambda_.33} parent=5 // pred_region
      %s73 = ssub.s32 %s7, 1
    $region12: #{_lambda_.33} parent=5 // pred_fallthru
      _
    %p74 = scmp.lt.s32.totalorder %s7, 2
    // Predicated region
    $region13: #{_lambda_.33} parent=5 // pred_check
      %p75 = pneg %p74
    $region14: #{_lambda_.33} parent=5 // pred_check_branch
      %77 = sbr.rel (%p75) target = $region16
    $region15: #{_lambda_.33} parent=5 // pred_region
      // Predicated region
      $region17: #{_lambda_.33} parent=15 // pred_check
        %p78 = pneg %p27
      $region18: #{_lambda_.33} parent=15 // pred_check_branch
        %80 = sbr.rel (%p78) target = $region20
      $region19: #{_lambda_.33} parent=15 // pred_region
        %p81 = scmp.lt.s32.totalorder %s7, 1
        %s82 = scalar_select %p81, %s7, 1
        %s83 = smul.addr %s82, 6
        %s84 = smul.addr %s83, 4
        %s85 = scalar_lea.vmem %s0, %s84
      $region20: #{_lambda_.33} parent=15 // pred_fallthru
        _
    $region16: #{_lambda_.33} parent=5 // pred_fallthru
      _
    %p86 = scmp.le.s32.totalorder 1, %s7
    %p87 = scmp.lt.s32.totalorder %s7, 3
    %p88 = pnand %p86, %p87
    %p89 = pneg %p88
    // Predicated region
    $region21: #{_lambda_.33} parent=5 // pred_check
      _
    $region22: #{_lambda_.33} parent=5 // pred_check_branch
      %91 = sbr.rel (%p88) target = $region24
    $region23: #{_lambda_.33} parent=5 // pred_region
      %s92 = ssub.s32 %s7, 1
      %p93 = scmp.lt.s32.totalorder %s12, 1
      %s94 = scalar_select %p93, %s12, 1
      %s95 = smul.addr %s94, 6
      %s96 = smul.addr %s95, 4
      %s97 = scalar_lea.vmem %s0, %s96
      %p98 = pneg %p33
      %p99 = pneg %p30
      %p100 = pneg %p59
      %p101 = pneg %p56
      %p102 = scmp.lt.s32.totalorder %s12, 1
      %s103 = scalar_select %p102, %s12, 1
      %s104 = smul.addr %s103, 4
      %s105 = smul.addr %s104, 2
      %s106 = scalar_lea.vmem %s1, %s105
      %p107 = scmp.lt.s32.totalorder %s12, 1
      %s108 = scalar_select %p107, %s12, 1
      %s109 = smul.addr %s108, 6
      %s110 = smul.addr %s109, 4
      %s111 = scalar_lea.vmem %s0, %s110
      %p112 = scmp.lt.s32.totalorder %s12, 1
      %s113 = scalar_select %p112, %s12, 1
      %s114 = smul.addr %s113, 4
      %s115 = smul.addr %s114, 2
      %s116 = scalar_lea.vmem %s1, %s115
      %v117 = vld [vmem:[%s111] sm:$0x7]
      %v118 = vld [vmem:[%s111 + $0x4] sm:$0x7]
      %v119 = vld [vmem:[%s111 + $0x8] sm:$0x7]
      %v120 = vld [vmem:[%s111 + $0xc] sm:$0x7]
      %v121 = vld [vmem:[%s111 + $0x10] sm:$0x7]
      %v122 = vld [vmem:[%s111 + $0x14] sm:$0x7]
      %v123 = vunpack.c.l.bf16 %v117
      %v124 = vunpack.c.l.bf16 %v118
      %v125 = vunpack.c.l.bf16 %v119
      %v126 = vunpack.c.l.bf16 %v120
      %v127 = vunpack.c.l.bf16 %v121
      %v128 = vunpack.c.l.bf16 %v122
      %v133 = vrot.slane %v123, 1
      %v134 = vrot.slane %v124, 1
      %v135 = vrot.slane %v125, 1
      %v136 = vrot.slane %v126, 1
      %v141 = vmax.f32 %v123, %v133
      %v142 = vmax.f32 %v124, %v134
      %v143 = vmax.f32 %v125, %v135
      %v144 = vmax.f32 %v126, %v136
      %v145 = vrot.slane %v123, 2
      %v146 = vrot.slane %v124, 2
      %v147 = vrot.slane %v125, 2
      %v148 = vrot.slane %v126, 2
      %v153 = vmax.f32 %v141, %v145
      %v154 = vmax.f32 %v142, %v146
      %v155 = vmax.f32 %v143, %v147
      %v156 = vmax.f32 %v144, %v148
      %v157 = vmax.f32 %v153, %v124
      %v158 = vmax.f32 %v154, %v125
      %v159 = vmax.f32 %v155, %v126
      %v160 = vmax.f32 %v156, %v127
      %v162 = vrot.slane %v127, 1
      %v164 = vmax.f32 %v157, %v134
      %v165 = vmax.f32 %v158, %v135
      %v166 = vmax.f32 %v159, %v136
      %v167 = vmax.f32 %v160, %v162
      %v168 = vrot.slane %v127, 2
      %v170 = vmax.f32 %v164, %v146
      %v171 = vmax.f32 %v165, %v147
      %v172 = vmax.f32 %v166, %v148
      %v173 = vmax.f32 %v167, %v168
      %v174 = vmax.f32 %v170, %v125
      %v175 = vmax.f32 %v171, %v126
      %v176 = vmax.f32 %v172, %v127
      %v177 = vmax.f32 %v173, %v128
      %v179 = vrot.slane %v128, 1
      %v181 = vmax.f32 %v174, %v135
      %v182 = vmax.f32 %v175, %v136
      %v183 = vmax.f32 %v176, %v162
      %v184 = vmax.f32 %v177, %v179
      %v185 = vrot.slane %v128, 2
      %v187 = vmax.f32 %v181, %v147
      %v188 = vmax.f32 %v182, %v148
      %v189 = vmax.f32 %v183, %v168
      %v190 = vmax.f32 %v184, %v185
      %v191 = vpack.c.bf16 %v187, %v187
      %v192 = vpack.c.bf16 %v188, %v188
      %v193 = vpack.c.bf16 %v189, %v189
      %v194 = vpack.c.bf16 %v190, %v190
      %vm195 = vcmask 123904
      %196 = vst.msk [vmem:[%s116] sm:$0x3] %vm195, %v191
      %197 = vst.msk [vmem:[%s116 + $0x2] sm:$0x3] %vm195, %v192
      %198 = vst.msk [vmem:[%s116 + $0x4] sm:$0x3] %vm195, %v193
      %199 = vst.msk [vmem:[%s116 + $0x6] sm:$0x3] %vm195, %v194
      %p200 = scmp.lt.s32.totalorder %s12, 1
      %s201 = scalar_select %p200, %s12, 1
      %s202 = smul.addr %s201, 4
      %s203 = smul.addr %s202, 2
      %s204 = scalar_lea.vmem %s1, %s203
      // Predicated region
      $region25: #{_lambda_.33} parent=23 // pred_check
        %p205 = pneg %p56
      $region26: #{_lambda_.33} parent=23 // pred_check_branch
        %207 = sbr.rel (%p205) target = $region28
      $region27: #{_lambda_.33} parent=23 // pred_region
        _
      $region28: #{_lambda_.33} parent=23 // pred_fallthru
        _
    $region24: #{_lambda_.33} parent=5 // pred_fallthru
      _
    %p208 = scmp.le.s32.totalorder 2, %s7
    // Predicated region
    $region29: #{_lambda_.33} parent=5 // pred_check
      %p209 = pneg %p208
    $region30: #{_lambda_.33} parent=5 // pred_check_branch
      %211 = sbr.rel (%p209) target = $region32
    $region31: #{_lambda_.33} parent=5 // pred_region
      %s212 = ssub.s32 %s7, 2
      // Predicated region
      $region33: #{_lambda_.33} parent=31 // pred_check
        %p213 = pneg %p62
      $region34: #{_lambda_.33} parent=31 // pred_check_branch
        %215 = sbr.rel (%p213) target = $region36
      $region35: #{_lambda_.33} parent=31 // pred_region
        %p216 = scmp.lt.s32.totalorder %s13, 1
        %s217 = scalar_select %p216, %s13, 1
        %s218 = smul.addr %s217, 4
        %s219 = smul.addr %s218, 2
        %s220 = scalar_lea.vmem %s1, %s219
      $region36: #{_lambda_.33} parent=31 // pred_fallthru
        _
    $region32: #{_lambda_.33} parent=5 // pred_fallthru
      _
  $region6: #{_lambda_.33} parent=0 // loop_footer
    %s11 = sadd.s32 1, %s7
  $region7: #{_lambda_.33} parent=0 // loop_footer_branch
    %6 = sbr.rel target = $region3
  $region8: #{_lambda_.33} parent=0 // loop_exit
    _

// kernel: _lambda_.29
$region0: #{_lambda_.29}
  #allocation0 [shape = 'u32[]', space=smem, size = 0x4, offset = 0x4, fixed_abs, tag = 'smem constant byte address 0x4 - core index']
  #allocation1 [shape = 'u32[144,128]{1,0:T(1,128)}', space=vmem, size = 0x12000, scoped, tag = 'internal scratch']
  %s0 = inlined_call_operand.vmem [shape: bf16[32,8], index: 0, kind: input, shape index: {}]
  %s1 = inlined_call_operand.vmem [shape: bf16[8,16], index: 1, kind: input, shape index: {}]
  %s2 = inlined_call_operand.vmem [shape: f32[2,16], index: 2, kind: input, shape index: {}]
  %s3 = inlined_call_operand.vmem [shape: bf16[32,16], index: 3, kind: output, shape index: {}]
  %s4 = sld [smem:[#allocation0]]
  $region22: #{_lambda_.29} parent=0
    _
  %s6 = ssub.s32 1, %s4
  %s7 = scalar_select 0, %s6, %s4
  // Predicated region
  $region2: #{_lambda_.29} parent=0 // pred_check
    _
  $region3: #{_lambda_.29} parent=0 // pred_check_branch
    %9 = sbr.rel (0) target = $region5
  $region4: #{_lambda_.29} parent=0 // pred_region
    _
  $region5: #{_lambda_.29} parent=0 // pred_fallthru
    _
  // Predicated region
  $region6: #{_lambda_.29} parent=0 // pred_check
    _
  $region7: #{_lambda_.29} parent=0 // pred_check_branch
    %11 = sbr.rel (0) target = $region9
  $region8: #{_lambda_.29} parent=0 // pred_region
    _
  $region9: #{_lambda_.29} parent=0 // pred_fallthru
    _
  // Predicated region
  $region10: #{_lambda_.29} parent=0 // pred_check
    _
  $region11: #{_lambda_.29} parent=0 // pred_check_branch
    %13 = sbr.rel (0) target = $region13
  $region12: #{_lambda_.29} parent=0 // pred_region
    _
  $region13: #{_lambda_.29} parent=0 // pred_fallthru
    _
  %v15 = vld [vmem:[%s0] sm:$0xf]
  %v16 = vld [vmem:[%s0 + $0x4] sm:$0xf]
  %v17 = vld [vmem:[%s0 + $0x8] sm:$0xf]
  %v18 = vld [vmem:[%s0 + $0xc] sm:$0xf]
  %v19 = vmax.bf16 %v15, 0
  %v20 = vmax.bf16 %v16, 0
  %v21 = vmax.bf16 %v17, 0
  %v22 = vmax.bf16 %v18, 0
  %v23 = vld [vmem:[%s1] sm:$0xf]
  %v28 = vunpack.c.l.b16 %v19
  %v29 = vunpack.c.l.b16 %v20
  %v30 = vunpack.c.l.b16 %v21
  %v31 = vunpack.c.l.b16 %v22
  %v32 = vpack.c.b16 %v29, %v28
  %v33 = vpack.c.b16 %v31, %v30
  %vm34 = vcmask 64512
  %v36 = vsel %vm34, %v32, 0
  %v39 = vsel %vm34, %v33, 0
  %vm41 = vcmask 1043456
  %v43 = vsel %vm41, %v23, 0
  %45 = vmatprep.subr.bf16.mxu0 0
  %46 = vmatpush1.bf16.msra.mxu0 %v43
  %47 = vmatprep.subr.bf16.mxu0 0
  %48 = vmatpush1.bf16.msra.mxu0 0
  %49 = vmatprep.subr.bf16.mxu0 0
  %50 = vmatpush1.bf16.msra.mxu0 0
  %51 = vmatprep.subr.bf16.mxu0 0
  %52 = vmatpush1.bf16.msra.mxu0 0
  %53 = vmatprep.subr.bf16.mxu0 0
  %54 = vmatpush1.bf16.msra.mxu0 0
  %55 = vmatprep.subr.bf16.mxu0 0
  %56 = vmatpush1.bf16.msra.mxu0 0
  %57 = vmatprep.subr.bf16.mxu0 0
  %58 = vmatpush1.bf16.msra.mxu0 0
  %59 = vmatprep.subr.bf16.mxu0 0
  %60 = vmatpush1.bf16.msra.mxu0 0
  %61 = vmatprep.subr.bf16.mxu0 0
  %62 = vmatpush1.bf16.msra.mxu0 0
  %63 = vmatprep.subr.bf16.mxu0 0
  %64 = vmatpush1.bf16.msra.mxu0 0
  %65 = vmatprep.subr.bf16.mxu0 0
  %66 = vmatpush1.bf16.msra.mxu0 0
  %67 = vmatprep.subr.bf16.mxu0 0
  %68 = vmatpush1.bf16.msra.mxu0 0
  %69 = vmatprep.subr.bf16.mxu0 0
  %70 = vmatpush1.bf16.msra.mxu0 0
  %71 = vmatprep.subr.bf16.mxu0 0
  %72 = vmatpush1.bf16.msra.mxu0 0
  %73 = vmatprep.subr.bf16.mxu0 0
  %74 = vmatpush1.bf16.msra.mxu0 0
  %75 = vmatprep.subr.bf16.mxu0 0
  %76 = vmatpush1.bf16.msra.mxu0 0
  %77 = vmatprep.mubr.bf16.mxu0 0
  %78 = vmatmul.mubr.bf16.gmra.mrb[0].mxu0 %v36
  %v79 = vpop.f32.mrb[0].mxu0
  %v80 = vadd.f32 0.0, %v79
  %v81 = vpop.f32.mrb[0].mxu0
  %v82 = vpop.f32.mrb[0].mxu0
  %v83 = vadd.f32 0.0, %v82
  %v84 = vpop.f32.mrb[0].mxu0
  %85 = vmatprep.mubr.bf16.mxu0 0
  %86 = vmatmul.mubr.bf16.gmra.mrb[0].mxu0 %v39
  %v87 = vpop.f32.mrb[0].mxu0
  %v88 = vadd.f32 0.0, %v87
  %v89 = vpop.f32.mrb[0].mxu0
  %v90 = vpop.f32.mrb[0].mxu0
  %v91 = vadd.f32 0.0, %v90
  %v92 = vpop.f32.mrb[0].mxu0
  %93 = vdwg.mxu0
  %v94 = vld [vmem:[%s2] sm:$0x1]
  %v95 = vlaneseq
  %v96 = vshrl.u32 %v95, 7
  %v97 = vsub.s32 0, %v96
  %v98 = vrot.slane %v94, %v97
  %v99 = vmul.f32 %v80, %v98
  %v100 = vmul.f32 %v83, %v98
  %v101 = vmul.f32 %v88, %v98
  %v102 = vmul.f32 %v91, %v98
  %v103 = vld [vmem:[%s2 + $0x1] sm:$0x1]
  %v104 = vlaneseq
  %v105 = vshrl.u32 %v104, 7
  %v106 = vsub.s32 0, %v105
  %v107 = vrot.slane %v103, %v106
  %v108 = vadd.f32 %v99, %v107
  %v109 = vadd.f32 %v100, %v107
  %v110 = vadd.f32 %v101, %v107
  %v111 = vadd.f32 %v102, %v107
  %v112 = vpack.c.bf16 %v109, %v108
  %v113 = vpack.c.bf16 %v111, %v110
  %v116 = vunpack.c.l.b16 %v112
  %v117 = vunpack.c.h.b16 %v112
  %v118 = vunpack.c.l.b16 %v113
  %v119 = vunpack.c.h.b16 %v113
  %v120 = vpack.c.b16 %v116, %v116
  %v121 = vpack.c.b16 %v117, %v117
  %v122 = vpack.c.b16 %v118, %v118
  %v123 = vpack.c.b16 %v119, %v119
  %vm128 = vcmask 125952
  %129 = vst.msk [vmem:[%s3] sm:$0xf] %vm128, %v120
  %130 = vst.msk [vmem:[%s3 + $0x4] sm:$0xf] %vm128, %v121
  %131 = vst.msk [vmem:[%s3 + $0x8] sm:$0xf] %vm128, %v122
  %132 = vst.msk [vmem:[%s3 + $0xc] sm:$0xf] %vm128, %v123
  // Predicated region
  $region14: #{_lambda_.29} parent=0 // pred_check
    _
  $region15: #{_lambda_.29} parent=0 // pred_check_branch
    %134 = sbr.rel (0) target = $region17
  $region16: #{_lambda_.29} parent=0 // pred_region
    _
  $region17: #{_lambda_.29} parent=0 // pred_fallthru
    _
  // Predicated region
  $region18: #{_lambda_.29} parent=0 // pred_check
    _
  $region19: #{_lambda_.29} parent=0 // pred_check_branch
    %136 = sbr.rel (0) target = $region21
  $region20: #{_lambda_.29} parent=0 // pred_region
    _
  $region21: #{_lambda_.29} parent=0 // pred_fallthru
    _

// kernel: _lambda_.36
$region0: #{_lambda_.36}
  #allocation0 [shape = 'u32[]', space=smem, size = 0x4, offset = 0x4, fixed_abs, tag = 'smem constant byte address 0x4 - core index']
  #allocation1 [shape = 'u32[144,128]{1,0:T(1,128)}', space=vmem, size = 0x12000, scoped, tag = 'internal scratch']
  %s0 = inlined_call_operand.vmem [shape: bf16[8,32], index: 0, kind: input, shape index: {}]
  %s1 = inlined_call_operand.vmem [shape: bf16[32,32], index: 1, kind: input, shape index: {}]
  %s2 = inlined_call_operand.vmem [shape: f32[2,32], index: 2, kind: input, shape index: {}]
  %s3 = inlined_call_operand.vmem [shape: bf16[8,32], index: 3, kind: output, shape index: {}]
  %s4 = sld [smem:[#allocation0]]
  $region22: #{_lambda_.36} parent=0
    _
  %s6 = ssub.s32 1, %s4
  %s7 = scalar_select 0, %s6, %s4
  // Predicated region
  $region2: #{_lambda_.36} parent=0 // pred_check
    _
  $region3: #{_lambda_.36} parent=0 // pred_check_branch
    %9 = sbr.rel (0) target = $region5
  $region4: #{_lambda_.36} parent=0 // pred_region
    _
  $region5: #{_lambda_.36} parent=0 // pred_fallthru
    _
  // Predicated region
  $region6: #{_lambda_.36} parent=0 // pred_check
    _
  $region7: #{_lambda_.36} parent=0 // pred_check_branch
    %11 = sbr.rel (0) target = $region9
  $region8: #{_lambda_.36} parent=0 // pred_region
    _
  $region9: #{_lambda_.36} parent=0 // pred_fallthru
    _
  // Predicated region
  $region10: #{_lambda_.36} parent=0 // pred_check
    _
  $region11: #{_lambda_.36} parent=0 // pred_check_branch
    %13 = sbr.rel (0) target = $region13
  $region12: #{_lambda_.36} parent=0 // pred_region
    _
  $region13: #{_lambda_.36} parent=0 // pred_fallthru
    _
  %v15 = vld [vmem:[%s0] sm:$0xf]
  %v16 = vmax.bf16 %v15, 0
  %v17 = vld [vmem:[%s1] sm:$0xf]
  %v18 = vld [vmem:[%s1 + $0x4] sm:$0xf]
  %v19 = vld [vmem:[%s1 + $0x8] sm:$0xf]
  %v20 = vld [vmem:[%s1 + $0xc] sm:$0xf]
  %v25 = vunpack.c.l.b16 %v17
  %v26 = vunpack.c.l.b16 %v18
  %v27 = vunpack.c.l.b16 %v19
  %v28 = vunpack.c.l.b16 %v20
  %v29 = vpack.c.b16 %v26, %v25
  %v30 = vpack.c.b16 %v28, %v27
  %vm33 = vcmask 261120
  %v35 = vsel %vm33, %v16, 0
  %37 = vmatprep.subr.bf16.mxu0 0
  %38 = vmatpush1.bf16.msra.mxu0 %v29
  %39 = vmatprep.subr.bf16.mxu0 0
  %40 = vmatpush1.bf16.msra.mxu0 %v30
  %41 = vmatprep.subr.bf16.mxu0 0
  %42 = vmatpush1.bf16.msra.mxu0 0
  %43 = vmatprep.subr.bf16.mxu0 0
  %44 = vmatpush1.bf16.msra.mxu0 0
  %45 = vmatprep.subr.bf16.mxu0 0
  %46 = vmatpush1.bf16.msra.mxu0 0
  %47 = vmatprep.subr.bf16.mxu0 0
  %48 = vmatpush1.bf16.msra.mxu0 0
  %49 = vmatprep.subr.bf16.mxu0 0
  %50 = vmatpush1.bf16.msra.mxu0 0
  %51 = vmatprep.subr.bf16.mxu0 0
  %52 = vmatpush1.bf16.msra.mxu0 0
  %53 = vmatprep.subr.bf16.mxu0 0
  %54 = vmatpush1.bf16.msra.mxu0 0
  %55 = vmatprep.subr.bf16.mxu0 0
  %56 = vmatpush1.bf16.msra.mxu0 0
  %57 = vmatprep.subr.bf16.mxu0 0
  %58 = vmatpush1.bf16.msra.mxu0 0
  %59 = vmatprep.subr.bf16.mxu0 0
  %60 = vmatpush1.bf16.msra.mxu0 0
  %61 = vmatprep.subr.bf16.mxu0 0
  %62 = vmatpush1.bf16.msra.mxu0 0
  %63 = vmatprep.subr.bf16.mxu0 0
  %64 = vmatpush1.bf16.msra.mxu0 0
  %65 = vmatprep.subr.bf16.mxu0 0
  %66 = vmatpush1.bf16.msra.mxu0 0
  %67 = vmatprep.subr.bf16.mxu0 0
  %68 = vmatpush1.bf16.msra.mxu0 0
  %69 = vmatprep.mubr.bf16.mxu0 0
  %70 = vmatmul.mubr.bf16.gmra.mrb[0].mxu0 %v35
  %v71 = vpop.f32.mrb[0].mxu0
  %v72 = vadd.f32 0.0, %v71
  %v73 = vpop.f32.mrb[0].mxu0
  %v74 = vpop.f32.mrb[0].mxu0
  %v75 = vpop.f32.mrb[0].mxu0
  %76 = vdwg.mxu0
  %v77 = vld [vmem:[%s2] sm:$0x1]
  %v78 = vlaneseq
  %v79 = vshrl.u32 %v78, 7
  %v80 = vsub.s32 0, %v79
  %v81 = vrot.slane %v77, %v80
  %v82 = vmul.f32 %v72, %v81
  %v83 = vld [vmem:[%s2 + $0x1] sm:$0x1]
  %v84 = vlaneseq
  %v85 = vshrl.u32 %v84, 7
  %v86 = vsub.s32 0, %v85
  %v87 = vrot.slane %v83, %v86
  %v88 = vadd.f32 %v82, %v87
  %v89 = vpack.c.bf16 %v88, %v88
  %vm90 = vcmask 257024
  %91 = vst.msk [vmem:[%s3] sm:$0xf] %vm90, %v89
  // Predicated region
  $region14: #{_lambda_.36} parent=0 // pred_check
    _
  $region15: #{_lambda_.36} parent=0 // pred_check_branch
    %93 = sbr.rel (0) target = $region17
  $region16: #{_lambda_.36} parent=0 // pred_region
    _
  $region17: #{_lambda_.36} parent=0 // pred_fallthru
    _
  // Predicated region
  $region18: #{_lambda_.36} parent=0 // pred_check
    _
  $region19: #{_lambda_.36} parent=0 // pred_check_branch
    %95 = sbr.rel (0) target = $region21
  $region20: #{_lambda_.36} parent=0 // pred_region
    _
  $region21: #{_lambda_.36} parent=0 // pred_fallthru
    _

// kernel: _lambda_.38
$region0: #{_lambda_.38}
  #allocation0 [shape = 'u32[]', space=smem, size = 0x4, offset = 0x4, fixed_abs, tag = 'smem constant byte address 0x4 - core index']
  #allocation1 [shape = 'u32[144,128]{1,0:T(1,128)}', space=vmem, size = 0x12000, scoped, tag = 'internal scratch']
  %s0 = inlined_call_operand.vmem [shape: bf16[2,4,4,32], index: 0, kind: input, shape index: {}]
  %s1 = inlined_call_operand.vmem [shape: f32[1,2,2,1], index: 1, kind: input, shape index: {}]
  %s2 = inlined_call_operand.vmem [shape: bf16[2,2,2,32], index: 2, kind: output, shape index: {}]
  %s3 = sld [smem:[#allocation0]]
  $region41: #{_lambda_.38} parent=0
    _
  %s5 = ssub.s32 1, %s3
  %s6 = scalar_select 0, %s5, %s3
  loop: start=0, step=1, limit=4
  $region2: #{_lambda_.38} parent=0 // loop_pre_header
    _
  $region3: #{_lambda_.38} parent=0 // loop_header
    %s8 = sphi 0, %s12
    %p9 = scmp.ge.s32.totalorder %s8, 4
    %s18 = sphi 0, %s20
    %s21 = sphi 0, %s18
    %s22 = sphi 0, %s21
    %s38 = sphi 0, %s22
    %s42 = sphi 0, %s42
    %s44 = sphi 0, %s42
    %s45 = sphi 0, %s44
    %s59 = sphi 0, %s45
    %s65 = sphi 0, %s67
    %s68 = sphi 0, %s65
    %s69 = sphi 0, %s68
    %s85 = sphi 0, %s69
  $region4: #{_lambda_.38} parent=0 // loop_header_branch
    %11 = sbr.rel (%p9) target = $region8
  $region5: #{_lambda_.38} parent=0 // loop_body
    %s13 = ssub.s32 %s8, 1
    %s14 = ssub.s32 %s8, 2
    %s15 = sadd.s32 %s8, 1
    %s16 = ssub.s32 %s8, %s15
    %p17 = scmp.eq.s32.totalorder %s16, 0
    %s19 = sadd.s32 %s18, 1
    %s20 = scalar_select %p17, %s18, %s19
    %p23 = pneg %p17
    %p24 = scmp.eq.s32.totalorder %s8, 1
    %p25 = por %p23, %p24
    %p26 = scmp.ne.s32.totalorder %s18, %s21
    %p27 = scmp.eq.s32.totalorder %s8, 0
    %p28 = por %p26, %p27
    %p29 = scmp.ne.s32.totalorder %s18, %s21
    %p30 = scmp.eq.s32.totalorder %s13, 1
    %p31 = por %p29, %p30
    %p32 = scmp.ne.s32.totalorder %s21, %s22
    %p33 = scmp.eq.s32.totalorder %s13, 0
    %p34 = por %p32, %p33
    %p35 = scmp.ne.s32.totalorder %s21, %s22
    %p36 = scmp.eq.s32.totalorder %s14, 1
    %p37 = por %p35, %p36
    %p39 = scmp.ne.s32.totalorder %s22, %s38
    %p40 = scmp.eq.s32.totalorder %s14, 0
    %p41 = por %p39, %p40
    %s43 = sadd.s32 %s42, 1
    %p46 = scmp.eq.s32.totalorder %s8, 1
    %p47 = scmp.ne.s32.totalorder %s42, %s44
    %p48 = scmp.eq.s32.totalorder %s8, 0
    %p49 = por %p47, %p48
    %p50 = scmp.ne.s32.totalorder %s42, %s44
    %p51 = scmp.eq.s32.totalorder %s13, 1
    %p52 = por %p50, %p51
    %p53 = scmp.ne.s32.totalorder %s44, %s45
    %p54 = scmp.eq.s32.totalorder %s13, 0
    %p55 = por %p53, %p54
    %p56 = scmp.ne.s32.totalorder %s44, %s45
    %p57 = scmp.eq.s32.totalorder %s14, 1
    %p58 = por %p56, %p57
    %p60 = scmp.ne.s32.totalorder %s45, %s59
    %p61 = scmp.eq.s32.totalorder %s14, 0
    %p62 = por %p60, %p61
    %s63 = ssub.s32 %s8, %s15
    %p64 = scmp.eq.s32.totalorder %s63, 0
    %s66 = sadd.s32 %s65, 1
    %s67 = scalar_select %p64, %s65, %s66
    %p70 = pneg %p64
    %p71 = scmp.eq.s32.totalorder %s8, 1
    %p72 = por %p70, %p71
    %p73 = scmp.ne.s32.totalorder %s65, %s68
    %p74 = scmp.eq.s32.totalorder %s8, 0
    %p75 = por %p73, %p74
    %p76 = scmp.ne.s32.totalorder %s65, %s68
    %p77 = scmp.eq.s32.totalorder %s13, 1
    %p78 = por %p76, %p77
    %p79 = scmp.ne.s32.totalorder %s68, %s69
    %p80 = scmp.eq.s32.totalorder %s13, 0
    %p81 = por %p79, %p80
    %p82 = scmp.ne.s32.totalorder %s68, %s69
    %p83 = scmp.eq.s32.totalorder %s14, 1
    %p84 = por %p82, %p83
    %p86 = scmp.ne.s32.totalorder %s69, %s85
    %p87 = scmp.eq.s32.totalorder %s14, 0
    %p88 = por %p86, %p87
    %p89 = scmp.le.s32.totalorder 1, %s8
    %p90 = scmp.lt.s32.totalorder %s8, 3
    %p91 = pnand %p89, %p90
    %p92 = pneg %p91
    // Predicated region
    $region9: #{_lambda_.38} parent=5 // pred_check
      _
    $region10: #{_lambda_.38} parent=5 // pred_check_branch
      %94 = sbr.rel (%p91) target = $region12
    $region11: #{_lambda_.38} parent=5 // pred_region
      %s95 = ssub.s32 %s8, 1
      // Predicated region
      $region13: #{_lambda_.38} parent=11 // pred_check
        %p96 = pneg %p55
      $region14: #{_lambda_.38} parent=11 // pred_check_branch
        %98 = sbr.rel (%p96) target = $region16
      $region15: #{_lambda_.38} parent=11 // pred_region
        _
      $region16: #{_lambda_.38} parent=11 // pred_fallthru
        _
    $region12: #{_lambda_.38} parent=5 // pred_fallthru
      _
    %p99 = scmp.lt.s32.totalorder %s8, 2
    // Predicated region
    $region17: #{_lambda_.38} parent=5 // pred_check
      %p100 = pneg %p99
    $region18: #{_lambda_.38} parent=5 // pred_check_branch
      %102 = sbr.rel (%p100) target = $region20
    $region19: #{_lambda_.38} parent=5 // pred_region
      // Predicated region
      $region21: #{_lambda_.38} parent=19 // pred_check
        %p103 = pneg %p28
      $region22: #{_lambda_.38} parent=19 // pred_check_branch
        %105 = sbr.rel (%p103) target = $region24
      $region23: #{_lambda_.38} parent=19 // pred_region
        %p106 = scmp.lt.s32.totalorder %s8, 1
        %s107 = scalar_select %p106, %s8, 1
        %s108 = smul.addr %s107, 4
        %s109 = smul.addr %s108, 2
        %s110 = scalar_lea.vmem %s0, %s109
      $region24: #{_lambda_.38} parent=19 // pred_fallthru
        _
    $region20: #{_lambda_.38} parent=5 // pred_fallthru
      _
    %p111 = scmp.le.s32.totalorder 1, %s8
    %p112 = scmp.lt.s32.totalorder %s8, 3
    %p113 = pnand %p111, %p112
    %p114 = pneg %p113
    // Predicated region
    $region25: #{_lambda_.38} parent=5 // pred_check
      _
    $region26: #{_lambda_.38} parent=5 // pred_check_branch
      %116 = sbr.rel (%p113) target = $region28
    $region27: #{_lambda_.38} parent=5 // pred_region
      %s117 = ssub.s32 %s8, 1
      %p118 = scmp.lt.s32.totalorder %s13, 1
      %s119 = scalar_select %p118, %s13, 1
      %s120 = smul.addr %s119, 4
      %s121 = smul.addr %s120, 2
      %s122 = scalar_lea.vmem %s0, %s121
      %p123 = pneg %p34
      %p124 = pneg %p31
      %p125 = pneg %p55
      %p126 = pneg %p52
      %p127 = pneg %p81
      %p128 = pneg %p78
      %p129 = scmp.lt.s32.totalorder %s13, 1
      %s130 = scalar_select %p129, %s13, 1
      %s131 = smul.addr %s130, 2
      %s132 = scalar_lea.vmem %s2, %s131
      %p133 = scmp.lt.s32.totalorder %s13, 1
      %s134 = scalar_select %p133, %s13, 1
      %s135 = smul.addr %s134, 4
      %s136 = smul.addr %s135, 2
      %s137 = scalar_lea.vmem %s0, %s136
      %p138 = scmp.lt.s32.totalorder %s13, 1
      %s139 = scalar_select %p138, %s13, 1
      %s140 = smul.addr %s139, 2
      %s141 = scalar_lea.vmem %s2, %s140
      %v142 = vld [vmem:[%s137] sm:$0x3]
      %v143 = vld [vmem:[%s137 + $0x2] sm:$0x3]
      %v144 = vld [vmem:[%s137 + $0x4] sm:$0x3]
      %v145 = vld [vmem:[%s137 + $0x6] sm:$0x3]
      %v146 = vunpack.c.l.bf16 %v142
      %v147 = vunpack.c.l.bf16 %v143
      %v148 = vunpack.c.l.bf16 %v144
      %v149 = vunpack.c.l.bf16 %v145
      %v152 = vrot.slane %v146, 5
      %v153 = vrot.slane %v152, 4
      %v154 = vrot.slane %v147, 5
      %v155 = vrot.slane %v154, 4
      %v158 = vadd.f32 %v146, %v153
      %v159 = vadd.f32 %v147, %v155
      %v160 = vrot.slane %v146, 6
      %v161 = vrot.slane %v160, 4
      %v162 = vrot.slane %v147, 6
      %v163 = vrot.slane %v162, 4
      %v166 = vadd.f32 %v158, %v161
      %v167 = vadd.f32 %v159, %v163
      %v168 = vadd.f32 %v166, %v147
      %v169 = vadd.f32 %v167, %v148
      %v171 = vrot.slane %v148, 5
      %v172 = vrot.slane %v171, 4
      %v174 = vadd.f32 %v168, %v155
      %v175 = vadd.f32 %v169, %v172
      %v176 = vrot.slane %v148, 6
      %v177 = vrot.slane %v176, 4
      %v179 = vadd.f32 %v174, %v163
      %v180 = vadd.f32 %v175, %v177
      %v181 = vadd.f32 %v179, %v148
      %v182 = vadd.f32 %v180, %v149
      %v184 = vrot.slane %v149, 5
      %v185 = vrot.slane %v184, 4
      %v187 = vadd.f32 %v181, %v172
      %v188 = vadd.f32 %v182, %v185
      %v189 = vrot.slane %v149, 6
      %v190 = vrot.slane %v189, 4
      %v192 = vadd.f32 %v187, %v177
      %v193 = vadd.f32 %v188, %v190
      %v194 = vld [vmem:[%s1] sm:$0x3]
      %v195 = vld [vmem:[%s1 + $0x2] sm:$0x3]
      %197 = vset.pattern.permute.xlu0 0
      %198 = vperm.xlu0 %197, %v194
      %v199 = vpop.permute.xlu0 %198
      %202 = vset.pattern.permute.xlu0 0
      %203 = vperm.xlu0 %202, %v195
      %v204 = vpop.permute.xlu0 %203
      %v206 = vmul.f32 %v192, %v199
      %v207 = vmul.f32 %v193, %v204
      %v208 = vpack.c.bf16 %v206, %v206
      %v209 = vpack.c.bf16 %v207, %v207
      %vm210 = vcmask 253952
      %211 = vst.msk [vmem:[%s141] sm:$0x1] %vm210, %v208
      %212 = vst.msk [vmem:[%s141 + $0x1] sm:$0x1] %vm210, %v209
      %p213 = scmp.lt.s32.totalorder %s13, 1
      %s214 = scalar_select %p213, %s13, 1
      %s215 = smul.addr %s214, 2
      %s216 = scalar_lea.vmem %s2, %s215
      // Predicated region
      $region29: #{_lambda_.38} parent=27 // pred_check
        %p217 = pneg %p78
      $region30: #{_lambda_.38} parent=27 // pred_check_branch
        %219 = sbr.rel (%p217) target = $region32
      $region31: #{_lambda_.38} parent=27 // pred_region
        _
      $region32: #{_lambda_.38} parent=27 // pred_fallthru
        _
    $region28: #{_lambda_.38} parent=5 // pred_fallthru
      _
    %p220 = scmp.le.s32.totalorder 2, %s8
    // Predicated region
    $region33: #{_lambda_.38} parent=5 // pred_check
      %p221 = pneg %p220
    $region34: #{_lambda_.38} parent=5 // pred_check_branch
      %223 = sbr.rel (%p221) target = $region36
    $region35: #{_lambda_.38} parent=5 // pred_region
      %s224 = ssub.s32 %s8, 2
      // Predicated region
      $region37: #{_lambda_.38} parent=35 // pred_check
        %p225 = pneg %p84
      $region38: #{_lambda_.38} parent=35 // pred_check_branch
        %227 = sbr.rel (%p225) target = $region40
      $region39: #{_lambda_.38} parent=35 // pred_region
        %p228 = scmp.lt.s32.totalorder %s14, 1
        %s229 = scalar_select %p228, %s14, 1
        %s230 = smul.addr %s229, 2
        %s231 = scalar_lea.vmem %s2, %s230
      $region40: #{_lambda_.38} parent=35 // pred_fallthru
        _
    $region36: #{_lambda_.38} parent=5 // pred_fallthru
      _
  $region6: #{_lambda_.38} parent=0 // loop_footer
    %s12 = sadd.s32 1, %s8
  $region7: #{_lambda_.38} parent=0 // loop_footer_branch
    %7 = sbr.rel target = $region3
  $region8: #{_lambda_.38} parent=0 // loop_exit
    _

// kernel: _lambda_.40
$region0: #{_lambda_.40}
  #allocation0 [shape = 'u32[]', space=smem, size = 0x4, offset = 0x4, fixed_abs, tag = 'smem constant byte address 0x4 - core index']
  #allocation1 [shape = 'u32[144,128]{1,0:T(1,128)}', space=vmem, size = 0x12000, scoped, tag = 'internal scratch']
  %s0 = inlined_call_operand.vmem [shape: bf16[2,64], index: 0, kind: input, shape index: {}]
  %s1 = inlined_call_operand.vmem [shape: bf16[64,10], index: 1, kind: input, shape index: {}]
  %s2 = inlined_call_operand.vmem [shape: bf16[2,10], index: 2, kind: output, shape index: {}]
  %s3 = sld [smem:[#allocation0]]
  $region18: #{_lambda_.40} parent=0
    _
  %s5 = ssub.s32 1, %s3
  %s6 = scalar_select 0, %s5, %s3
  // Predicated region
  $region2: #{_lambda_.40} parent=0 // pred_check
    _
  $region3: #{_lambda_.40} parent=0 // pred_check_branch
    %8 = sbr.rel (0) target = $region5
  $region4: #{_lambda_.40} parent=0 // pred_region
    _
  $region5: #{_lambda_.40} parent=0 // pred_fallthru
    _
  // Predicated region
  $region6: #{_lambda_.40} parent=0 // pred_check
    _
  $region7: #{_lambda_.40} parent=0 // pred_check_branch
    %10 = sbr.rel (0) target = $region9
  $region8: #{_lambda_.40} parent=0 // pred_region
    _
  $region9: #{_lambda_.40} parent=0 // pred_fallthru
    _
  %v12 = vld [vmem:[%s0] sm:$0x1]
  %v13 = vld [vmem:[%s1] sm:$0xf]
  %v14 = vld [vmem:[%s1 + $0x4] sm:$0xf]
  %v15 = vld [vmem:[%s1 + $0x8] sm:$0xf]
  %v16 = vld [vmem:[%s1 + $0xc] sm:$0xf]
  %v17 = vld [vmem:[%s1 + $0x10] sm:$0xf]
  %v18 = vld [vmem:[%s1 + $0x14] sm:$0xf]
  %v19 = vld [vmem:[%s1 + $0x18] sm:$0xf]
  %v20 = vld [vmem:[%s1 + $0x1c] sm:$0xf]
  %vm21 = vcmp.gt.f32.partialorder 0.0, 1.0
  %v22 = vsel %vm21, 1, 0
  %v23 = vcvt.s32.f32 %v22
  %v32 = vunpack.c.l.b16 %v13
  %v33 = vunpack.c.l.b16 %v14
  %v34 = vunpack.c.l.b16 %v15
  %v35 = vunpack.c.l.b16 %v16
  %v36 = vunpack.c.l.b16 %v17
  %v37 = vunpack.c.l.b16 %v18
  %v38 = vunpack.c.l.b16 %v19
  %v39 = vunpack.c.l.b16 %v20
  %v40 = vpack.c.b16 %v33, %v32
  %v41 = vpack.c.b16 %v35, %v34
  %v42 = vpack.c.b16 %v37, %v36
  %v43 = vpack.c.b16 %v39, %v38
  %vm48 = vcmask 523264
  %v50 = vsel %vm48, %v12, 0
  %52 = vmatprep.subr.bf16.mxu0 0
  %53 = vmatpush1.bf16.msra.mxu0 %v40
  %54 = vmatprep.subr.bf16.mxu0 0
  %55 = vmatpush1.bf16.msra.mxu0 %v41
  %56 = vmatprep.subr.bf16.mxu0 0
  %57 = vmatpush1.bf16.msra.mxu0 %v42
  %58 = vmatprep.subr.bf16.mxu0 0
  %59 = vmatpush1.bf16.msra.mxu0 %v43
  %60 = vmatprep.subr.bf16.mxu0 0
  %61 = vmatpush1.bf16.msra.mxu0 0
  %62 = vmatprep.subr.bf16.mxu0 0
  %63 = vmatpush1.bf16.msra.mxu0 0
  %64 = vmatprep.subr.bf16.mxu0 0
  %65 = vmatpush1.bf16.msra.mxu0 0
  %66 = vmatprep.subr.bf16.mxu0 0
  %67 = vmatpush1.bf16.msra.mxu0 0
  %68 = vmatprep.subr.bf16.mxu0 0
  %69 = vmatpush1.bf16.msra.mxu0 0
  %70 = vmatprep.subr.bf16.mxu0 0
  %71 = vmatpush1.bf16.msra.mxu0 0
  %72 = vmatprep.subr.bf16.mxu0 0
  %73 = vmatpush1.bf16.msra.mxu0 0
  %74 = vmatprep.subr.bf16.mxu0 0
  %75 = vmatpush1.bf16.msra.mxu0 0
  %76 = vmatprep.subr.bf16.mxu0 0
  %77 = vmatpush1.bf16.msra.mxu0 0
  %78 = vmatprep.subr.bf16.mxu0 0
  %79 = vmatpush1.bf16.msra.mxu0 0
  %80 = vmatprep.subr.bf16.mxu0 0
  %81 = vmatpush1.bf16.msra.mxu0 0
  %82 = vmatprep.subr.bf16.mxu0 0
  %83 = vmatpush1.bf16.msra.mxu0 0
  %84 = vmatprep.mubr.bf16.mxu0 0
  %85 = vmatmul.mubr.bf16.gmra.mrb[0].mxu0 %v50
  %v86 = vpop.f32.mrb[0].mxu0
  %v87 = vadd.f32 0.0, %v86
  %v88 = vpop.f32.mrb[0].mxu0
  %v89 = vpop.f32.mrb[0].mxu0
  %v90 = vpop.f32.mrb[0].mxu0
  %91 = vdwg.mxu0
  %v92 = vsub.f32 %v87, %v23
  %vm93 = vcmp.gt.f32.partialorder %v92, 1.0
  %v94 = vsel %vm93, 1, 0
  %v95 = vcvt.s32.f32 %v94
  %v96 = vadd.f32 %v95, 0.0
  %v97 = vpack.c.bf16 %v96, %v96
  %vm98 = vcmask 73728
  %99 = vst.msk [vmem:[%s2] sm:$0x1] %vm98, %v97
  // Predicated region
  $region10: #{_lambda_.40} parent=0 // pred_check
    _
  $region11: #{_lambda_.40} parent=0 // pred_check_branch
    %101 = sbr.rel (0) target = $region13
  $region12: #{_lambda_.40} parent=0 // pred_region
    _
  $region13: #{_lambda_.40} parent=0 // pred_fallthru
    _
  // Predicated region
  $region14: #{_lambda_.40} parent=0 // pred_check
    _
  $region15: #{_lambda_.40} parent=0 // pred_check_branch
    %103 = sbr.rel (0) target = $region17
  $region16: #{_lambda_.40} parent=0 // pred_region
    _
  $region17: #{_lambda_.40} parent=0 // pred_fallthru
    _

// kernel: _lambda_.41
$region0: #{_lambda_.41}
  #allocation0 [shape = 'u32[]', space=smem, size = 0x4, offset = 0x4, fixed_abs, tag = 'smem constant byte address 0x4 - core index']
  #allocation1 [shape = 'u32[144,128]{1,0:T(1,128)}', space=vmem, size = 0x12000, scoped, tag = 'internal scratch']
  %s0 = inlined_call_operand.vmem [shape: bf16[16,1], index: 0, kind: input, shape index: {}]
  %s1 = inlined_call_operand.vmem [shape: bf16[1,20], index: 1, kind: input, shape index: {}]
  %s2 = inlined_call_operand.vmem [shape: bf16[16,20], index: 2, kind: output, shape index: {}]
  %s3 = sld [smem:[#allocation0]]
  $region18: #{_lambda_.41} parent=0
    _
  %s5 = ssub.s32 1, %s3
  %s6 = scalar_select 0, %s5, %s3
  // Predicated region
  $region2: #{_lambda_.41} parent=0 // pred_check
    _
  $region3: #{_lambda_.41} parent=0 // pred_check_branch
    %8 = sbr.rel (0) target = $region5
  $region4: #{_lambda_.41} parent=0 // pred_region
    _
  $region5: #{_lambda_.41} parent=0 // pred_fallthru
    _
  // Predicated region
  $region6: #{_lambda_.41} parent=0 // pred_check
    _
  $region7: #{_lambda_.41} parent=0 // pred_check_branch
    %10 = sbr.rel (0) target = $region9
  $region8: #{_lambda_.41} parent=0 // pred_region
    _
  $region9: #{_lambda_.41} parent=0 // pred_fallthru
    _
  %v12 = vld [vmem:[%s0] sm:$0xf]
  %v13 = vld [vmem:[%s0 + $0x4] sm:$0xf]
  %v14 = vld [vmem:[%s1] sm:$0x1]
  %v17 = vunpack.c.l.b16 %v12
  %v18 = vunpack.c.l.b16 %v13
  %v19 = vpack.c.b16 %v18, %v17
  %vm20 = vcmask 7168
  %v22 = vsel %vm20, %v19, 0
  %vm24 = vcmask 1040384
  %v25 = vsel 0, 4294967295, 65535
  %v26 = vsel %vm24, %v25, 0
  %v28 = vand.u32 %v14, %v26
  %30 = vmatprep.subr.bf16.mxu0 0
  %31 = vmatpush1.bf16.msra.mxu0 %v28
  %32 = vmatprep.subr.bf16.mxu0 0
  %33 = vmatpush1.bf16.msra.mxu0 0
  %34 = vmatprep.subr.bf16.mxu0 0
  %35 = vmatpush1.bf16.msra.mxu0 0
  %36 = vmatprep.subr.bf16.mxu0 0
  %37 = vmatpush1.bf16.msra.mxu0 0
  %38 = vmatprep.subr.bf16.mxu0 0
  %39 = vmatpush1.bf16.msra.mxu0 0
  %40 = vmatprep.subr.bf16.mxu0 0
  %41 = vmatpush1.bf16.msra.mxu0 0
  %42 = vmatprep.subr.bf16.mxu0 0
  %43 = vmatpush1.bf16.msra.mxu0 0
  %44 = vmatprep.subr.bf16.mxu0 0
  %45 = vmatpush1.bf16.msra.mxu0 0
  %46 = vmatprep.subr.bf16.mxu0 0
  %47 = vmatpush1.bf16.msra.mxu0 0
  %48 = vmatprep.subr.bf16.mxu0 0
  %49 = vmatpush1.bf16.msra.mxu0 0
  %50 = vmatprep.subr.bf16.mxu0 0
  %51 = vmatpush1.bf16.msra.mxu0 0
  %52 = vmatprep.subr.bf16.mxu0 0
  %53 = vmatpush1.bf16.msra.mxu0 0
  %54 = vmatprep.subr.bf16.mxu0 0
  %55 = vmatpush1.bf16.msra.mxu0 0
  %56 = vmatprep.subr.bf16.mxu0 0
  %57 = vmatpush1.bf16.msra.mxu0 0
  %58 = vmatprep.subr.bf16.mxu0 0
  %59 = vmatpush1.bf16.msra.mxu0 0
  %60 = vmatprep.subr.bf16.mxu0 0
  %61 = vmatpush1.bf16.msra.mxu0 0
  %62 = vmatprep.mubr.bf16.mxu0 0
  %63 = vmatmul.mubr.bf16.gmra.mrb[0].mxu0 %v22
  %v64 = vpop.f32.mrb[0].mxu0
  %v65 = vadd.f32 0.0, %v64
  %v66 = vpop.f32.mrb[0].mxu0
  %v67 = vpop.f32.mrb[0].mxu0
  %v68 = vadd.f32 0.0, %v67
  %v69 = vpop.f32.mrb[0].mxu0
  %70 = vdwg.mxu0
  %v71 = vpack.c.bf16 %v68, %v65
  %v73 = vunpack.c.l.b16 %v71
  %v74 = vunpack.c.h.b16 %v71
  %v75 = vpack.c.b16 %v73, %v73
  %v76 = vpack.c.b16 %v74, %v74
  %vm79 = vcmask 158720
  %80 = vst.msk [vmem:[%s2] sm:$0xf] %vm79, %v75
  %81 = vst.msk [vmem:[%s2 + $0x4] sm:$0xf] %vm79, %v76
  // Predicated region
  $region10: #{_lambda_.41} parent=0 // pred_check
    _
  $region11: #{_lambda_.41} parent=0 // pred_check_branch
    %83 = sbr.rel (0) target = $region13
  $region12: #{_lambda_.41} parent=0 // pred_region
    _
  $region13: #{_lambda_.41} parent=0 // pred_fallthru
    _
  // Predicated region
  $region14: #{_lambda_.41} parent=0 // pred_check
    _
  $region15: #{_lambda_.41} parent=0 // pred_check_branch
    %85 = sbr.rel (0) target = $region17
  $region16: #{_lambda_.41} parent=0 // pred_region
    _
  $region17: #{_lambda_.41} parent=0 // pred_fallthru
    _

</llo_original>
